<compile_context>
chip_gen: v5e
topology: v5e:2x2
jax: 0.10.0
libtpu: 0.0.40
codegen_flags: <defaults>
</compile_context>

<pallas_src>
import functools

import jax
import jax.numpy as jnp
from jax import lax
from jax.experimental import pallas as pl
from jax.experimental.pallas import tpu as pltpu

FEATURE_DIM = 2048   # resnet50 feature dim (self.feature_dim)
HIDDEN_DIM = 512     # projection head hidden
PROJ_DIM = 256       # projection_dim
EPS = 1e-12          # F.normalize default eps


def simclr_head_kernel(x_ref, w1_ref, b1_ref, w2_ref, b2_ref, o_ref):
    """Fused projection head + L2 normalization for one batch tile.

    x_ref : (bm, FEATURE_DIM) features in their native dtype (f32 or bf16)
    w1_ref: (FEATURE_DIM, HIDDEN_DIM) bf16, b1_ref: (1, HIDDEN_DIM) f32
    w2_ref: (HIDDEN_DIM, PROJ_DIM) bf16,    b2_ref: (1, PROJ_DIM) f32
    o_ref : (bm, PROJ_DIM) f32 L2-normalized projections
    """
    # Cast to bf16 in-kernel: MXU sees bf16 operands without an extra HBM
    # cast pass in the wrapper (no-op if the backbone already emits bf16).
    x = x_ref[...].astype(jnp.bfloat16)
    b1 = b1_ref[...]          # hoisted bias loads (broadcast once per tile)
    b2 = b2_ref[...]

    # Linear(2048, 512) + ReLU — bf16 operands on the MXU, f32 accumulate.
    h = jnp.dot(x, w1_ref[...], preferred_element_type=jnp.float32) + b1
    # bf16 operand for the 2nd matmul (documented precision trade-off).
    h = jnp.maximum(h, 0.0).astype(jnp.bfloat16)

    # Linear(512, 256) — bf16 operands, f32 accumulate.
    p = jnp.dot(h, w2_ref[...], preferred_element_type=jnp.float32) + b2

    # F.normalize(p, dim=1): p / max(||p||_2, eps) == p * rsqrt(max(||p||^2, eps^2))
    sq = jnp.sum(p * p, axis=-1, keepdims=True)
    inv = lax.rsqrt(jnp.maximum(sq, EPS * EPS))   # EUP, frees the VALU slot
    o_ref[...] = (p * inv).astype(o_ref.dtype)


def _round_up(x, m):
    return (x + m - 1) // m * m


def _cdiv(a, b):
    return -(-a // b)


def prepare_params(w1, b1, w2, b2):
    """One-time parameter prep: bf16 weights, 2-D f32 biases.

    Call once (outside the training/inference loop) and reuse the result so
    no per-call convert ops touch HBM.
    """
    return (
        w1.astype(jnp.bfloat16),
        b1.astype(jnp.float32).reshape(1, HIDDEN_DIM),
        w2.astype(jnp.bfloat16),
        b2.astype(jnp.float32).reshape(1, PROJ_DIM),
    )


@functools.partial(jax.jit, static_argnames=("bm",))
def simclr_forward(features, w1_bf, b1_2d, w2_bf, b2_2d, *, bm=512):
    """features: (B, FEATURE_DIM) -> (B, PROJ_DIM) f32 L2-normalized rows.

    Expects prepared params from prepare_params(). bm is the target batch
    tile (rows per grid step); the actual tile is the minimal-padding multiple
    of 8, and the grid is kept >= 2 tiles for B >= 16 so both v7x TensorCores
    are used.
    """
    B, F = features.shape
    assert F == FEATURE_DIM

    # --- batch tile selection: minimal padding, grid >= 2 when possible ---
    B8 = _round_up(B, 8)
    n_tiles = _cdiv(B8, bm)
    bm_eff = _round_up(_cdiv(B8, n_tiles), 8)     # largest minimal-padding tile
    if B8 // bm_eff <= 1 and B8 >= 16:            # split single tile across 2 TCs
        n_tiles = 2
        bm_eff = _round_up(_cdiv(B8, 2), 8)
    Bp = n_tiles * bm_eff
    if Bp != B:
        features = jnp.pad(features, ((0, Bp - B), (0, 0)))

    feat_itemsize = features.dtype.itemsize
    cost = pl.CostEstimate(
        flops=2 * Bp * (FEATURE_DIM * HIDDEN_DIM + HIDDEN_DIM * PROJ_DIM),
        transcendentals=Bp,  # one rsqrt per row
        bytes_accessed=(
            Bp * FEATURE_DIM * feat_itemsize    # feature stream (native dtype)
            + FEATURE_DIM * HIDDEN_DIM * 2      # W1 bf16 (resident, counted once)
            + HIDDEN_DIM * PROJ_DIM * 2         # W2 bf16 (resident)
            + (HIDDEN_DIM + PROJ_DIM) * 4       # biases f32
            + Bp * PROJ_DIM * 4                 # f32 output
        ),
    )

    out = pl.pallas_call(
        simclr_head_kernel,
        out_shape=jax.ShapeDtypeStruct((Bp, PROJ_DIM), jnp.float32),
        grid_spec=pltpu.PrefetchScalarGridSpec(
            num_scalar_prefetch=0,
            grid=(n_tiles,),
            in_specs=[
                # streamed feature tile (double-buffered by default)
                pl.BlockSpec((bm_eff, FEATURE_DIM), lambda i: (i, 0)),
                # resident operands: constant index_map, single-buffered
                pl.BlockSpec((FEATURE_DIM, HIDDEN_DIM), lambda i: (0, 0),
                             pipeline_mode=pl.Buffered(1)),
                pl.BlockSpec((1, HIDDEN_DIM), lambda i: (0, 0),
                             pipeline_mode=pl.Buffered(1)),
                pl.BlockSpec((HIDDEN_DIM, PROJ_DIM), lambda i: (0, 0),
                             pipeline_mode=pl.Buffered(1)),
                pl.BlockSpec((1, PROJ_DIM), lambda i: (0, 0),
                             pipeline_mode=pl.Buffered(1)),
            ],
            out_specs=pl.BlockSpec((bm_eff, PROJ_DIM), lambda i: (i, 0)),
        ),
        compiler_params=pltpu.CompilerParams(
            dimension_semantics=("parallel",),
            # Headroom for f32 feature tiles up to bm~1024 on v5e/v6e while
            # staying safely under v7x's 64 MiB physical VMEM.
            vmem_limit_bytes=48 * 1024 * 1024,
        ),
        cost_estimate=cost,
    )(features, w1_bf, b1_2d, w2_bf, b2_2d)

    return out[:B] if Bp != B else out


def reference_forward(features, w1, b1, w2, b2):
    h = jnp.maximum(features @ w1 + b1, 0.0)
    p = h @ w2 + b2
    n = jnp.maximum(jnp.sqrt(jnp.sum(p * p, axis=1, keepdims=True)), EPS)
    return p / n


if __name__ == "__main__":
    key = jax.random.PRNGKey(0)
    k_x, k_w1, k_b1, k_w2, k_b2, k_x2 = jax.random.split(key, 6)

    # Deterministic projection-head parameters (shapes from the module __init__).
    w1 = jax.random.normal(k_w1, (FEATURE_DIM, HIDDEN_DIM), dtype=jnp.float32) * 0.02
    b1 = jax.random.normal(k_b1, (HIDDEN_DIM,), dtype=jnp.float32) * 0.01
    w2 = jax.random.normal(k_w2, (HIDDEN_DIM, PROJ_DIM), dtype=jnp.float32) * 0.02
    b2 = jax.random.normal(k_b2, (PROJ_DIM,), dtype=jnp.float32) * 0.01

    # One-time param prep (bf16 weights / 2-D f32 biases) — reused across calls.
    params = prepare_params(w1, b1, w2, b2)

    # --- small batch (single 8-row tile, no padding) ---
    B_small = 8
    feats_small = jax.random.normal(k_x, (B_small, FEATURE_DIM), dtype=jnp.float32)
    out_small = jax.block_until_ready(simclr_forward(feats_small, *params))
    ref_small = reference_forward(feats_small, w1, b1, w2, b2)
    assert out_small.shape == (B_small, PROJ_DIM)
    # bf16 MXU operands -> loosened tolerance vs. f32 reference
    assert jnp.allclose(out_small, ref_small, atol=2e-2, rtol=2e-2), "mismatch (small)"
    assert jnp.allclose(jnp.linalg.norm(out_small, axis=1), 1.0, atol=1e-3)

    # --- larger ragged batch: two 192-row tiles, zero padding, dual-TC split ---
    B_big = 384
    feats_big = jax.random.normal(k_x2, (B_big, FEATURE_DIM), dtype=jnp.float32)
    out_big = jax.block_until_ready(simclr_forward(feats_big, *params))
    ref_big = reference_forward(feats_big, w1, b1, w2, b2)
    assert out_big.shape == (B_big, PROJ_DIM)
    assert jnp.allclose(out_big, ref_big, atol=2e-2, rtol=2e-2), "mismatch (big)"
    assert jnp.allclose(jnp.linalg.norm(out_big, axis=1), 1.0, atol=1e-3)

    print("KERNEL_OK")
</pallas_src>

<mosaic_0001>
module attributes {stable_mosaic.version = 11 : i64} {
  func.func @simclr_head_kernel(%arg0: i32, %arg1: memref<8x2048xf32, #tpu.memory_space<vmem>>, %arg2: memref<2048x512xbf16, #tpu.memory_space<vmem>>, %arg3: memref<1x512xf32, #tpu.memory_space<vmem>>, %arg4: memref<512x256xbf16, #tpu.memory_space<vmem>>, %arg5: memref<1x256xf32, #tpu.memory_space<vmem>>, %arg6: memref<8x256xf32, #tpu.memory_space<vmem>>) attributes {dimension_semantics = [#tpu.dimension_semantics<parallel>], iteration_bounds = array<i64: 1>, scalar_prefetch = 0 : i64, scratch_operands = 0 : i64, tpu.core_type = #tpu.core_type<tc>, window_params = [{transform_indices = @transform_0, window_bounds = array<i64: 8, 2048>}, {pipeline_mode = #tpu.pipeline_mode<synchronous>, transform_indices = @transform_1, window_bounds = array<i64: 2048, 512>}, {pipeline_mode = #tpu.pipeline_mode<synchronous>, transform_indices = @transform_2, window_bounds = array<i64: 1, 512>}, {pipeline_mode = #tpu.pipeline_mode<synchronous>, transform_indices = @transform_3, window_bounds = array<i64: 512, 256>}, {pipeline_mode = #tpu.pipeline_mode<synchronous>, transform_indices = @transform_4, window_bounds = array<i64: 1, 256>}, {transform_indices = @transform_5, window_bounds = array<i64: 8, 256>}]} {
    %c0 = arith.constant 0 : index
    %c0_0 = arith.constant 0 : index
    %0 = vector.load %arg1[%c0, %c0_0] : memref<8x2048xf32, #tpu.memory_space<vmem>>, vector<8x2048xf32>
    %1 = arith.truncf %0 : vector<8x2048xf32> to vector<8x2048xbf16>
    %c0_1 = arith.constant 0 : index
    %c0_2 = arith.constant 0 : index
    %2 = vector.load %arg3[%c0_1, %c0_2] : memref<1x512xf32, #tpu.memory_space<vmem>>, vector<1x512xf32>
    %c0_3 = arith.constant 0 : index
    %c0_4 = arith.constant 0 : index
    %3 = vector.load %arg5[%c0_3, %c0_4] : memref<1x256xf32, #tpu.memory_space<vmem>>, vector<1x256xf32>
    %c0_5 = arith.constant 0 : index
    %c0_6 = arith.constant 0 : index
    %4 = vector.load %arg2[%c0_5, %c0_6] : memref<2048x512xbf16, #tpu.memory_space<vmem>>, vector<2048x512xbf16>
    %cst = arith.constant dense<0.000000e+00> : vector<8x512xf32>
    %5 = tpu.matmul %1, %4, %cst {dimension_numbers = #tpu.dot_dimension_numbers<[1], [0], [0], [1], [0, 0, 1, 1], [], []>} : vector<8x2048xbf16>, vector<2048x512xbf16>, vector<8x512xf32> -> vector<8x512xf32>
    %6 = vector.broadcast %2 : vector<1x512xf32> to vector<8x512xf32>
    %7 = arith.addf %5, %6 : vector<8x512xf32>
    %cst_7 = arith.constant 0.000000e+00 : f32
    %8 = vector.broadcast %cst_7 : f32 to vector<8x512xf32>
    %9 = arith.maximumf %7, %8 : vector<8x512xf32>
    %10 = arith.truncf %9 : vector<8x512xf32> to vector<8x512xbf16>
    %c0_8 = arith.constant 0 : index
    %c0_9 = arith.constant 0 : index
    %11 = vector.load %arg4[%c0_8, %c0_9] : memref<512x256xbf16, #tpu.memory_space<vmem>>, vector<512x256xbf16>
    %cst_10 = arith.constant dense<0.000000e+00> : vector<8x256xf32>
    %12 = tpu.matmul %10, %11, %cst_10 {dimension_numbers = #tpu.dot_dimension_numbers<[1], [0], [0], [1], [0, 0, 1, 1], [], []>} : vector<8x512xbf16>, vector<512x256xbf16>, vector<8x256xf32> -> vector<8x256xf32>
    %13 = vector.broadcast %3 : vector<1x256xf32> to vector<8x256xf32>
    %14 = arith.addf %12, %13 : vector<8x256xf32>
    %15 = arith.mulf %14, %14 : vector<8x256xf32>
    %cst_11 = arith.constant dense<0.000000e+00> : vector<8xf32>
    %16 = vector.multi_reduction <add>, %15, %cst_11 [1] : vector<8x256xf32> to vector<8xf32>
    %17 = vector.shape_cast %16 : vector<8xf32> to vector<8x1xf32>
    %cst_12 = arith.constant 1.000000e-24 : f32
    %18 = vector.broadcast %cst_12 : f32 to vector<8x1xf32>
    %19 = arith.maximumf %17, %18 : vector<8x1xf32>
    %20 = math.rsqrt %19 : vector<8x1xf32>
    %21 = vector.broadcast %20 : vector<8x1xf32> to vector<8x256xf32>
    %22 = arith.mulf %14, %21 : vector<8x256xf32>
    %c0_13 = arith.constant 0 : index
    %c0_14 = arith.constant 0 : index
    %23 = vector.load %arg6[%c0_13, %c0_14] : memref<8x256xf32, #tpu.memory_space<vmem>>, vector<8x256xf32>
    tpu.vector_store %arg6[%c0_13, %c0_14], %22 {strides = array<i32>} : memref<8x256xf32, #tpu.memory_space<vmem>>, vector<8x256xf32>,
    return
  }
  func.func @transform_0(%arg0: i32) -> (i32, i32) {
    %c0_i32 = arith.constant 0 : i32
    %c0_i32_0 = arith.constant 0 : i32
    return %arg0, %c0_i32 : i32, i32
  }
  func.func @transform_1(%arg0: i32) -> (i32, i32) {
    %c0_i32 = arith.constant 0 : i32
    %c0_i32_0 = arith.constant 0 : i32
    %c0_i32_1 = arith.constant 0 : i32
    return %c0_i32, %c0_i32_0 : i32, i32
  }
  func.func @transform_2(%arg0: i32) -> (i32, i32) {
    %c0_i32 = arith.constant 0 : i32
    %c0_i32_0 = arith.constant 0 : i32
    %c0_i32_1 = arith.constant 0 : i32
    return %c0_i32, %c0_i32_0 : i32, i32
  }
  func.func @transform_3(%arg0: i32) -> (i32, i32) {
    %c0_i32 = arith.constant 0 : i32
    %c0_i32_0 = arith.constant 0 : i32
    %c0_i32_1 = arith.constant 0 : i32
    return %c0_i32, %c0_i32_0 : i32, i32
  }
  func.func @transform_4(%arg0: i32) -> (i32, i32) {
    %c0_i32 = arith.constant 0 : i32
    %c0_i32_0 = arith.constant 0 : i32
    %c0_i32_1 = arith.constant 0 : i32
    return %c0_i32, %c0_i32_0 : i32, i32
  }
  func.func @transform_5(%arg0: i32) -> (i32, i32) {
    %c0_i32 = arith.constant 0 : i32
    %c0_i32_0 = arith.constant 0 : i32
    return %arg0, %c0_i32 : i32, i32
  }
}

</mosaic_0001>

<llo_original>
// kernel: simclr_forward.1
$region0: #{simclr_forward.1}
  #allocation0 [shape = 'u32[]', space=smem, size = 0x4, offset = 0x4, fixed_abs, tag = 'smem constant byte address 0x4 - core index']
  #allocation1 [shape = 'u32[72,128]{1,0:T(1,128)}', space=vmem, size = 0x9000, scoped, tag = 'internal scratch']
  %s0 = inlined_call_operand.hbm [shape: f32[8,2048], index: 0, kind: input, shape index: {}]
  %s1 = inlined_call_operand.hbm [shape: bf16[2048,512], index: 1, kind: input, shape index: {}]
  %s2 = inlined_call_operand.hbm [shape: f32[1,512], index: 2, kind: input, shape index: {}]
  %s3 = inlined_call_operand.hbm [shape: bf16[512,256], index: 3, kind: input, shape index: {}]
  %s4 = inlined_call_operand.hbm [shape: f32[1,256], index: 4, kind: input, shape index: {}]
  %s5 = inlined_call_operand.hbm [shape: f32[8,256], index: 5, kind: output, shape index: {}]
  %s6 = sld [smem:[#allocation0]]
  $region50: #{simclr_forward.1} parent=0
    _
  %s8 = ssub.s32 1, %s6
  %s9 = scalar_select 0, %s8, %s6
  $region1: #{simclr_forward.1} parent=0
    #allocation2 [shape = 'u8[65536]{0}', space=vmem, size = 0x10000, scoped, tag = 'input window, operand 0, single buffered']
    #allocation3 [shape = 's32[1]{0}', space=sflag, size = 0x4, scoped, tag = 'scoped memory for simclr_forward.1']
    #allocation4 [shape = 's32[1]{0}', space=sflag, size = 0x4, scoped, tag = 'scoped memory for simclr_forward.1']
    #allocation5 [shape = 'u8[2097152]{0}', space=vmem, size = 0x200000, scoped, tag = 'input window, operand 1, single buffered']
    #allocation6 [shape = 's32[1]{0}', space=sflag, size = 0x4, scoped, tag = 'scoped memory for simclr_forward.1']
    #allocation7 [shape = 'u8[2048]{0}', space=vmem, size = 0x800, scoped, tag = 'input window, operand 2, single buffered']
    #allocation8 [shape = 'u8[262144]{0}', space=vmem, size = 0x40000, scoped, tag = 'input window, operand 3, single buffered']
    #allocation9 [shape = 's32[1]{0}', space=sflag, size = 0x4, scoped, tag = 'scoped memory for simclr_forward.1']
    #allocation10 [shape = 'u8[1024]{0}', space=vmem, size = 0x400, scoped, tag = 'input window, operand 4, single buffered']
    #allocation11 [shape = 'u8[8192]{0}', space=vmem, size = 0x2000, scoped, tag = 'output window, operand 0, single buffered']
    %10 = vsyncpa [#allocation3], 0
    %11 = vsyncpa [#allocation6], 0
    %12 = vsyncpa [#allocation9], 0
    %13 = vsyncpa [#allocation4], 0
    // Predicated region
    $region2: #{simclr_forward.1} parent=1 // pred_check
      _
    $region3: #{simclr_forward.1} parent=1 // pred_check_branch
      %15 = sbr.rel (0) target = $region5
    $region4: #{simclr_forward.1} parent=1 // pred_region
      %17 = vsyncadd [#allocation3], 0
      %s19 = sshll.u32 %s0, 4
      %s20 = int_to_ptr.hbm [resolvable:$true] %s19
      %s21 = sshll.u32 [#allocation2], 4
      %s22 = int_to_ptr.vmem [resolvable:$true] %s21
      %24 = dma.hbm_to_vmem [thread:$0]  %s20, 2048, %s22, [#allocation3]
    $region5: #{simclr_forward.1} parent=1 // pred_fallthru
      _
    // Predicated region
    $region6: #{simclr_forward.1} parent=1 // pred_check
      _
    $region7: #{simclr_forward.1} parent=1 // pred_check_branch
      %26 = sbr.rel (0) target = $region9
    $region8: #{simclr_forward.1} parent=1 // pred_region
      %28 = vsyncadd [#allocation6], 0
      %s29 = sshll.u32 %s1, 4
      %s30 = int_to_ptr.hbm [resolvable:$true] %s29
      %s31 = sshll.u32 [#allocation5], 4
      %s32 = int_to_ptr.vmem [resolvable:$true] %s31
      %37 = dma.hbm_to_vmem [thread:$0]  %s30, 65536, %s32, [#allocation6], 256, 256, 16
    $region9: #{simclr_forward.1} parent=1 // pred_fallthru
      _
    // Predicated region
    $region10: #{simclr_forward.1} parent=1 // pred_check
      _
    $region11: #{simclr_forward.1} parent=1 // pred_check_branch
      %39 = sbr.rel (0) target = $region13
    $region12: #{simclr_forward.1} parent=1 // pred_region
      %41 = vsyncadd [#allocation6], 0
      %s43 = sshll.u32 %s2, 4
      %s44 = int_to_ptr.hbm [resolvable:$true] %s43
      %s45 = sshll.u32 [#allocation7], 4
      %s46 = int_to_ptr.vmem [resolvable:$true] %s45
      %48 = dma.hbm_to_vmem [thread:$0]  %s44, 64, %s46, [#allocation6]
    $region13: #{simclr_forward.1} parent=1 // pred_fallthru
      _
    // Predicated region
    $region14: #{simclr_forward.1} parent=1 // pred_check
      _
    $region15: #{simclr_forward.1} parent=1 // pred_check_branch
      %50 = sbr.rel (0) target = $region17
    $region16: #{simclr_forward.1} parent=1 // pred_region
      %52 = vsyncadd [#allocation9], 0
      %s53 = sshll.u32 %s3, 4
      %s54 = int_to_ptr.hbm [resolvable:$true] %s53
      %s55 = sshll.u32 [#allocation8], 4
      %s56 = int_to_ptr.vmem [resolvable:$true] %s55
      %61 = dma.hbm_to_vmem [thread:$0]  %s54, 8192, %s56, [#allocation9], 128, 128, 8
    $region17: #{simclr_forward.1} parent=1 // pred_fallthru
      _
    // Predicated region
    $region18: #{simclr_forward.1} parent=1 // pred_check
      _
    $region19: #{simclr_forward.1} parent=1 // pred_check_branch
      %63 = sbr.rel (0) target = $region21
    $region20: #{simclr_forward.1} parent=1 // pred_region
      %65 = vsyncadd [#allocation9], 0
      %s67 = sshll.u32 %s4, 4
      %s68 = int_to_ptr.hbm [resolvable:$true] %s67
      %s69 = sshll.u32 [#allocation10], 4
      %s70 = int_to_ptr.vmem [resolvable:$true] %s69
      %72 = dma.hbm_to_vmem [thread:$0]  %s68, 32, %s70, [#allocation9]
    $region21: #{simclr_forward.1} parent=1 // pred_fallthru
      _
    // Predicated region
    $region22: #{simclr_forward.1} parent=1 // pred_check
      _
    $region23: #{simclr_forward.1} parent=1 // pred_check_branch
      %74 = sbr.rel (0) target = $region25
    $region24: #{simclr_forward.1} parent=1 // pred_region
      %76 = dma.done [#allocation3], 2048
    $region25: #{simclr_forward.1} parent=1 // pred_fallthru
      _
    // Predicated region
    $region26: #{simclr_forward.1} parent=1 // pred_check
      _
    $region27: #{simclr_forward.1} parent=1 // pred_check_branch
      %78 = sbr.rel (0) target = $region29
    $region28: #{simclr_forward.1} parent=1 // pred_region
      %80 = dma.done [#allocation6], 65536
    $region29: #{simclr_forward.1} parent=1 // pred_fallthru
      _
    // Predicated region
    $region30: #{simclr_forward.1} parent=1 // pred_check
      _
    $region31: #{simclr_forward.1} parent=1 // pred_check_branch
      %82 = sbr.rel (0) target = $region33
    $region32: #{simclr_forward.1} parent=1 // pred_region
      %84 = dma.done [#allocation6], 64
    $region33: #{simclr_forward.1} parent=1 // pred_fallthru
      _
    // Predicated region
    $region34: #{simclr_forward.1} parent=1 // pred_check
      _
    $region35: #{simclr_forward.1} parent=1 // pred_check_branch
      %86 = sbr.rel (0) target = $region37
    $region36: #{simclr_forward.1} parent=1 // pred_region
      %88 = dma.done [#allocation9], 8192
    $region37: #{simclr_forward.1} parent=1 // pred_fallthru
      _
    // Predicated region
    $region38: #{simclr_forward.1} parent=1 // pred_check
      _
    $region39: #{simclr_forward.1} parent=1 // pred_check_branch
      %90 = sbr.rel (0) target = $region41
    $region40: #{simclr_forward.1} parent=1 // pred_region
      %92 = dma.done [#allocation9], 32
    $region41: #{simclr_forward.1} parent=1 // pred_fallthru
      _
    %v93 = vld [vmem:[#allocation2] sm:$0xff]
    %v94 = vld [vmem:[#allocation2 + $0x8] sm:$0xff]
    %v95 = vld [vmem:[#allocation2 + $0x10] sm:$0xff]
    %v96 = vld [vmem:[#allocation2 + $0x18] sm:$0xff]
    %v97 = vld [vmem:[#allocation2 + $0x20] sm:$0xff]
    %v98 = vld [vmem:[#allocation2 + $0x28] sm:$0xff]
    %v99 = vld [vmem:[#allocation2 + $0x30] sm:$0xff]
    %v100 = vld [vmem:[#allocation2 + $0x38] sm:$0xff]
    %v101 = vld [vmem:[#allocation2 + $0x40] sm:$0xff]
    %v102 = vld [vmem:[#allocation2 + $0x48] sm:$0xff]
    %v103 = vld [vmem:[#allocation2 + $0x50] sm:$0xff]
    %v104 = vld [vmem:[#allocation2 + $0x58] sm:$0xff]
    %v105 = vld [vmem:[#allocation2 + $0x60] sm:$0xff]
    %v106 = vld [vmem:[#allocation2 + $0x68] sm:$0xff]
    %v107 = vld [vmem:[#allocation2 + $0x70] sm:$0xff]
    %v108 = vld [vmem:[#allocation2 + $0x78] sm:$0xff]
    %v109 = vpack.c.bf16 %v93, %v93
    %v110 = vpack.c.bf16 %v94, %v94
    %v111 = vpack.c.bf16 %v95, %v95
    %v112 = vpack.c.bf16 %v96, %v96
    %v113 = vpack.c.bf16 %v97, %v97
    %v114 = vpack.c.bf16 %v98, %v98
    %v115 = vpack.c.bf16 %v99, %v99
    %v116 = vpack.c.bf16 %v100, %v100
    %v117 = vpack.c.bf16 %v101, %v101
    %v118 = vpack.c.bf16 %v102, %v102
    %v119 = vpack.c.bf16 %v103, %v103
    %v120 = vpack.c.bf16 %v104, %v104
    %v121 = vpack.c.bf16 %v105, %v105
    %v122 = vpack.c.bf16 %v106, %v106
    %v123 = vpack.c.bf16 %v107, %v107
    %v124 = vpack.c.bf16 %v108, %v108
    %v125 = vld [vmem:[#allocation7] sm:$0xf]
    %v126 = vld [vmem:[#allocation10] sm:$0x3]
    %v127 = vld [vmem:[#allocation5] sm:$0xff]
    %v128 = vld [vmem:[#allocation5 + $0x8] sm:$0xff]
    %v129 = vld [vmem:[#allocation5 + $0x10] sm:$0xff]
    %v130 = vld [vmem:[#allocation5 + $0x18] sm:$0xff]
    %v131 = vld [vmem:[#allocation5 + $0x20] sm:$0xff]
    %v132 = vld [vmem:[#allocation5 + $0x28] sm:$0xff]
    %v133 = vld [vmem:[#allocation5 + $0x30] sm:$0xff]
    %v134 = vld [vmem:[#allocation5 + $0x38] sm:$0xff]
    %v135 = vld [vmem:[#allocation5 + $0x40] sm:$0xff]
    %v136 = vld [vmem:[#allocation5 + $0x48] sm:$0xff]
    %v137 = vld [vmem:[#allocation5 + $0x50] sm:$0xff]
    %v138 = vld [vmem:[#allocation5 + $0x58] sm:$0xff]
    %v139 = vld [vmem:[#allocation5 + $0x60] sm:$0xff]
    %v140 = vld [vmem:[#allocation5 + $0x68] sm:$0xff]
    %v141 = vld [vmem:[#allocation5 + $0x70] sm:$0xff]
    %v142 = vld [vmem:[#allocation5 + $0x78] sm:$0xff]
    %v143 = vld [vmem:[#allocation5 + $0x80] sm:$0xff]
    %v144 = vld [vmem:[#allocation5 + $0x88] sm:$0xff]
    %v145 = vld [vmem:[#allocation5 + $0x90] sm:$0xff]
    %v146 = vld [vmem:[#allocation5 + $0x98] sm:$0xff]
    %v147 = vld [vmem:[#allocation5 + $0xa0] sm:$0xff]
    %v148 = vld [vmem:[#allocation5 + $0xa8] sm:$0xff]
    %v149 = vld [vmem:[#allocation5 + $0xb0] sm:$0xff]
    %v150 = vld [vmem:[#allocation5 + $0xb8] sm:$0xff]
    %v151 = vld [vmem:[#allocation5 + $0xc0] sm:$0xff]
    %v152 = vld [vmem:[#allocation5 + $0xc8] sm:$0xff]
    %v153 = vld [vmem:[#allocation5 + $0xd0] sm:$0xff]
    %v154 = vld [vmem:[#allocation5 + $0xd8] sm:$0xff]
    %v155 = vld [vmem:[#allocation5 + $0xe0] sm:$0xff]
    %v156 = vld [vmem:[#allocation5 + $0xe8] sm:$0xff]
    %v157 = vld [vmem:[#allocation5 + $0xf0] sm:$0xff]
    %v158 = vld [vmem:[#allocation5 + $0xf8] sm:$0xff]
    %v159 = vld [vmem:[#allocation5 + $0x100] sm:$0xff]
    %v160 = vld [vmem:[#allocation5 + $0x108] sm:$0xff]
    %v161 = vld [vmem:[#allocation5 + $0x110] sm:$0xff]
    %v162 = vld [vmem:[#allocation5 + $0x118] sm:$0xff]
    %v163 = vld [vmem:[#allocation5 + $0x120] sm:$0xff]
    %v164 = vld [vmem:[#allocation5 + $0x128] sm:$0xff]
    %v165 = vld [vmem:[#allocation5 + $0x130] sm:$0xff]
    %v166 = vld [vmem:[#allocation5 + $0x138] sm:$0xff]
    %v167 = vld [vmem:[#allocation5 + $0x140] sm:$0xff]
    %v168 = vld [vmem:[#allocation5 + $0x148] sm:$0xff]
    %v169 = vld [vmem:[#allocation5 + $0x150] sm:$0xff]
    %v170 = vld [vmem:[#allocation5 + $0x158] sm:$0xff]
    %v171 = vld [vmem:[#allocation5 + $0x160] sm:$0xff]
    %v172 = vld [vmem:[#allocation5 + $0x168] sm:$0xff]
    %v173 = vld [vmem:[#allocation5 + $0x170] sm:$0xff]
    %v174 = vld [vmem:[#allocation5 + $0x178] sm:$0xff]
    %v175 = vld [vmem:[#allocation5 + $0x180] sm:$0xff]
    %v176 = vld [vmem:[#allocation5 + $0x188] sm:$0xff]
    %v177 = vld [vmem:[#allocation5 + $0x190] sm:$0xff]
    %v178 = vld [vmem:[#allocation5 + $0x198] sm:$0xff]
    %v179 = vld [vmem:[#allocation5 + $0x1a0] sm:$0xff]
    %v180 = vld [vmem:[#allocation5 + $0x1a8] sm:$0xff]
    %v181 = vld [vmem:[#allocation5 + $0x1b0] sm:$0xff]
    %v182 = vld [vmem:[#allocation5 + $0x1b8] sm:$0xff]
    %v183 = vld [vmem:[#allocation5 + $0x1c0] sm:$0xff]
    %v184 = vld [vmem:[#allocation5 + $0x1c8] sm:$0xff]
    %v185 = vld [vmem:[#allocation5 + $0x1d0] sm:$0xff]
    %v186 = vld [vmem:[#allocation5 + $0x1d8] sm:$0xff]
    %v187 = vld [vmem:[#allocation5 + $0x1e0] sm:$0xff]
    %v188 = vld [vmem:[#allocation5 + $0x1e8] sm:$0xff]
    %v189 = vld [vmem:[#allocation5 + $0x1f0] sm:$0xff]
    %v190 = vld [vmem:[#allocation5 + $0x1f8] sm:$0xff]
    %v191 = vld [vmem:[#allocation5 + $0x200] sm:$0xff]
    %v192 = vld [vmem:[#allocation5 + $0x208] sm:$0xff]
    %v193 = vld [vmem:[#allocation5 + $0x210] sm:$0xff]
    %v194 = vld [vmem:[#allocation5 + $0x218] sm:$0xff]
    %v195 = vld [vmem:[#allocation5 + $0x220] sm:$0xff]
    %v196 = vld [vmem:[#allocation5 + $0x228] sm:$0xff]
    %v197 = vld [vmem:[#allocation5 + $0x230] sm:$0xff]
    %v198 = vld [vmem:[#allocation5 + $0x238] sm:$0xff]
    %v199 = vld [vmem:[#allocation5 + $0x240] sm:$0xff]
    %v200 = vld [vmem:[#allocation5 + $0x248] sm:$0xff]
    %v201 = vld [vmem:[#allocation5 + $0x250] sm:$0xff]
    %v202 = vld [vmem:[#allocation5 + $0x258] sm:$0xff]
    %v203 = vld [vmem:[#allocation5 + $0x260] sm:$0xff]
    %v204 = vld [vmem:[#allocation5 + $0x268] sm:$0xff]
    %v205 = vld [vmem:[#allocation5 + $0x270] sm:$0xff]
    %v206 = vld [vmem:[#allocation5 + $0x278] sm:$0xff]
    %v207 = vld [vmem:[#allocation5 + $0x280] sm:$0xff]
    %v208 = vld [vmem:[#allocation5 + $0x288] sm:$0xff]
    %v209 = vld [vmem:[#allocation5 + $0x290] sm:$0xff]
    %v210 = vld [vmem:[#allocation5 + $0x298] sm:$0xff]
    %v211 = vld [vmem:[#allocation5 + $0x2a0] sm:$0xff]
    %v212 = vld [vmem:[#allocation5 + $0x2a8] sm:$0xff]
    %v213 = vld [vmem:[#allocation5 + $0x2b0] sm:$0xff]
    %v214 = vld [vmem:[#allocation5 + $0x2b8] sm:$0xff]
    %v215 = vld [vmem:[#allocation5 + $0x2c0] sm:$0xff]
    %v216 = vld [vmem:[#allocation5 + $0x2c8] sm:$0xff]
    %v217 = vld [vmem:[#allocation5 + $0x2d0] sm:$0xff]
    %v218 = vld [vmem:[#allocation5 + $0x2d8] sm:$0xff]
    %v219 = vld [vmem:[#allocation5 + $0x2e0] sm:$0xff]
    %v220 = vld [vmem:[#allocation5 + $0x2e8] sm:$0xff]
    %v221 = vld [vmem:[#allocation5 + $0x2f0] sm:$0xff]
    %v222 = vld [vmem:[#allocation5 + $0x2f8] sm:$0xff]
    %v223 = vld [vmem:[#allocation5 + $0x300] sm:$0xff]
    %v224 = vld [vmem:[#allocation5 + $0x308] sm:$0xff]
    %v225 = vld [vmem:[#allocation5 + $0x310] sm:$0xff]
    %v226 = vld [vmem:[#allocation5 + $0x318] sm:$0xff]
    %v227 = vld [vmem:[#allocation5 + $0x320] sm:$0xff]
    %v228 = vld [vmem:[#allocation5 + $0x328] sm:$0xff]
    %v229 = vld [vmem:[#allocation5 + $0x330] sm:$0xff]
    %v230 = vld [vmem:[#allocation5 + $0x338] sm:$0xff]
    %v231 = vld [vmem:[#allocation5 + $0x340] sm:$0xff]
    %v232 = vld [vmem:[#allocation5 + $0x348] sm:$0xff]
    %v233 = vld [vmem:[#allocation5 + $0x350] sm:$0xff]
    %v234 = vld [vmem:[#allocation5 + $0x358] sm:$0xff]
    %v235 = vld [vmem:[#allocation5 + $0x360] sm:$0xff]
    %v236 = vld [vmem:[#allocation5 + $0x368] sm:$0xff]
    %v237 = vld [vmem:[#allocation5 + $0x370] sm:$0xff]
    %v238 = vld [vmem:[#allocation5 + $0x378] sm:$0xff]
    %v239 = vld [vmem:[#allocation5 + $0x380] sm:$0xff]
    %v240 = vld [vmem:[#allocation5 + $0x388] sm:$0xff]
    %v241 = vld [vmem:[#allocation5 + $0x390] sm:$0xff]
    %v242 = vld [vmem:[#allocation5 + $0x398] sm:$0xff]
    %v243 = vld [vmem:[#allocation5 + $0x3a0] sm:$0xff]
    %v244 = vld [vmem:[#allocation5 + $0x3a8] sm:$0xff]
    %v245 = vld [vmem:[#allocation5 + $0x3b0] sm:$0xff]
    %v246 = vld [vmem:[#allocation5 + $0x3b8] sm:$0xff]
    %v247 = vld [vmem:[#allocation5 + $0x3c0] sm:$0xff]
    %v248 = vld [vmem:[#allocation5 + $0x3c8] sm:$0xff]
    %v249 = vld [vmem:[#allocation5 + $0x3d0] sm:$0xff]
    %v250 = vld [vmem:[#allocation5 + $0x3d8] sm:$0xff]
    %v251 = vld [vmem:[#allocation5 + $0x3e0] sm:$0xff]
    %v252 = vld [vmem:[#allocation5 + $0x3e8] sm:$0xff]
    %v253 = vld [vmem:[#allocation5 + $0x3f0] sm:$0xff]
    %v254 = vld [vmem:[#allocation5 + $0x3f8] sm:$0xff]
    %v255 = vld [vmem:[#allocation5 + $0x400] sm:$0xff]
    %v256 = vld [vmem:[#allocation5 + $0x408] sm:$0xff]
    %v257 = vld [vmem:[#allocation5 + $0x410] sm:$0xff]
    %v258 = vld [vmem:[#allocation5 + $0x418] sm:$0xff]
    %v259 = vld [vmem:[#allocation5 + $0x420] sm:$0xff]
    %v260 = vld [vmem:[#allocation5 + $0x428] sm:$0xff]
    %v261 = vld [vmem:[#allocation5 + $0x430] sm:$0xff]
    %v262 = vld [vmem:[#allocation5 + $0x438] sm:$0xff]
    %v263 = vld [vmem:[#allocation5 + $0x440] sm:$0xff]
    %v264 = vld [vmem:[#allocation5 + $0x448] sm:$0xff]
    %v265 = vld [vmem:[#allocation5 + $0x450] sm:$0xff]
    %v266 = vld [vmem:[#allocation5 + $0x458] sm:$0xff]
    %v267 = vld [vmem:[#allocation5 + $0x460] sm:$0xff]
    %v268 = vld [vmem:[#allocation5 + $0x468] sm:$0xff]
    %v269 = vld [vmem:[#allocation5 + $0x470] sm:$0xff]
    %v270 = vld [vmem:[#allocation5 + $0x478] sm:$0xff]
    %v271 = vld [vmem:[#allocation5 + $0x480] sm:$0xff]
    %v272 = vld [vmem:[#allocation5 + $0x488] sm:$0xff]
    %v273 = vld [vmem:[#allocation5 + $0x490] sm:$0xff]
    %v274 = vld [vmem:[#allocation5 + $0x498] sm:$0xff]
    %v275 = vld [vmem:[#allocation5 + $0x4a0] sm:$0xff]
    %v276 = vld [vmem:[#allocation5 + $0x4a8] sm:$0xff]
    %v277 = vld [vmem:[#allocation5 + $0x4b0] sm:$0xff]
    %v278 = vld [vmem:[#allocation5 + $0x4b8] sm:$0xff]
    %v279 = vld [vmem:[#allocation5 + $0x4c0] sm:$0xff]
    %v280 = vld [vmem:[#allocation5 + $0x4c8] sm:$0xff]
    %v281 = vld [vmem:[#allocation5 + $0x4d0] sm:$0xff]
    %v282 = vld [vmem:[#allocation5 + $0x4d8] sm:$0xff]
    %v283 = vld [vmem:[#allocation5 + $0x4e0] sm:$0xff]
    %v284 = vld [vmem:[#allocation5 + $0x4e8] sm:$0xff]
    %v285 = vld [vmem:[#allocation5 + $0x4f0] sm:$0xff]
    %v286 = vld [vmem:[#allocation5 + $0x4f8] sm:$0xff]
    %v287 = vld [vmem:[#allocation5 + $0x500] sm:$0xff]
    %v288 = vld [vmem:[#allocation5 + $0x508] sm:$0xff]
    %v289 = vld [vmem:[#allocation5 + $0x510] sm:$0xff]
    %v290 = vld [vmem:[#allocation5 + $0x518] sm:$0xff]
    %v291 = vld [vmem:[#allocation5 + $0x520] sm:$0xff]
    %v292 = vld [vmem:[#allocation5 + $0x528] sm:$0xff]
    %v293 = vld [vmem:[#allocation5 + $0x530] sm:$0xff]
    %v294 = vld [vmem:[#allocation5 + $0x538] sm:$0xff]
    %v295 = vld [vmem:[#allocation5 + $0x540] sm:$0xff]
    %v296 = vld [vmem:[#allocation5 + $0x548] sm:$0xff]
    %v297 = vld [vmem:[#allocation5 + $0x550] sm:$0xff]
    %v298 = vld [vmem:[#allocation5 + $0x558] sm:$0xff]
    %v299 = vld [vmem:[#allocation5 + $0x560] sm:$0xff]
    %v300 = vld [vmem:[#allocation5 + $0x568] sm:$0xff]
    %v301 = vld [vmem:[#allocation5 + $0x570] sm:$0xff]
    %v302 = vld [vmem:[#allocation5 + $0x578] sm:$0xff]
    %v303 = vld [vmem:[#allocation5 + $0x580] sm:$0xff]
    %v304 = vld [vmem:[#allocation5 + $0x588] sm:$0xff]
    %v305 = vld [vmem:[#allocation5 + $0x590] sm:$0xff]
    %v306 = vld [vmem:[#allocation5 + $0x598] sm:$0xff]
    %v307 = vld [vmem:[#allocation5 + $0x5a0] sm:$0xff]
    %v308 = vld [vmem:[#allocation5 + $0x5a8] sm:$0xff]
    %v309 = vld [vmem:[#allocation5 + $0x5b0] sm:$0xff]
    %v310 = vld [vmem:[#allocation5 + $0x5b8] sm:$0xff]
    %v311 = vld [vmem:[#allocation5 + $0x5c0] sm:$0xff]
    %v312 = vld [vmem:[#allocation5 + $0x5c8] sm:$0xff]
    %v313 = vld [vmem:[#allocation5 + $0x5d0] sm:$0xff]
    %v314 = vld [vmem:[#allocation5 + $0x5d8] sm:$0xff]
    %v315 = vld [vmem:[#allocation5 + $0x5e0] sm:$0xff]
    %v316 = vld [vmem:[#allocation5 + $0x5e8] sm:$0xff]
    %v317 = vld [vmem:[#allocation5 + $0x5f0] sm:$0xff]
    %v318 = vld [vmem:[#allocation5 + $0x5f8] sm:$0xff]
    %v319 = vld [vmem:[#allocation5 + $0x600] sm:$0xff]
    %v320 = vld [vmem:[#allocation5 + $0x608] sm:$0xff]
    %v321 = vld [vmem:[#allocation5 + $0x610] sm:$0xff]
    %v322 = vld [vmem:[#allocation5 + $0x618] sm:$0xff]
    %v323 = vld [vmem:[#allocation5 + $0x620] sm:$0xff]
    %v324 = vld [vmem:[#allocation5 + $0x628] sm:$0xff]
    %v325 = vld [vmem:[#allocation5 + $0x630] sm:$0xff]
    %v326 = vld [vmem:[#allocation5 + $0x638] sm:$0xff]
    %v327 = vld [vmem:[#allocation5 + $0x640] sm:$0xff]
    %v328 = vld [vmem:[#allocation5 + $0x648] sm:$0xff]
    %v329 = vld [vmem:[#allocation5 + $0x650] sm:$0xff]
    %v330 = vld [vmem:[#allocation5 + $0x658] sm:$0xff]
    %v331 = vld [vmem:[#allocation5 + $0x660] sm:$0xff]
    %v332 = vld [vmem:[#allocation5 + $0x668] sm:$0xff]
    %v333 = vld [vmem:[#allocation5 + $0x670] sm:$0xff]
    %v334 = vld [vmem:[#allocation5 + $0x678] sm:$0xff]
    %v335 = vld [vmem:[#allocation5 + $0x680] sm:$0xff]
    %v336 = vld [vmem:[#allocation5 + $0x688] sm:$0xff]
    %v337 = vld [vmem:[#allocation5 + $0x690] sm:$0xff]
    %v338 = vld [vmem:[#allocation5 + $0x698] sm:$0xff]
    %v339 = vld [vmem:[#allocation5 + $0x6a0] sm:$0xff]
    %v340 = vld [vmem:[#allocation5 + $0x6a8] sm:$0xff]
    %v341 = vld [vmem:[#allocation5 + $0x6b0] sm:$0xff]
    %v342 = vld [vmem:[#allocation5 + $0x6b8] sm:$0xff]
    %v343 = vld [vmem:[#allocation5 + $0x6c0] sm:$0xff]
    %v344 = vld [vmem:[#allocation5 + $0x6c8] sm:$0xff]
    %v345 = vld [vmem:[#allocation5 + $0x6d0] sm:$0xff]
    %v346 = vld [vmem:[#allocation5 + $0x6d8] sm:$0xff]
    %v347 = vld [vmem:[#allocation5 + $0x6e0] sm:$0xff]
    %v348 = vld [vmem:[#allocation5 + $0x6e8] sm:$0xff]
    %v349 = vld [vmem:[#allocation5 + $0x6f0] sm:$0xff]
    %v350 = vld [vmem:[#allocation5 + $0x6f8] sm:$0xff]
    %v351 = vld [vmem:[#allocation5 + $0x700] sm:$0xff]
    %v352 = vld [vmem:[#allocation5 + $0x708] sm:$0xff]
    %v353 = vld [vmem:[#allocation5 + $0x710] sm:$0xff]
    %v354 = vld [vmem:[#allocation5 + $0x718] sm:$0xff]
    %v355 = vld [vmem:[#allocation5 + $0x720] sm:$0xff]
    %v356 = vld [vmem:[#allocation5 + $0x728] sm:$0xff]
    %v357 = vld [vmem:[#allocation5 + $0x730] sm:$0xff]
    %v358 = vld [vmem:[#allocation5 + $0x738] sm:$0xff]
    %v359 = vld [vmem:[#allocation5 + $0x740] sm:$0xff]
    %v360 = vld [vmem:[#allocation5 + $0x748] sm:$0xff]
    %v361 = vld [vmem:[#allocation5 + $0x750] sm:$0xff]
    %v362 = vld [vmem:[#allocation5 + $0x758] sm:$0xff]
    %v363 = vld [vmem:[#allocation5 + $0x760] sm:$0xff]
    %v364 = vld [vmem:[#allocation5 + $0x768] sm:$0xff]
    %v365 = vld [vmem:[#allocation5 + $0x770] sm:$0xff]
    %v366 = vld [vmem:[#allocation5 + $0x778] sm:$0xff]
    %v367 = vld [vmem:[#allocation5 + $0x780] sm:$0xff]
    %v368 = vld [vmem:[#allocation5 + $0x788] sm:$0xff]
    %v369 = vld [vmem:[#allocation5 + $0x790] sm:$0xff]
    %v370 = vld [vmem:[#allocation5 + $0x798] sm:$0xff]
    %v371 = vld [vmem:[#allocation5 + $0x7a0] sm:$0xff]
    %v372 = vld [vmem:[#allocation5 + $0x7a8] sm:$0xff]
    %v373 = vld [vmem:[#allocation5 + $0x7b0] sm:$0xff]
    %v374 = vld [vmem:[#allocation5 + $0x7b8] sm:$0xff]
    %v375 = vld [vmem:[#allocation5 + $0x7c0] sm:$0xff]
    %v376 = vld [vmem:[#allocation5 + $0x7c8] sm:$0xff]
    %v377 = vld [vmem:[#allocation5 + $0x7d0] sm:$0xff]
    %v378 = vld [vmem:[#allocation5 + $0x7d8] sm:$0xff]
    %v379 = vld [vmem:[#allocation5 + $0x7e0] sm:$0xff]
    %v380 = vld [vmem:[#allocation5 + $0x7e8] sm:$0xff]
    %v381 = vld [vmem:[#allocation5 + $0x7f0] sm:$0xff]
    %v382 = vld [vmem:[#allocation5 + $0x7f8] sm:$0xff]
    %v383 = vld [vmem:[#allocation5 + $0x800] sm:$0xff]
    %v384 = vld [vmem:[#allocation5 + $0x808] sm:$0xff]
    %v385 = vld [vmem:[#allocation5 + $0x810] sm:$0xff]
    %v386 = vld [vmem:[#allocation5 + $0x818] sm:$0xff]
    %v387 = vld [vmem:[#allocation5 + $0x820] sm:$0xff]
    %v388 = vld [vmem:[#allocation5 + $0x828] sm:$0xff]
    %v389 = vld [vmem:[#allocation5 + $0x830] sm:$0xff]
    %v390 = vld [vmem:[#allocation5 + $0x838] sm:$0xff]
    %v391 = vld [vmem:[#allocation5 + $0x840] sm:$0xff]
    %v392 = vld [vmem:[#allocation5 + $0x848] sm:$0xff]
    %v393 = vld [vmem:[#allocation5 + $0x850] sm:$0xff]
    %v394 = vld [vmem:[#allocation5 + $0x858] sm:$0xff]
    %v395 = vld [vmem:[#allocation5 + $0x860] sm:$0xff]
    %v396 = vld [vmem:[#allocation5 + $0x868] sm:$0xff]
    %v397 = vld [vmem:[#allocation5 + $0x870] sm:$0xff]
    %v398 = vld [vmem:[#allocation5 + $0x878] sm:$0xff]
    %v399 = vld [vmem:[#allocation5 + $0x880] sm:$0xff]
    %v400 = vld [vmem:[#allocation5 + $0x888] sm:$0xff]
    %v401 = vld [vmem:[#allocation5 + $0x890] sm:$0xff]
    %v402 = vld [vmem:[#allocation5 + $0x898] sm:$0xff]
    %v403 = vld [vmem:[#allocation5 + $0x8a0] sm:$0xff]
    %v404 = vld [vmem:[#allocation5 + $0x8a8] sm:$0xff]
    %v405 = vld [vmem:[#allocation5 + $0x8b0] sm:$0xff]
    %v406 = vld [vmem:[#allocation5 + $0x8b8] sm:$0xff]
    %v407 = vld [vmem:[#allocation5 + $0x8c0] sm:$0xff]
    %v408 = vld [vmem:[#allocation5 + $0x8c8] sm:$0xff]
    %v409 = vld [vmem:[#allocation5 + $0x8d0] sm:$0xff]
    %v410 = vld [vmem:[#allocation5 + $0x8d8] sm:$0xff]
    %v411 = vld [vmem:[#allocation5 + $0x8e0] sm:$0xff]
    %v412 = vld [vmem:[#allocation5 + $0x8e8] sm:$0xff]
    %v413 = vld [vmem:[#allocation5 + $0x8f0] sm:$0xff]
    %v414 = vld [vmem:[#allocation5 + $0x8f8] sm:$0xff]
    %v415 = vld [vmem:[#allocation5 + $0x900] sm:$0xff]
    %v416 = vld [vmem:[#allocation5 + $0x908] sm:$0xff]
    %v417 = vld [vmem:[#allocation5 + $0x910] sm:$0xff]
    %v418 = vld [vmem:[#allocation5 + $0x918] sm:$0xff]
    %v419 = vld [vmem:[#allocation5 + $0x920] sm:$0xff]
    %v420 = vld [vmem:[#allocation5 + $0x928] sm:$0xff]
    %v421 = vld [vmem:[#allocation5 + $0x930] sm:$0xff]
    %v422 = vld [vmem:[#allocation5 + $0x938] sm:$0xff]
    %v423 = vld [vmem:[#allocation5 + $0x940] sm:$0xff]
    %v424 = vld [vmem:[#allocation5 + $0x948] sm:$0xff]
    %v425 = vld [vmem:[#allocation5 + $0x950] sm:$0xff]
    %v426 = vld [vmem:[#allocation5 + $0x958] sm:$0xff]
    %v427 = vld [vmem:[#allocation5 + $0x960] sm:$0xff]
    %v428 = vld [vmem:[#allocation5 + $0x968] sm:$0xff]
    %v429 = vld [vmem:[#allocation5 + $0x970] sm:$0xff]
    %v430 = vld [vmem:[#allocation5 + $0x978] sm:$0xff]
    %v431 = vld [vmem:[#allocation5 + $0x980] sm:$0xff]
    %v432 = vld [vmem:[#allocation5 + $0x988] sm:$0xff]
    %v433 = vld [vmem:[#allocation5 + $0x990] sm:$0xff]
    %v434 = vld [vmem:[#allocation5 + $0x998] sm:$0xff]
    %v435 = vld [vmem:[#allocation5 + $0x9a0] sm:$0xff]
    %v436 = vld [vmem:[#allocation5 + $0x9a8] sm:$0xff]
    %v437 = vld [vmem:[#allocation5 + $0x9b0] sm:$0xff]
    %v438 = vld [vmem:[#allocation5 + $0x9b8] sm:$0xff]
    %v439 = vld [vmem:[#allocation5 + $0x9c0] sm:$0xff]
    %v440 = vld [vmem:[#allocation5 + $0x9c8] sm:$0xff]
    %v441 = vld [vmem:[#allocation5 + $0x9d0] sm:$0xff]
    %v442 = vld [vmem:[#allocation5 + $0x9d8] sm:$0xff]
    %v443 = vld [vmem:[#allocation5 + $0x9e0] sm:$0xff]
    %v444 = vld [vmem:[#allocation5 + $0x9e8] sm:$0xff]
    %v445 = vld [vmem:[#allocation5 + $0x9f0] sm:$0xff]
    %v446 = vld [vmem:[#allocation5 + $0x9f8] sm:$0xff]
    %v447 = vld [vmem:[#allocation5 + $0xa00] sm:$0xff]
    %v448 = vld [vmem:[#allocation5 + $0xa08] sm:$0xff]
    %v449 = vld [vmem:[#allocation5 + $0xa10] sm:$0xff]
    %v450 = vld [vmem:[#allocation5 + $0xa18] sm:$0xff]
    %v451 = vld [vmem:[#allocation5 + $0xa20] sm:$0xff]
    %v452 = vld [vmem:[#allocation5 + $0xa28] sm:$0xff]
    %v453 = vld [vmem:[#allocation5 + $0xa30] sm:$0xff]
    %v454 = vld [vmem:[#allocation5 + $0xa38] sm:$0xff]
    %v455 = vld [vmem:[#allocation5 + $0xa40] sm:$0xff]
    %v456 = vld [vmem:[#allocation5 + $0xa48] sm:$0xff]
    %v457 = vld [vmem:[#allocation5 + $0xa50] sm:$0xff]
    %v458 = vld [vmem:[#allocation5 + $0xa58] sm:$0xff]
    %v459 = vld [vmem:[#allocation5 + $0xa60] sm:$0xff]
    %v460 = vld [vmem:[#allocation5 + $0xa68] sm:$0xff]
    %v461 = vld [vmem:[#allocation5 + $0xa70] sm:$0xff]
    %v462 = vld [vmem:[#allocation5 + $0xa78] sm:$0xff]
    %v463 = vld [vmem:[#allocation5 + $0xa80] sm:$0xff]
    %v464 = vld [vmem:[#allocation5 + $0xa88] sm:$0xff]
    %v465 = vld [vmem:[#allocation5 + $0xa90] sm:$0xff]
    %v466 = vld [vmem:[#allocation5 + $0xa98] sm:$0xff]
    %v467 = vld [vmem:[#allocation5 + $0xaa0] sm:$0xff]
    %v468 = vld [vmem:[#allocation5 + $0xaa8] sm:$0xff]
    %v469 = vld [vmem:[#allocation5 + $0xab0] sm:$0xff]
    %v470 = vld [vmem:[#allocation5 + $0xab8] sm:$0xff]
    %v471 = vld [vmem:[#allocation5 + $0xac0] sm:$0xff]
    %v472 = vld [vmem:[#allocation5 + $0xac8] sm:$0xff]
    %v473 = vld [vmem:[#allocation5 + $0xad0] sm:$0xff]
    %v474 = vld [vmem:[#allocation5 + $0xad8] sm:$0xff]
    %v475 = vld [vmem:[#allocation5 + $0xae0] sm:$0xff]
    %v476 = vld [vmem:[#allocation5 + $0xae8] sm:$0xff]
    %v477 = vld [vmem:[#allocation5 + $0xaf0] sm:$0xff]
    %v478 = vld [vmem:[#allocation5 + $0xaf8] sm:$0xff]
    %v479 = vld [vmem:[#allocation5 + $0xb00] sm:$0xff]
    %v480 = vld [vmem:[#allocation5 + $0xb08] sm:$0xff]
    %v481 = vld [vmem:[#allocation5 + $0xb10] sm:$0xff]
    %v482 = vld [vmem:[#allocation5 + $0xb18] sm:$0xff]
    %v483 = vld [vmem:[#allocation5 + $0xb20] sm:$0xff]
    %v484 = vld [vmem:[#allocation5 + $0xb28] sm:$0xff]
    %v485 = vld [vmem:[#allocation5 + $0xb30] sm:$0xff]
    %v486 = vld [vmem:[#allocation5 + $0xb38] sm:$0xff]
    %v487 = vld [vmem:[#allocation5 + $0xb40] sm:$0xff]
    %v488 = vld [vmem:[#allocation5 + $0xb48] sm:$0xff]
    %v489 = vld [vmem:[#allocation5 + $0xb50] sm:$0xff]
    %v490 = vld [vmem:[#allocation5 + $0xb58] sm:$0xff]
    %v491 = vld [vmem:[#allocation5 + $0xb60] sm:$0xff]
    %v492 = vld [vmem:[#allocation5 + $0xb68] sm:$0xff]
    %v493 = vld [vmem:[#allocation5 + $0xb70] sm:$0xff]
    %v494 = vld [vmem:[#allocation5 + $0xb78] sm:$0xff]
    %v495 = vld [vmem:[#allocation5 + $0xb80] sm:$0xff]
    %v496 = vld [vmem:[#allocation5 + $0xb88] sm:$0xff]
    %v497 = vld [vmem:[#allocation5 + $0xb90] sm:$0xff]
    %v498 = vld [vmem:[#allocation5 + $0xb98] sm:$0xff]
    %v499 = vld [vmem:[#allocation5 + $0xba0] sm:$0xff]
    %v500 = vld [vmem:[#allocation5 + $0xba8] sm:$0xff]
    %v501 = vld [vmem:[#allocation5 + $0xbb0] sm:$0xff]
    %v502 = vld [vmem:[#allocation5 + $0xbb8] sm:$0xff]
    %v503 = vld [vmem:[#allocation5 + $0xbc0] sm:$0xff]
    %v504 = vld [vmem:[#allocation5 + $0xbc8] sm:$0xff]
    %v505 = vld [vmem:[#allocation5 + $0xbd0] sm:$0xff]
    %v506 = vld [vmem:[#allocation5 + $0xbd8] sm:$0xff]
    %v507 = vld [vmem:[#allocation5 + $0xbe0] sm:$0xff]
    %v508 = vld [vmem:[#allocation5 + $0xbe8] sm:$0xff]
    %v509 = vld [vmem:[#allocation5 + $0xbf0] sm:$0xff]
    %v510 = vld [vmem:[#allocation5 + $0xbf8] sm:$0xff]
    %v511 = vld [vmem:[#allocation5 + $0xc00] sm:$0xff]
    %v512 = vld [vmem:[#allocation5 + $0xc08] sm:$0xff]
    %v513 = vld [vmem:[#allocation5 + $0xc10] sm:$0xff]
    %v514 = vld [vmem:[#allocation5 + $0xc18] sm:$0xff]
    %v515 = vld [vmem:[#allocation5 + $0xc20] sm:$0xff]
    %v516 = vld [vmem:[#allocation5 + $0xc28] sm:$0xff]
    %v517 = vld [vmem:[#allocation5 + $0xc30] sm:$0xff]
    %v518 = vld [vmem:[#allocation5 + $0xc38] sm:$0xff]
    %v519 = vld [vmem:[#allocation5 + $0xc40] sm:$0xff]
    %v520 = vld [vmem:[#allocation5 + $0xc48] sm:$0xff]
    %v521 = vld [vmem:[#allocation5 + $0xc50] sm:$0xff]
    %v522 = vld [vmem:[#allocation5 + $0xc58] sm:$0xff]
    %v523 = vld [vmem:[#allocation5 + $0xc60] sm:$0xff]
    %v524 = vld [vmem:[#allocation5 + $0xc68] sm:$0xff]
    %v525 = vld [vmem:[#allocation5 + $0xc70] sm:$0xff]
    %v526 = vld [vmem:[#allocation5 + $0xc78] sm:$0xff]
    %v527 = vld [vmem:[#allocation5 + $0xc80] sm:$0xff]
    %v528 = vld [vmem:[#allocation5 + $0xc88] sm:$0xff]
    %v529 = vld [vmem:[#allocation5 + $0xc90] sm:$0xff]
    %v530 = vld [vmem:[#allocation5 + $0xc98] sm:$0xff]
    %v531 = vld [vmem:[#allocation5 + $0xca0] sm:$0xff]
    %v532 = vld [vmem:[#allocation5 + $0xca8] sm:$0xff]
    %v533 = vld [vmem:[#allocation5 + $0xcb0] sm:$0xff]
    %v534 = vld [vmem:[#allocation5 + $0xcb8] sm:$0xff]
    %v535 = vld [vmem:[#allocation5 + $0xcc0] sm:$0xff]
    %v536 = vld [vmem:[#allocation5 + $0xcc8] sm:$0xff]
    %v537 = vld [vmem:[#allocation5 + $0xcd0] sm:$0xff]
    %v538 = vld [vmem:[#allocation5 + $0xcd8] sm:$0xff]
    %v539 = vld [vmem:[#allocation5 + $0xce0] sm:$0xff]
    %v540 = vld [vmem:[#allocation5 + $0xce8] sm:$0xff]
    %v541 = vld [vmem:[#allocation5 + $0xcf0] sm:$0xff]
    %v542 = vld [vmem:[#allocation5 + $0xcf8] sm:$0xff]
    %v543 = vld [vmem:[#allocation5 + $0xd00] sm:$0xff]
    %v544 = vld [vmem:[#allocation5 + $0xd08] sm:$0xff]
    %v545 = vld [vmem:[#allocation5 + $0xd10] sm:$0xff]
    %v546 = vld [vmem:[#allocation5 + $0xd18] sm:$0xff]
    %v547 = vld [vmem:[#allocation5 + $0xd20] sm:$0xff]
    %v548 = vld [vmem:[#allocation5 + $0xd28] sm:$0xff]
    %v549 = vld [vmem:[#allocation5 + $0xd30] sm:$0xff]
    %v550 = vld [vmem:[#allocation5 + $0xd38] sm:$0xff]
    %v551 = vld [vmem:[#allocation5 + $0xd40] sm:$0xff]
    %v552 = vld [vmem:[#allocation5 + $0xd48] sm:$0xff]
    %v553 = vld [vmem:[#allocation5 + $0xd50] sm:$0xff]
    %v554 = vld [vmem:[#allocation5 + $0xd58] sm:$0xff]
    %v555 = vld [vmem:[#allocation5 + $0xd60] sm:$0xff]
    %v556 = vld [vmem:[#allocation5 + $0xd68] sm:$0xff]
    %v557 = vld [vmem:[#allocation5 + $0xd70] sm:$0xff]
    %v558 = vld [vmem:[#allocation5 + $0xd78] sm:$0xff]
    %v559 = vld [vmem:[#allocation5 + $0xd80] sm:$0xff]
    %v560 = vld [vmem:[#allocation5 + $0xd88] sm:$0xff]
    %v561 = vld [vmem:[#allocation5 + $0xd90] sm:$0xff]
    %v562 = vld [vmem:[#allocation5 + $0xd98] sm:$0xff]
    %v563 = vld [vmem:[#allocation5 + $0xda0] sm:$0xff]
    %v564 = vld [vmem:[#allocation5 + $0xda8] sm:$0xff]
    %v565 = vld [vmem:[#allocation5 + $0xdb0] sm:$0xff]
    %v566 = vld [vmem:[#allocation5 + $0xdb8] sm:$0xff]
    %v567 = vld [vmem:[#allocation5 + $0xdc0] sm:$0xff]
    %v568 = vld [vmem:[#allocation5 + $0xdc8] sm:$0xff]
    %v569 = vld [vmem:[#allocation5 + $0xdd0] sm:$0xff]
    %v570 = vld [vmem:[#allocation5 + $0xdd8] sm:$0xff]
    %v571 = vld [vmem:[#allocation5 + $0xde0] sm:$0xff]
    %v572 = vld [vmem:[#allocation5 + $0xde8] sm:$0xff]
    %v573 = vld [vmem:[#allocation5 + $0xdf0] sm:$0xff]
    %v574 = vld [vmem:[#allocation5 + $0xdf8] sm:$0xff]
    %v575 = vld [vmem:[#allocation5 + $0xe00] sm:$0xff]
    %v576 = vld [vmem:[#allocation5 + $0xe08] sm:$0xff]
    %v577 = vld [vmem:[#allocation5 + $0xe10] sm:$0xff]
    %v578 = vld [vmem:[#allocation5 + $0xe18] sm:$0xff]
    %v579 = vld [vmem:[#allocation5 + $0xe20] sm:$0xff]
    %v580 = vld [vmem:[#allocation5 + $0xe28] sm:$0xff]
    %v581 = vld [vmem:[#allocation5 + $0xe30] sm:$0xff]
    %v582 = vld [vmem:[#allocation5 + $0xe38] sm:$0xff]
    %v583 = vld [vmem:[#allocation5 + $0xe40] sm:$0xff]
    %v584 = vld [vmem:[#allocation5 + $0xe48] sm:$0xff]
    %v585 = vld [vmem:[#allocation5 + $0xe50] sm:$0xff]
    %v586 = vld [vmem:[#allocation5 + $0xe58] sm:$0xff]
    %v587 = vld [vmem:[#allocation5 + $0xe60] sm:$0xff]
    %v588 = vld [vmem:[#allocation5 + $0xe68] sm:$0xff]
    %v589 = vld [vmem:[#allocation5 + $0xe70] sm:$0xff]
    %v590 = vld [vmem:[#allocation5 + $0xe78] sm:$0xff]
    %v591 = vld [vmem:[#allocation5 + $0xe80] sm:$0xff]
    %v592 = vld [vmem:[#allocation5 + $0xe88] sm:$0xff]
    %v593 = vld [vmem:[#allocation5 + $0xe90] sm:$0xff]
    %v594 = vld [vmem:[#allocation5 + $0xe98] sm:$0xff]
    %v595 = vld [vmem:[#allocation5 + $0xea0] sm:$0xff]
    %v596 = vld [vmem:[#allocation5 + $0xea8] sm:$0xff]
    %v597 = vld [vmem:[#allocation5 + $0xeb0] sm:$0xff]
    %v598 = vld [vmem:[#allocation5 + $0xeb8] sm:$0xff]
    %v599 = vld [vmem:[#allocation5 + $0xec0] sm:$0xff]
    %v600 = vld [vmem:[#allocation5 + $0xec8] sm:$0xff]
    %v601 = vld [vmem:[#allocation5 + $0xed0] sm:$0xff]
    %v602 = vld [vmem:[#allocation5 + $0xed8] sm:$0xff]
    %v603 = vld [vmem:[#allocation5 + $0xee0] sm:$0xff]
    %v604 = vld [vmem:[#allocation5 + $0xee8] sm:$0xff]
    %v605 = vld [vmem:[#allocation5 + $0xef0] sm:$0xff]
    %v606 = vld [vmem:[#allocation5 + $0xef8] sm:$0xff]
    %v607 = vld [vmem:[#allocation5 + $0xf00] sm:$0xff]
    %v608 = vld [vmem:[#allocation5 + $0xf08] sm:$0xff]
    %v609 = vld [vmem:[#allocation5 + $0xf10] sm:$0xff]
    %v610 = vld [vmem:[#allocation5 + $0xf18] sm:$0xff]
    %v611 = vld [vmem:[#allocation5 + $0xf20] sm:$0xff]
    %v612 = vld [vmem:[#allocation5 + $0xf28] sm:$0xff]
    %v613 = vld [vmem:[#allocation5 + $0xf30] sm:$0xff]
    %v614 = vld [vmem:[#allocation5 + $0xf38] sm:$0xff]
    %v615 = vld [vmem:[#allocation5 + $0xf40] sm:$0xff]
    %v616 = vld [vmem:[#allocation5 + $0xf48] sm:$0xff]
    %v617 = vld [vmem:[#allocation5 + $0xf50] sm:$0xff]
    %v618 = vld [vmem:[#allocation5 + $0xf58] sm:$0xff]
    %v619 = vld [vmem:[#allocation5 + $0xf60] sm:$0xff]
    %v620 = vld [vmem:[#allocation5 + $0xf68] sm:$0xff]
    %v621 = vld [vmem:[#allocation5 + $0xf70] sm:$0xff]
    %v622 = vld [vmem:[#allocation5 + $0xf78] sm:$0xff]
    %v623 = vld [vmem:[#allocation5 + $0xf80] sm:$0xff]
    %v624 = vld [vmem:[#allocation5 + $0xf88] sm:$0xff]
    %v625 = vld [vmem:[#allocation5 + $0xf90] sm:$0xff]
    %v626 = vld [vmem:[#allocation5 + $0xf98] sm:$0xff]
    %v627 = vld [vmem:[#allocation5 + $0xfa0] sm:$0xff]
    %v628 = vld [vmem:[#allocation5 + $0xfa8] sm:$0xff]
    %v629 = vld [vmem:[#allocation5 + $0xfb0] sm:$0xff]
    %v630 = vld [vmem:[#allocation5 + $0xfb8] sm:$0xff]
    %v631 = vld [vmem:[#allocation5 + $0xfc0] sm:$0xff]
    %v632 = vld [vmem:[#allocation5 + $0xfc8] sm:$0xff]
    %v633 = vld [vmem:[#allocation5 + $0xfd0] sm:$0xff]
    %v634 = vld [vmem:[#allocation5 + $0xfd8] sm:$0xff]
    %v635 = vld [vmem:[#allocation5 + $0xfe0] sm:$0xff]
    %v636 = vld [vmem:[#allocation5 + $0xfe8] sm:$0xff]
    %v637 = vld [vmem:[#allocation5 + $0xff0] sm:$0xff]
    %v638 = vld [vmem:[#allocation5 + $0xff8] sm:$0xff]
    %v640 = vperm.slane %v125, 0
    %v641 = vperm.slane %v125, 1
    %v642 = vperm.slane %v125, 2
    %v643 = vperm.slane %v125, 3
    %v1160 = vunpack.c.l.b16 %v127
    %v1161 = vunpack.c.h.b16 %v127
    %v1162 = vunpack.c.l.b16 %v128
    %v1163 = vunpack.c.h.b16 %v128
    %v1164 = vunpack.c.l.b16 %v129
    %v1165 = vunpack.c.h.b16 %v129
    %v1166 = vunpack.c.l.b16 %v130
    %v1167 = vunpack.c.h.b16 %v130
    %v1168 = vunpack.c.l.b16 %v131
    %v1169 = vunpack.c.h.b16 %v131
    %v1170 = vunpack.c.l.b16 %v132
    %v1171 = vunpack.c.h.b16 %v132
    %v1172 = vunpack.c.l.b16 %v133
    %v1173 = vunpack.c.h.b16 %v133
    %v1174 = vunpack.c.l.b16 %v134
    %v1175 = vunpack.c.h.b16 %v134
    %v1176 = vunpack.c.l.b16 %v135
    %v1177 = vunpack.c.h.b16 %v135
    %v1178 = vunpack.c.l.b16 %v136
    %v1179 = vunpack.c.h.b16 %v136
    %v1180 = vunpack.c.l.b16 %v137
    %v1181 = vunpack.c.h.b16 %v137
    %v1182 = vunpack.c.l.b16 %v138
    %v1183 = vunpack.c.h.b16 %v138
    %v1184 = vunpack.c.l.b16 %v139
    %v1185 = vunpack.c.h.b16 %v139
    %v1186 = vunpack.c.l.b16 %v140
    %v1187 = vunpack.c.h.b16 %v140
    %v1188 = vunpack.c.l.b16 %v141
    %v1189 = vunpack.c.h.b16 %v141
    %v1190 = vunpack.c.l.b16 %v142
    %v1191 = vunpack.c.h.b16 %v142
    %v1192 = vunpack.c.l.b16 %v143
    %v1193 = vunpack.c.h.b16 %v143
    %v1194 = vunpack.c.l.b16 %v144
    %v1195 = vunpack.c.h.b16 %v144
    %v1196 = vunpack.c.l.b16 %v145
    %v1197 = vunpack.c.h.b16 %v145
    %v1198 = vunpack.c.l.b16 %v146
    %v1199 = vunpack.c.h.b16 %v146
    %v1200 = vunpack.c.l.b16 %v147
    %v1201 = vunpack.c.h.b16 %v147
    %v1202 = vunpack.c.l.b16 %v148
    %v1203 = vunpack.c.h.b16 %v148
    %v1204 = vunpack.c.l.b16 %v149
    %v1205 = vunpack.c.h.b16 %v149
    %v1206 = vunpack.c.l.b16 %v150
    %v1207 = vunpack.c.h.b16 %v150
    %v1208 = vunpack.c.l.b16 %v151
    %v1209 = vunpack.c.h.b16 %v151
    %v1210 = vunpack.c.l.b16 %v152
    %v1211 = vunpack.c.h.b16 %v152
    %v1212 = vunpack.c.l.b16 %v153
    %v1213 = vunpack.c.h.b16 %v153
    %v1214 = vunpack.c.l.b16 %v154
    %v1215 = vunpack.c.h.b16 %v154
    %v1216 = vunpack.c.l.b16 %v155
    %v1217 = vunpack.c.h.b16 %v155
    %v1218 = vunpack.c.l.b16 %v156
    %v1219 = vunpack.c.h.b16 %v156
    %v1220 = vunpack.c.l.b16 %v157
    %v1221 = vunpack.c.h.b16 %v157
    %v1222 = vunpack.c.l.b16 %v158
    %v1223 = vunpack.c.h.b16 %v158
    %v1224 = vunpack.c.l.b16 %v159
    %v1225 = vunpack.c.h.b16 %v159
    %v1226 = vunpack.c.l.b16 %v160
    %v1227 = vunpack.c.h.b16 %v160
    %v1228 = vunpack.c.l.b16 %v161
    %v1229 = vunpack.c.h.b16 %v161
    %v1230 = vunpack.c.l.b16 %v162
    %v1231 = vunpack.c.h.b16 %v162
    %v1232 = vunpack.c.l.b16 %v163
    %v1233 = vunpack.c.h.b16 %v163
    %v1234 = vunpack.c.l.b16 %v164
    %v1235 = vunpack.c.h.b16 %v164
    %v1236 = vunpack.c.l.b16 %v165
    %v1237 = vunpack.c.h.b16 %v165
    %v1238 = vunpack.c.l.b16 %v166
    %v1239 = vunpack.c.h.b16 %v166
    %v1240 = vunpack.c.l.b16 %v167
    %v1241 = vunpack.c.h.b16 %v167
    %v1242 = vunpack.c.l.b16 %v168
    %v1243 = vunpack.c.h.b16 %v168
    %v1244 = vunpack.c.l.b16 %v169
    %v1245 = vunpack.c.h.b16 %v169
    %v1246 = vunpack.c.l.b16 %v170
    %v1247 = vunpack.c.h.b16 %v170
    %v1248 = vunpack.c.l.b16 %v171
    %v1249 = vunpack.c.h.b16 %v171
    %v1250 = vunpack.c.l.b16 %v172
    %v1251 = vunpack.c.h.b16 %v172
    %v1252 = vunpack.c.l.b16 %v173
    %v1253 = vunpack.c.h.b16 %v173
    %v1254 = vunpack.c.l.b16 %v174
    %v1255 = vunpack.c.h.b16 %v174
    %v1256 = vunpack.c.l.b16 %v175
    %v1257 = vunpack.c.h.b16 %v175
    %v1258 = vunpack.c.l.b16 %v176
    %v1259 = vunpack.c.h.b16 %v176
    %v1260 = vunpack.c.l.b16 %v177
    %v1261 = vunpack.c.h.b16 %v177
    %v1262 = vunpack.c.l.b16 %v178
    %v1263 = vunpack.c.h.b16 %v178
    %v1264 = vunpack.c.l.b16 %v179
    %v1265 = vunpack.c.h.b16 %v179
    %v1266 = vunpack.c.l.b16 %v180
    %v1267 = vunpack.c.h.b16 %v180
    %v1268 = vunpack.c.l.b16 %v181
    %v1269 = vunpack.c.h.b16 %v181
    %v1270 = vunpack.c.l.b16 %v182
    %v1271 = vunpack.c.h.b16 %v182
    %v1272 = vunpack.c.l.b16 %v183
    %v1273 = vunpack.c.h.b16 %v183
    %v1274 = vunpack.c.l.b16 %v184
    %v1275 = vunpack.c.h.b16 %v184
    %v1276 = vunpack.c.l.b16 %v185
    %v1277 = vunpack.c.h.b16 %v185
    %v1278 = vunpack.c.l.b16 %v186
    %v1279 = vunpack.c.h.b16 %v186
    %v1280 = vunpack.c.l.b16 %v187
    %v1281 = vunpack.c.h.b16 %v187
    %v1282 = vunpack.c.l.b16 %v188
    %v1283 = vunpack.c.h.b16 %v188
    %v1284 = vunpack.c.l.b16 %v189
    %v1285 = vunpack.c.h.b16 %v189
    %v1286 = vunpack.c.l.b16 %v190
    %v1287 = vunpack.c.h.b16 %v190
    %v1288 = vunpack.c.l.b16 %v191
    %v1289 = vunpack.c.h.b16 %v191
    %v1290 = vunpack.c.l.b16 %v192
    %v1291 = vunpack.c.h.b16 %v192
    %v1292 = vunpack.c.l.b16 %v193
    %v1293 = vunpack.c.h.b16 %v193
    %v1294 = vunpack.c.l.b16 %v194
    %v1295 = vunpack.c.h.b16 %v194
    %v1296 = vunpack.c.l.b16 %v195
    %v1297 = vunpack.c.h.b16 %v195
    %v1298 = vunpack.c.l.b16 %v196
    %v1299 = vunpack.c.h.b16 %v196
    %v1300 = vunpack.c.l.b16 %v197
    %v1301 = vunpack.c.h.b16 %v197
    %v1302 = vunpack.c.l.b16 %v198
    %v1303 = vunpack.c.h.b16 %v198
    %v1304 = vunpack.c.l.b16 %v199
    %v1305 = vunpack.c.h.b16 %v199
    %v1306 = vunpack.c.l.b16 %v200
    %v1307 = vunpack.c.h.b16 %v200
    %v1308 = vunpack.c.l.b16 %v201
    %v1309 = vunpack.c.h.b16 %v201
    %v1310 = vunpack.c.l.b16 %v202
    %v1311 = vunpack.c.h.b16 %v202
    %v1312 = vunpack.c.l.b16 %v203
    %v1313 = vunpack.c.h.b16 %v203
    %v1314 = vunpack.c.l.b16 %v204
    %v1315 = vunpack.c.h.b16 %v204
    %v1316 = vunpack.c.l.b16 %v205
    %v1317 = vunpack.c.h.b16 %v205
    %v1318 = vunpack.c.l.b16 %v206
    %v1319 = vunpack.c.h.b16 %v206
    %v1320 = vunpack.c.l.b16 %v207
    %v1321 = vunpack.c.h.b16 %v207
    %v1322 = vunpack.c.l.b16 %v208
    %v1323 = vunpack.c.h.b16 %v208
    %v1324 = vunpack.c.l.b16 %v209
    %v1325 = vunpack.c.h.b16 %v209
    %v1326 = vunpack.c.l.b16 %v210
    %v1327 = vunpack.c.h.b16 %v210
    %v1328 = vunpack.c.l.b16 %v211
    %v1329 = vunpack.c.h.b16 %v211
    %v1330 = vunpack.c.l.b16 %v212
    %v1331 = vunpack.c.h.b16 %v212
    %v1332 = vunpack.c.l.b16 %v213
    %v1333 = vunpack.c.h.b16 %v213
    %v1334 = vunpack.c.l.b16 %v214
    %v1335 = vunpack.c.h.b16 %v214
    %v1336 = vunpack.c.l.b16 %v215
    %v1337 = vunpack.c.h.b16 %v215
    %v1338 = vunpack.c.l.b16 %v216
    %v1339 = vunpack.c.h.b16 %v216
    %v1340 = vunpack.c.l.b16 %v217
    %v1341 = vunpack.c.h.b16 %v217
    %v1342 = vunpack.c.l.b16 %v218
    %v1343 = vunpack.c.h.b16 %v218
    %v1344 = vunpack.c.l.b16 %v219
    %v1345 = vunpack.c.h.b16 %v219
    %v1346 = vunpack.c.l.b16 %v220
    %v1347 = vunpack.c.h.b16 %v220
    %v1348 = vunpack.c.l.b16 %v221
    %v1349 = vunpack.c.h.b16 %v221
    %v1350 = vunpack.c.l.b16 %v222
    %v1351 = vunpack.c.h.b16 %v222
    %v1352 = vunpack.c.l.b16 %v223
    %v1353 = vunpack.c.h.b16 %v223
    %v1354 = vunpack.c.l.b16 %v224
    %v1355 = vunpack.c.h.b16 %v224
    %v1356 = vunpack.c.l.b16 %v225
    %v1357 = vunpack.c.h.b16 %v225
    %v1358 = vunpack.c.l.b16 %v226
    %v1359 = vunpack.c.h.b16 %v226
    %v1360 = vunpack.c.l.b16 %v227
    %v1361 = vunpack.c.h.b16 %v227
    %v1362 = vunpack.c.l.b16 %v228
    %v1363 = vunpack.c.h.b16 %v228
    %v1364 = vunpack.c.l.b16 %v229
    %v1365 = vunpack.c.h.b16 %v229
    %v1366 = vunpack.c.l.b16 %v230
    %v1367 = vunpack.c.h.b16 %v230
    %v1368 = vunpack.c.l.b16 %v231
    %v1369 = vunpack.c.h.b16 %v231
    %v1370 = vunpack.c.l.b16 %v232
    %v1371 = vunpack.c.h.b16 %v232
    %v1372 = vunpack.c.l.b16 %v233
    %v1373 = vunpack.c.h.b16 %v233
    %v1374 = vunpack.c.l.b16 %v234
    %v1375 = vunpack.c.h.b16 %v234
    %v1376 = vunpack.c.l.b16 %v235
    %v1377 = vunpack.c.h.b16 %v235
    %v1378 = vunpack.c.l.b16 %v236
    %v1379 = vunpack.c.h.b16 %v236
    %v1380 = vunpack.c.l.b16 %v237
    %v1381 = vunpack.c.h.b16 %v237
    %v1382 = vunpack.c.l.b16 %v238
    %v1383 = vunpack.c.h.b16 %v238
    %v1384 = vunpack.c.l.b16 %v239
    %v1385 = vunpack.c.h.b16 %v239
    %v1386 = vunpack.c.l.b16 %v240
    %v1387 = vunpack.c.h.b16 %v240
    %v1388 = vunpack.c.l.b16 %v241
    %v1389 = vunpack.c.h.b16 %v241
    %v1390 = vunpack.c.l.b16 %v242
    %v1391 = vunpack.c.h.b16 %v242
    %v1392 = vunpack.c.l.b16 %v243
    %v1393 = vunpack.c.h.b16 %v243
    %v1394 = vunpack.c.l.b16 %v244
    %v1395 = vunpack.c.h.b16 %v244
    %v1396 = vunpack.c.l.b16 %v245
    %v1397 = vunpack.c.h.b16 %v245
    %v1398 = vunpack.c.l.b16 %v246
    %v1399 = vunpack.c.h.b16 %v246
    %v1400 = vunpack.c.l.b16 %v247
    %v1401 = vunpack.c.h.b16 %v247
    %v1402 = vunpack.c.l.b16 %v248
    %v1403 = vunpack.c.h.b16 %v248
    %v1404 = vunpack.c.l.b16 %v249
    %v1405 = vunpack.c.h.b16 %v249
    %v1406 = vunpack.c.l.b16 %v250
    %v1407 = vunpack.c.h.b16 %v250
    %v1408 = vunpack.c.l.b16 %v251
    %v1409 = vunpack.c.h.b16 %v251
    %v1410 = vunpack.c.l.b16 %v252
    %v1411 = vunpack.c.h.b16 %v252
    %v1412 = vunpack.c.l.b16 %v253
    %v1413 = vunpack.c.h.b16 %v253
    %v1414 = vunpack.c.l.b16 %v254
    %v1415 = vunpack.c.h.b16 %v254
    %v1416 = vunpack.c.l.b16 %v255
    %v1417 = vunpack.c.h.b16 %v255
    %v1418 = vunpack.c.l.b16 %v256
    %v1419 = vunpack.c.h.b16 %v256
    %v1420 = vunpack.c.l.b16 %v257
    %v1421 = vunpack.c.h.b16 %v257
    %v1422 = vunpack.c.l.b16 %v258
    %v1423 = vunpack.c.h.b16 %v258
    %v1424 = vunpack.c.l.b16 %v259
    %v1425 = vunpack.c.h.b16 %v259
    %v1426 = vunpack.c.l.b16 %v260
    %v1427 = vunpack.c.h.b16 %v260
    %v1428 = vunpack.c.l.b16 %v261
    %v1429 = vunpack.c.h.b16 %v261
    %v1430 = vunpack.c.l.b16 %v262
    %v1431 = vunpack.c.h.b16 %v262
    %v1432 = vunpack.c.l.b16 %v263
    %v1433 = vunpack.c.h.b16 %v263
    %v1434 = vunpack.c.l.b16 %v264
    %v1435 = vunpack.c.h.b16 %v264
    %v1436 = vunpack.c.l.b16 %v265
    %v1437 = vunpack.c.h.b16 %v265
    %v1438 = vunpack.c.l.b16 %v266
    %v1439 = vunpack.c.h.b16 %v266
    %v1440 = vunpack.c.l.b16 %v267
    %v1441 = vunpack.c.h.b16 %v267
    %v1442 = vunpack.c.l.b16 %v268
    %v1443 = vunpack.c.h.b16 %v268
    %v1444 = vunpack.c.l.b16 %v269
    %v1445 = vunpack.c.h.b16 %v269
    %v1446 = vunpack.c.l.b16 %v270
    %v1447 = vunpack.c.h.b16 %v270
    %v1448 = vunpack.c.l.b16 %v271
    %v1449 = vunpack.c.h.b16 %v271
    %v1450 = vunpack.c.l.b16 %v272
    %v1451 = vunpack.c.h.b16 %v272
    %v1452 = vunpack.c.l.b16 %v273
    %v1453 = vunpack.c.h.b16 %v273
    %v1454 = vunpack.c.l.b16 %v274
    %v1455 = vunpack.c.h.b16 %v274
    %v1456 = vunpack.c.l.b16 %v275
    %v1457 = vunpack.c.h.b16 %v275
    %v1458 = vunpack.c.l.b16 %v276
    %v1459 = vunpack.c.h.b16 %v276
    %v1460 = vunpack.c.l.b16 %v277
    %v1461 = vunpack.c.h.b16 %v277
    %v1462 = vunpack.c.l.b16 %v278
    %v1463 = vunpack.c.h.b16 %v278
    %v1464 = vunpack.c.l.b16 %v279
    %v1465 = vunpack.c.h.b16 %v279
    %v1466 = vunpack.c.l.b16 %v280
    %v1467 = vunpack.c.h.b16 %v280
    %v1468 = vunpack.c.l.b16 %v281
    %v1469 = vunpack.c.h.b16 %v281
    %v1470 = vunpack.c.l.b16 %v282
    %v1471 = vunpack.c.h.b16 %v282
    %v1472 = vunpack.c.l.b16 %v283
    %v1473 = vunpack.c.h.b16 %v283
    %v1474 = vunpack.c.l.b16 %v284
    %v1475 = vunpack.c.h.b16 %v284
    %v1476 = vunpack.c.l.b16 %v285
    %v1477 = vunpack.c.h.b16 %v285
    %v1478 = vunpack.c.l.b16 %v286
    %v1479 = vunpack.c.h.b16 %v286
    %v1480 = vunpack.c.l.b16 %v287
    %v1481 = vunpack.c.h.b16 %v287
    %v1482 = vunpack.c.l.b16 %v288
    %v1483 = vunpack.c.h.b16 %v288
    %v1484 = vunpack.c.l.b16 %v289
    %v1485 = vunpack.c.h.b16 %v289
    %v1486 = vunpack.c.l.b16 %v290
    %v1487 = vunpack.c.h.b16 %v290
    %v1488 = vunpack.c.l.b16 %v291
    %v1489 = vunpack.c.h.b16 %v291
    %v1490 = vunpack.c.l.b16 %v292
    %v1491 = vunpack.c.h.b16 %v292
    %v1492 = vunpack.c.l.b16 %v293
    %v1493 = vunpack.c.h.b16 %v293
    %v1494 = vunpack.c.l.b16 %v294
    %v1495 = vunpack.c.h.b16 %v294
    %v1496 = vunpack.c.l.b16 %v295
    %v1497 = vunpack.c.h.b16 %v295
    %v1498 = vunpack.c.l.b16 %v296
    %v1499 = vunpack.c.h.b16 %v296
    %v1500 = vunpack.c.l.b16 %v297
    %v1501 = vunpack.c.h.b16 %v297
    %v1502 = vunpack.c.l.b16 %v298
    %v1503 = vunpack.c.h.b16 %v298
    %v1504 = vunpack.c.l.b16 %v299
    %v1505 = vunpack.c.h.b16 %v299
    %v1506 = vunpack.c.l.b16 %v300
    %v1507 = vunpack.c.h.b16 %v300
    %v1508 = vunpack.c.l.b16 %v301
    %v1509 = vunpack.c.h.b16 %v301
    %v1510 = vunpack.c.l.b16 %v302
    %v1511 = vunpack.c.h.b16 %v302
    %v1512 = vunpack.c.l.b16 %v303
    %v1513 = vunpack.c.h.b16 %v303
    %v1514 = vunpack.c.l.b16 %v304
    %v1515 = vunpack.c.h.b16 %v304
    %v1516 = vunpack.c.l.b16 %v305
    %v1517 = vunpack.c.h.b16 %v305
    %v1518 = vunpack.c.l.b16 %v306
    %v1519 = vunpack.c.h.b16 %v306
    %v1520 = vunpack.c.l.b16 %v307
    %v1521 = vunpack.c.h.b16 %v307
    %v1522 = vunpack.c.l.b16 %v308
    %v1523 = vunpack.c.h.b16 %v308
    %v1524 = vunpack.c.l.b16 %v309
    %v1525 = vunpack.c.h.b16 %v309
    %v1526 = vunpack.c.l.b16 %v310
    %v1527 = vunpack.c.h.b16 %v310
    %v1528 = vunpack.c.l.b16 %v311
    %v1529 = vunpack.c.h.b16 %v311
    %v1530 = vunpack.c.l.b16 %v312
    %v1531 = vunpack.c.h.b16 %v312
    %v1532 = vunpack.c.l.b16 %v313
    %v1533 = vunpack.c.h.b16 %v313
    %v1534 = vunpack.c.l.b16 %v314
    %v1535 = vunpack.c.h.b16 %v314
    %v1536 = vunpack.c.l.b16 %v315
    %v1537 = vunpack.c.h.b16 %v315
    %v1538 = vunpack.c.l.b16 %v316
    %v1539 = vunpack.c.h.b16 %v316
    %v1540 = vunpack.c.l.b16 %v317
    %v1541 = vunpack.c.h.b16 %v317
    %v1542 = vunpack.c.l.b16 %v318
    %v1543 = vunpack.c.h.b16 %v318
    %v1544 = vunpack.c.l.b16 %v319
    %v1545 = vunpack.c.h.b16 %v319
    %v1546 = vunpack.c.l.b16 %v320
    %v1547 = vunpack.c.h.b16 %v320
    %v1548 = vunpack.c.l.b16 %v321
    %v1549 = vunpack.c.h.b16 %v321
    %v1550 = vunpack.c.l.b16 %v322
    %v1551 = vunpack.c.h.b16 %v322
    %v1552 = vunpack.c.l.b16 %v323
    %v1553 = vunpack.c.h.b16 %v323
    %v1554 = vunpack.c.l.b16 %v324
    %v1555 = vunpack.c.h.b16 %v324
    %v1556 = vunpack.c.l.b16 %v325
    %v1557 = vunpack.c.h.b16 %v325
    %v1558 = vunpack.c.l.b16 %v326
    %v1559 = vunpack.c.h.b16 %v326
    %v1560 = vunpack.c.l.b16 %v327
    %v1561 = vunpack.c.h.b16 %v327
    %v1562 = vunpack.c.l.b16 %v328
    %v1563 = vunpack.c.h.b16 %v328
    %v1564 = vunpack.c.l.b16 %v329
    %v1565 = vunpack.c.h.b16 %v329
    %v1566 = vunpack.c.l.b16 %v330
    %v1567 = vunpack.c.h.b16 %v330
    %v1568 = vunpack.c.l.b16 %v331
    %v1569 = vunpack.c.h.b16 %v331
    %v1570 = vunpack.c.l.b16 %v332
    %v1571 = vunpack.c.h.b16 %v332
    %v1572 = vunpack.c.l.b16 %v333
    %v1573 = vunpack.c.h.b16 %v333
    %v1574 = vunpack.c.l.b16 %v334
    %v1575 = vunpack.c.h.b16 %v334
    %v1576 = vunpack.c.l.b16 %v335
    %v1577 = vunpack.c.h.b16 %v335
    %v1578 = vunpack.c.l.b16 %v336
    %v1579 = vunpack.c.h.b16 %v336
    %v1580 = vunpack.c.l.b16 %v337
    %v1581 = vunpack.c.h.b16 %v337
    %v1582 = vunpack.c.l.b16 %v338
    %v1583 = vunpack.c.h.b16 %v338
    %v1584 = vunpack.c.l.b16 %v339
    %v1585 = vunpack.c.h.b16 %v339
    %v1586 = vunpack.c.l.b16 %v340
    %v1587 = vunpack.c.h.b16 %v340
    %v1588 = vunpack.c.l.b16 %v341
    %v1589 = vunpack.c.h.b16 %v341
    %v1590 = vunpack.c.l.b16 %v342
    %v1591 = vunpack.c.h.b16 %v342
    %v1592 = vunpack.c.l.b16 %v343
    %v1593 = vunpack.c.h.b16 %v343
    %v1594 = vunpack.c.l.b16 %v344
    %v1595 = vunpack.c.h.b16 %v344
    %v1596 = vunpack.c.l.b16 %v345
    %v1597 = vunpack.c.h.b16 %v345
    %v1598 = vunpack.c.l.b16 %v346
    %v1599 = vunpack.c.h.b16 %v346
    %v1600 = vunpack.c.l.b16 %v347
    %v1601 = vunpack.c.h.b16 %v347
    %v1602 = vunpack.c.l.b16 %v348
    %v1603 = vunpack.c.h.b16 %v348
    %v1604 = vunpack.c.l.b16 %v349
    %v1605 = vunpack.c.h.b16 %v349
    %v1606 = vunpack.c.l.b16 %v350
    %v1607 = vunpack.c.h.b16 %v350
    %v1608 = vunpack.c.l.b16 %v351
    %v1609 = vunpack.c.h.b16 %v351
    %v1610 = vunpack.c.l.b16 %v352
    %v1611 = vunpack.c.h.b16 %v352
    %v1612 = vunpack.c.l.b16 %v353
    %v1613 = vunpack.c.h.b16 %v353
    %v1614 = vunpack.c.l.b16 %v354
    %v1615 = vunpack.c.h.b16 %v354
    %v1616 = vunpack.c.l.b16 %v355
    %v1617 = vunpack.c.h.b16 %v355
    %v1618 = vunpack.c.l.b16 %v356
    %v1619 = vunpack.c.h.b16 %v356
    %v1620 = vunpack.c.l.b16 %v357
    %v1621 = vunpack.c.h.b16 %v357
    %v1622 = vunpack.c.l.b16 %v358
    %v1623 = vunpack.c.h.b16 %v358
    %v1624 = vunpack.c.l.b16 %v359
    %v1625 = vunpack.c.h.b16 %v359
    %v1626 = vunpack.c.l.b16 %v360
    %v1627 = vunpack.c.h.b16 %v360
    %v1628 = vunpack.c.l.b16 %v361
    %v1629 = vunpack.c.h.b16 %v361
    %v1630 = vunpack.c.l.b16 %v362
    %v1631 = vunpack.c.h.b16 %v362
    %v1632 = vunpack.c.l.b16 %v363
    %v1633 = vunpack.c.h.b16 %v363
    %v1634 = vunpack.c.l.b16 %v364
    %v1635 = vunpack.c.h.b16 %v364
    %v1636 = vunpack.c.l.b16 %v365
    %v1637 = vunpack.c.h.b16 %v365
    %v1638 = vunpack.c.l.b16 %v366
    %v1639 = vunpack.c.h.b16 %v366
    %v1640 = vunpack.c.l.b16 %v367
    %v1641 = vunpack.c.h.b16 %v367
    %v1642 = vunpack.c.l.b16 %v368
    %v1643 = vunpack.c.h.b16 %v368
    %v1644 = vunpack.c.l.b16 %v369
    %v1645 = vunpack.c.h.b16 %v369
    %v1646 = vunpack.c.l.b16 %v370
    %v1647 = vunpack.c.h.b16 %v370
    %v1648 = vunpack.c.l.b16 %v371
    %v1649 = vunpack.c.h.b16 %v371
    %v1650 = vunpack.c.l.b16 %v372
    %v1651 = vunpack.c.h.b16 %v372
    %v1652 = vunpack.c.l.b16 %v373
    %v1653 = vunpack.c.h.b16 %v373
    %v1654 = vunpack.c.l.b16 %v374
    %v1655 = vunpack.c.h.b16 %v374
    %v1656 = vunpack.c.l.b16 %v375
    %v1657 = vunpack.c.h.b16 %v375
    %v1658 = vunpack.c.l.b16 %v376
    %v1659 = vunpack.c.h.b16 %v376
    %v1660 = vunpack.c.l.b16 %v377
    %v1661 = vunpack.c.h.b16 %v377
    %v1662 = vunpack.c.l.b16 %v378
    %v1663 = vunpack.c.h.b16 %v378
    %v1664 = vunpack.c.l.b16 %v379
    %v1665 = vunpack.c.h.b16 %v379
    %v1666 = vunpack.c.l.b16 %v380
    %v1667 = vunpack.c.h.b16 %v380
    %v1668 = vunpack.c.l.b16 %v381
    %v1669 = vunpack.c.h.b16 %v381
    %v1670 = vunpack.c.l.b16 %v382
    %v1671 = vunpack.c.h.b16 %v382
    %v1672 = vunpack.c.l.b16 %v383
    %v1673 = vunpack.c.h.b16 %v383
    %v1674 = vunpack.c.l.b16 %v384
    %v1675 = vunpack.c.h.b16 %v384
    %v1676 = vunpack.c.l.b16 %v385
    %v1677 = vunpack.c.h.b16 %v385
    %v1678 = vunpack.c.l.b16 %v386
    %v1679 = vunpack.c.h.b16 %v386
    %v1680 = vunpack.c.l.b16 %v387
    %v1681 = vunpack.c.h.b16 %v387
    %v1682 = vunpack.c.l.b16 %v388
    %v1683 = vunpack.c.h.b16 %v388
    %v1684 = vunpack.c.l.b16 %v389
    %v1685 = vunpack.c.h.b16 %v389
    %v1686 = vunpack.c.l.b16 %v390
    %v1687 = vunpack.c.h.b16 %v390
    %v1688 = vunpack.c.l.b16 %v391
    %v1689 = vunpack.c.h.b16 %v391
    %v1690 = vunpack.c.l.b16 %v392
    %v1691 = vunpack.c.h.b16 %v392
    %v1692 = vunpack.c.l.b16 %v393
    %v1693 = vunpack.c.h.b16 %v393
    %v1694 = vunpack.c.l.b16 %v394
    %v1695 = vunpack.c.h.b16 %v394
    %v1696 = vunpack.c.l.b16 %v395
    %v1697 = vunpack.c.h.b16 %v395
    %v1698 = vunpack.c.l.b16 %v396
    %v1699 = vunpack.c.h.b16 %v396
    %v1700 = vunpack.c.l.b16 %v397
    %v1701 = vunpack.c.h.b16 %v397
    %v1702 = vunpack.c.l.b16 %v398
    %v1703 = vunpack.c.h.b16 %v398
    %v1704 = vunpack.c.l.b16 %v399
    %v1705 = vunpack.c.h.b16 %v399
    %v1706 = vunpack.c.l.b16 %v400
    %v1707 = vunpack.c.h.b16 %v400
    %v1708 = vunpack.c.l.b16 %v401
    %v1709 = vunpack.c.h.b16 %v401
    %v1710 = vunpack.c.l.b16 %v402
    %v1711 = vunpack.c.h.b16 %v402
    %v1712 = vunpack.c.l.b16 %v403
    %v1713 = vunpack.c.h.b16 %v403
    %v1714 = vunpack.c.l.b16 %v404
    %v1715 = vunpack.c.h.b16 %v404
    %v1716 = vunpack.c.l.b16 %v405
    %v1717 = vunpack.c.h.b16 %v405
    %v1718 = vunpack.c.l.b16 %v406
    %v1719 = vunpack.c.h.b16 %v406
    %v1720 = vunpack.c.l.b16 %v407
    %v1721 = vunpack.c.h.b16 %v407
    %v1722 = vunpack.c.l.b16 %v408
    %v1723 = vunpack.c.h.b16 %v408
    %v1724 = vunpack.c.l.b16 %v409
    %v1725 = vunpack.c.h.b16 %v409
    %v1726 = vunpack.c.l.b16 %v410
    %v1727 = vunpack.c.h.b16 %v410
    %v1728 = vunpack.c.l.b16 %v411
    %v1729 = vunpack.c.h.b16 %v411
    %v1730 = vunpack.c.l.b16 %v412
    %v1731 = vunpack.c.h.b16 %v412
    %v1732 = vunpack.c.l.b16 %v413
    %v1733 = vunpack.c.h.b16 %v413
    %v1734 = vunpack.c.l.b16 %v414
    %v1735 = vunpack.c.h.b16 %v414
    %v1736 = vunpack.c.l.b16 %v415
    %v1737 = vunpack.c.h.b16 %v415
    %v1738 = vunpack.c.l.b16 %v416
    %v1739 = vunpack.c.h.b16 %v416
    %v1740 = vunpack.c.l.b16 %v417
    %v1741 = vunpack.c.h.b16 %v417
    %v1742 = vunpack.c.l.b16 %v418
    %v1743 = vunpack.c.h.b16 %v418
    %v1744 = vunpack.c.l.b16 %v419
    %v1745 = vunpack.c.h.b16 %v419
    %v1746 = vunpack.c.l.b16 %v420
    %v1747 = vunpack.c.h.b16 %v420
    %v1748 = vunpack.c.l.b16 %v421
    %v1749 = vunpack.c.h.b16 %v421
    %v1750 = vunpack.c.l.b16 %v422
    %v1751 = vunpack.c.h.b16 %v422
    %v1752 = vunpack.c.l.b16 %v423
    %v1753 = vunpack.c.h.b16 %v423
    %v1754 = vunpack.c.l.b16 %v424
    %v1755 = vunpack.c.h.b16 %v424
    %v1756 = vunpack.c.l.b16 %v425
    %v1757 = vunpack.c.h.b16 %v425
    %v1758 = vunpack.c.l.b16 %v426
    %v1759 = vunpack.c.h.b16 %v426
    %v1760 = vunpack.c.l.b16 %v427
    %v1761 = vunpack.c.h.b16 %v427
    %v1762 = vunpack.c.l.b16 %v428
    %v1763 = vunpack.c.h.b16 %v428
    %v1764 = vunpack.c.l.b16 %v429
    %v1765 = vunpack.c.h.b16 %v429
    %v1766 = vunpack.c.l.b16 %v430
    %v1767 = vunpack.c.h.b16 %v430
    %v1768 = vunpack.c.l.b16 %v431
    %v1769 = vunpack.c.h.b16 %v431
    %v1770 = vunpack.c.l.b16 %v432
    %v1771 = vunpack.c.h.b16 %v432
    %v1772 = vunpack.c.l.b16 %v433
    %v1773 = vunpack.c.h.b16 %v433
    %v1774 = vunpack.c.l.b16 %v434
    %v1775 = vunpack.c.h.b16 %v434
    %v1776 = vunpack.c.l.b16 %v435
    %v1777 = vunpack.c.h.b16 %v435
    %v1778 = vunpack.c.l.b16 %v436
    %v1779 = vunpack.c.h.b16 %v436
    %v1780 = vunpack.c.l.b16 %v437
    %v1781 = vunpack.c.h.b16 %v437
    %v1782 = vunpack.c.l.b16 %v438
    %v1783 = vunpack.c.h.b16 %v438
    %v1784 = vunpack.c.l.b16 %v439
    %v1785 = vunpack.c.h.b16 %v439
    %v1786 = vunpack.c.l.b16 %v440
    %v1787 = vunpack.c.h.b16 %v440
    %v1788 = vunpack.c.l.b16 %v441
    %v1789 = vunpack.c.h.b16 %v441
    %v1790 = vunpack.c.l.b16 %v442
    %v1791 = vunpack.c.h.b16 %v442
    %v1792 = vunpack.c.l.b16 %v443
    %v1793 = vunpack.c.h.b16 %v443
    %v1794 = vunpack.c.l.b16 %v444
    %v1795 = vunpack.c.h.b16 %v444
    %v1796 = vunpack.c.l.b16 %v445
    %v1797 = vunpack.c.h.b16 %v445
    %v1798 = vunpack.c.l.b16 %v446
    %v1799 = vunpack.c.h.b16 %v446
    %v1800 = vunpack.c.l.b16 %v447
    %v1801 = vunpack.c.h.b16 %v447
    %v1802 = vunpack.c.l.b16 %v448
    %v1803 = vunpack.c.h.b16 %v448
    %v1804 = vunpack.c.l.b16 %v449
    %v1805 = vunpack.c.h.b16 %v449
    %v1806 = vunpack.c.l.b16 %v450
    %v1807 = vunpack.c.h.b16 %v450
    %v1808 = vunpack.c.l.b16 %v451
    %v1809 = vunpack.c.h.b16 %v451
    %v1810 = vunpack.c.l.b16 %v452
    %v1811 = vunpack.c.h.b16 %v452
    %v1812 = vunpack.c.l.b16 %v453
    %v1813 = vunpack.c.h.b16 %v453
    %v1814 = vunpack.c.l.b16 %v454
    %v1815 = vunpack.c.h.b16 %v454
    %v1816 = vunpack.c.l.b16 %v455
    %v1817 = vunpack.c.h.b16 %v455
    %v1818 = vunpack.c.l.b16 %v456
    %v1819 = vunpack.c.h.b16 %v456
    %v1820 = vunpack.c.l.b16 %v457
    %v1821 = vunpack.c.h.b16 %v457
    %v1822 = vunpack.c.l.b16 %v458
    %v1823 = vunpack.c.h.b16 %v458
    %v1824 = vunpack.c.l.b16 %v459
    %v1825 = vunpack.c.h.b16 %v459
    %v1826 = vunpack.c.l.b16 %v460
    %v1827 = vunpack.c.h.b16 %v460
    %v1828 = vunpack.c.l.b16 %v461
    %v1829 = vunpack.c.h.b16 %v461
    %v1830 = vunpack.c.l.b16 %v462
    %v1831 = vunpack.c.h.b16 %v462
    %v1832 = vunpack.c.l.b16 %v463
    %v1833 = vunpack.c.h.b16 %v463
    %v1834 = vunpack.c.l.b16 %v464
    %v1835 = vunpack.c.h.b16 %v464
    %v1836 = vunpack.c.l.b16 %v465
    %v1837 = vunpack.c.h.b16 %v465
    %v1838 = vunpack.c.l.b16 %v466
    %v1839 = vunpack.c.h.b16 %v466
    %v1840 = vunpack.c.l.b16 %v467
    %v1841 = vunpack.c.h.b16 %v467
    %v1842 = vunpack.c.l.b16 %v468
    %v1843 = vunpack.c.h.b16 %v468
    %v1844 = vunpack.c.l.b16 %v469
    %v1845 = vunpack.c.h.b16 %v469
    %v1846 = vunpack.c.l.b16 %v470
    %v1847 = vunpack.c.h.b16 %v470
    %v1848 = vunpack.c.l.b16 %v471
    %v1849 = vunpack.c.h.b16 %v471
    %v1850 = vunpack.c.l.b16 %v472
    %v1851 = vunpack.c.h.b16 %v472
    %v1852 = vunpack.c.l.b16 %v473
    %v1853 = vunpack.c.h.b16 %v473
    %v1854 = vunpack.c.l.b16 %v474
    %v1855 = vunpack.c.h.b16 %v474
    %v1856 = vunpack.c.l.b16 %v475
    %v1857 = vunpack.c.h.b16 %v475
    %v1858 = vunpack.c.l.b16 %v476
    %v1859 = vunpack.c.h.b16 %v476
    %v1860 = vunpack.c.l.b16 %v477
    %v1861 = vunpack.c.h.b16 %v477
    %v1862 = vunpack.c.l.b16 %v478
    %v1863 = vunpack.c.h.b16 %v478
    %v1864 = vunpack.c.l.b16 %v479
    %v1865 = vunpack.c.h.b16 %v479
    %v1866 = vunpack.c.l.b16 %v480
    %v1867 = vunpack.c.h.b16 %v480
    %v1868 = vunpack.c.l.b16 %v481
    %v1869 = vunpack.c.h.b16 %v481
    %v1870 = vunpack.c.l.b16 %v482
    %v1871 = vunpack.c.h.b16 %v482
    %v1872 = vunpack.c.l.b16 %v483
    %v1873 = vunpack.c.h.b16 %v483
    %v1874 = vunpack.c.l.b16 %v484
    %v1875 = vunpack.c.h.b16 %v484
    %v1876 = vunpack.c.l.b16 %v485
    %v1877 = vunpack.c.h.b16 %v485
    %v1878 = vunpack.c.l.b16 %v486
    %v1879 = vunpack.c.h.b16 %v486
    %v1880 = vunpack.c.l.b16 %v487
    %v1881 = vunpack.c.h.b16 %v487
    %v1882 = vunpack.c.l.b16 %v488
    %v1883 = vunpack.c.h.b16 %v488
    %v1884 = vunpack.c.l.b16 %v489
    %v1885 = vunpack.c.h.b16 %v489
    %v1886 = vunpack.c.l.b16 %v490
    %v1887 = vunpack.c.h.b16 %v490
    %v1888 = vunpack.c.l.b16 %v491
    %v1889 = vunpack.c.h.b16 %v491
    %v1890 = vunpack.c.l.b16 %v492
    %v1891 = vunpack.c.h.b16 %v492
    %v1892 = vunpack.c.l.b16 %v493
    %v1893 = vunpack.c.h.b16 %v493
    %v1894 = vunpack.c.l.b16 %v494
    %v1895 = vunpack.c.h.b16 %v494
    %v1896 = vunpack.c.l.b16 %v495
    %v1897 = vunpack.c.h.b16 %v495
    %v1898 = vunpack.c.l.b16 %v496
    %v1899 = vunpack.c.h.b16 %v496
    %v1900 = vunpack.c.l.b16 %v497
    %v1901 = vunpack.c.h.b16 %v497
    %v1902 = vunpack.c.l.b16 %v498
    %v1903 = vunpack.c.h.b16 %v498
    %v1904 = vunpack.c.l.b16 %v499
    %v1905 = vunpack.c.h.b16 %v499
    %v1906 = vunpack.c.l.b16 %v500
    %v1907 = vunpack.c.h.b16 %v500
    %v1908 = vunpack.c.l.b16 %v501
    %v1909 = vunpack.c.h.b16 %v501
    %v1910 = vunpack.c.l.b16 %v502
    %v1911 = vunpack.c.h.b16 %v502
    %v1912 = vunpack.c.l.b16 %v503
    %v1913 = vunpack.c.h.b16 %v503
    %v1914 = vunpack.c.l.b16 %v504
    %v1915 = vunpack.c.h.b16 %v504
    %v1916 = vunpack.c.l.b16 %v505
    %v1917 = vunpack.c.h.b16 %v505
    %v1918 = vunpack.c.l.b16 %v506
    %v1919 = vunpack.c.h.b16 %v506
    %v1920 = vunpack.c.l.b16 %v507
    %v1921 = vunpack.c.h.b16 %v507
    %v1922 = vunpack.c.l.b16 %v508
    %v1923 = vunpack.c.h.b16 %v508
    %v1924 = vunpack.c.l.b16 %v509
    %v1925 = vunpack.c.h.b16 %v509
    %v1926 = vunpack.c.l.b16 %v510
    %v1927 = vunpack.c.h.b16 %v510
    %v1928 = vunpack.c.l.b16 %v511
    %v1929 = vunpack.c.h.b16 %v511
    %v1930 = vunpack.c.l.b16 %v512
    %v1931 = vunpack.c.h.b16 %v512
    %v1932 = vunpack.c.l.b16 %v513
    %v1933 = vunpack.c.h.b16 %v513
    %v1934 = vunpack.c.l.b16 %v514
    %v1935 = vunpack.c.h.b16 %v514
    %v1936 = vunpack.c.l.b16 %v515
    %v1937 = vunpack.c.h.b16 %v515
    %v1938 = vunpack.c.l.b16 %v516
    %v1939 = vunpack.c.h.b16 %v516
    %v1940 = vunpack.c.l.b16 %v517
    %v1941 = vunpack.c.h.b16 %v517
    %v1942 = vunpack.c.l.b16 %v518
    %v1943 = vunpack.c.h.b16 %v518
    %v1944 = vunpack.c.l.b16 %v519
    %v1945 = vunpack.c.h.b16 %v519
    %v1946 = vunpack.c.l.b16 %v520
    %v1947 = vunpack.c.h.b16 %v520
    %v1948 = vunpack.c.l.b16 %v521
    %v1949 = vunpack.c.h.b16 %v521
    %v1950 = vunpack.c.l.b16 %v522
    %v1951 = vunpack.c.h.b16 %v522
    %v1952 = vunpack.c.l.b16 %v523
    %v1953 = vunpack.c.h.b16 %v523
    %v1954 = vunpack.c.l.b16 %v524
    %v1955 = vunpack.c.h.b16 %v524
    %v1956 = vunpack.c.l.b16 %v525
    %v1957 = vunpack.c.h.b16 %v525
    %v1958 = vunpack.c.l.b16 %v526
    %v1959 = vunpack.c.h.b16 %v526
    %v1960 = vunpack.c.l.b16 %v527
    %v1961 = vunpack.c.h.b16 %v527
    %v1962 = vunpack.c.l.b16 %v528
    %v1963 = vunpack.c.h.b16 %v528
    %v1964 = vunpack.c.l.b16 %v529
    %v1965 = vunpack.c.h.b16 %v529
    %v1966 = vunpack.c.l.b16 %v530
    %v1967 = vunpack.c.h.b16 %v530
    %v1968 = vunpack.c.l.b16 %v531
    %v1969 = vunpack.c.h.b16 %v531
    %v1970 = vunpack.c.l.b16 %v532
    %v1971 = vunpack.c.h.b16 %v532
    %v1972 = vunpack.c.l.b16 %v533
    %v1973 = vunpack.c.h.b16 %v533
    %v1974 = vunpack.c.l.b16 %v534
    %v1975 = vunpack.c.h.b16 %v534
    %v1976 = vunpack.c.l.b16 %v535
    %v1977 = vunpack.c.h.b16 %v535
    %v1978 = vunpack.c.l.b16 %v536
    %v1979 = vunpack.c.h.b16 %v536
    %v1980 = vunpack.c.l.b16 %v537
    %v1981 = vunpack.c.h.b16 %v537
    %v1982 = vunpack.c.l.b16 %v538
    %v1983 = vunpack.c.h.b16 %v538
    %v1984 = vunpack.c.l.b16 %v539
    %v1985 = vunpack.c.h.b16 %v539
    %v1986 = vunpack.c.l.b16 %v540
    %v1987 = vunpack.c.h.b16 %v540
    %v1988 = vunpack.c.l.b16 %v541
    %v1989 = vunpack.c.h.b16 %v541
    %v1990 = vunpack.c.l.b16 %v542
    %v1991 = vunpack.c.h.b16 %v542
    %v1992 = vunpack.c.l.b16 %v543
    %v1993 = vunpack.c.h.b16 %v543
    %v1994 = vunpack.c.l.b16 %v544
    %v1995 = vunpack.c.h.b16 %v544
    %v1996 = vunpack.c.l.b16 %v545
    %v1997 = vunpack.c.h.b16 %v545
    %v1998 = vunpack.c.l.b16 %v546
    %v1999 = vunpack.c.h.b16 %v546
    %v2000 = vunpack.c.l.b16 %v547
    %v2001 = vunpack.c.h.b16 %v547
    %v2002 = vunpack.c.l.b16 %v548
    %v2003 = vunpack.c.h.b16 %v548
    %v2004 = vunpack.c.l.b16 %v549
    %v2005 = vunpack.c.h.b16 %v549
    %v2006 = vunpack.c.l.b16 %v550
    %v2007 = vunpack.c.h.b16 %v550
    %v2008 = vunpack.c.l.b16 %v551
    %v2009 = vunpack.c.h.b16 %v551
    %v2010 = vunpack.c.l.b16 %v552
    %v2011 = vunpack.c.h.b16 %v552
    %v2012 = vunpack.c.l.b16 %v553
    %v2013 = vunpack.c.h.b16 %v553
    %v2014 = vunpack.c.l.b16 %v554
    %v2015 = vunpack.c.h.b16 %v554
    %v2016 = vunpack.c.l.b16 %v555
    %v2017 = vunpack.c.h.b16 %v555
    %v2018 = vunpack.c.l.b16 %v556
    %v2019 = vunpack.c.h.b16 %v556
    %v2020 = vunpack.c.l.b16 %v557
    %v2021 = vunpack.c.h.b16 %v557
    %v2022 = vunpack.c.l.b16 %v558
    %v2023 = vunpack.c.h.b16 %v558
    %v2024 = vunpack.c.l.b16 %v559
    %v2025 = vunpack.c.h.b16 %v559
    %v2026 = vunpack.c.l.b16 %v560
    %v2027 = vunpack.c.h.b16 %v560
    %v2028 = vunpack.c.l.b16 %v561
    %v2029 = vunpack.c.h.b16 %v561
    %v2030 = vunpack.c.l.b16 %v562
    %v2031 = vunpack.c.h.b16 %v562
    %v2032 = vunpack.c.l.b16 %v563
    %v2033 = vunpack.c.h.b16 %v563
    %v2034 = vunpack.c.l.b16 %v564
    %v2035 = vunpack.c.h.b16 %v564
    %v2036 = vunpack.c.l.b16 %v565
    %v2037 = vunpack.c.h.b16 %v565
    %v2038 = vunpack.c.l.b16 %v566
    %v2039 = vunpack.c.h.b16 %v566
    %v2040 = vunpack.c.l.b16 %v567
    %v2041 = vunpack.c.h.b16 %v567
    %v2042 = vunpack.c.l.b16 %v568
    %v2043 = vunpack.c.h.b16 %v568
    %v2044 = vunpack.c.l.b16 %v569
    %v2045 = vunpack.c.h.b16 %v569
    %v2046 = vunpack.c.l.b16 %v570
    %v2047 = vunpack.c.h.b16 %v570
    %v2048 = vunpack.c.l.b16 %v571
    %v2049 = vunpack.c.h.b16 %v571
    %v2050 = vunpack.c.l.b16 %v572
    %v2051 = vunpack.c.h.b16 %v572
    %v2052 = vunpack.c.l.b16 %v573
    %v2053 = vunpack.c.h.b16 %v573
    %v2054 = vunpack.c.l.b16 %v574
    %v2055 = vunpack.c.h.b16 %v574
    %v2056 = vunpack.c.l.b16 %v575
    %v2057 = vunpack.c.h.b16 %v575
    %v2058 = vunpack.c.l.b16 %v576
    %v2059 = vunpack.c.h.b16 %v576
    %v2060 = vunpack.c.l.b16 %v577
    %v2061 = vunpack.c.h.b16 %v577
    %v2062 = vunpack.c.l.b16 %v578
    %v2063 = vunpack.c.h.b16 %v578
    %v2064 = vunpack.c.l.b16 %v579
    %v2065 = vunpack.c.h.b16 %v579
    %v2066 = vunpack.c.l.b16 %v580
    %v2067 = vunpack.c.h.b16 %v580
    %v2068 = vunpack.c.l.b16 %v581
    %v2069 = vunpack.c.h.b16 %v581
    %v2070 = vunpack.c.l.b16 %v582
    %v2071 = vunpack.c.h.b16 %v582
    %v2072 = vunpack.c.l.b16 %v583
    %v2073 = vunpack.c.h.b16 %v583
    %v2074 = vunpack.c.l.b16 %v584
    %v2075 = vunpack.c.h.b16 %v584
    %v2076 = vunpack.c.l.b16 %v585
    %v2077 = vunpack.c.h.b16 %v585
    %v2078 = vunpack.c.l.b16 %v586
    %v2079 = vunpack.c.h.b16 %v586
    %v2080 = vunpack.c.l.b16 %v587
    %v2081 = vunpack.c.h.b16 %v587
    %v2082 = vunpack.c.l.b16 %v588
    %v2083 = vunpack.c.h.b16 %v588
    %v2084 = vunpack.c.l.b16 %v589
    %v2085 = vunpack.c.h.b16 %v589
    %v2086 = vunpack.c.l.b16 %v590
    %v2087 = vunpack.c.h.b16 %v590
    %v2088 = vunpack.c.l.b16 %v591
    %v2089 = vunpack.c.h.b16 %v591
    %v2090 = vunpack.c.l.b16 %v592
    %v2091 = vunpack.c.h.b16 %v592
    %v2092 = vunpack.c.l.b16 %v593
    %v2093 = vunpack.c.h.b16 %v593
    %v2094 = vunpack.c.l.b16 %v594
    %v2095 = vunpack.c.h.b16 %v594
    %v2096 = vunpack.c.l.b16 %v595
    %v2097 = vunpack.c.h.b16 %v595
    %v2098 = vunpack.c.l.b16 %v596
    %v2099 = vunpack.c.h.b16 %v596
    %v2100 = vunpack.c.l.b16 %v597
    %v2101 = vunpack.c.h.b16 %v597
    %v2102 = vunpack.c.l.b16 %v598
    %v2103 = vunpack.c.h.b16 %v598
    %v2104 = vunpack.c.l.b16 %v599
    %v2105 = vunpack.c.h.b16 %v599
    %v2106 = vunpack.c.l.b16 %v600
    %v2107 = vunpack.c.h.b16 %v600
    %v2108 = vunpack.c.l.b16 %v601
    %v2109 = vunpack.c.h.b16 %v601
    %v2110 = vunpack.c.l.b16 %v602
    %v2111 = vunpack.c.h.b16 %v602
    %v2112 = vunpack.c.l.b16 %v603
    %v2113 = vunpack.c.h.b16 %v603
    %v2114 = vunpack.c.l.b16 %v604
    %v2115 = vunpack.c.h.b16 %v604
    %v2116 = vunpack.c.l.b16 %v605
    %v2117 = vunpack.c.h.b16 %v605
    %v2118 = vunpack.c.l.b16 %v606
    %v2119 = vunpack.c.h.b16 %v606
    %v2120 = vunpack.c.l.b16 %v607
    %v2121 = vunpack.c.h.b16 %v607
    %v2122 = vunpack.c.l.b16 %v608
    %v2123 = vunpack.c.h.b16 %v608
    %v2124 = vunpack.c.l.b16 %v609
    %v2125 = vunpack.c.h.b16 %v609
    %v2126 = vunpack.c.l.b16 %v610
    %v2127 = vunpack.c.h.b16 %v610
    %v2128 = vunpack.c.l.b16 %v611
    %v2129 = vunpack.c.h.b16 %v611
    %v2130 = vunpack.c.l.b16 %v612
    %v2131 = vunpack.c.h.b16 %v612
    %v2132 = vunpack.c.l.b16 %v613
    %v2133 = vunpack.c.h.b16 %v613
    %v2134 = vunpack.c.l.b16 %v614
    %v2135 = vunpack.c.h.b16 %v614
    %v2136 = vunpack.c.l.b16 %v615
    %v2137 = vunpack.c.h.b16 %v615
    %v2138 = vunpack.c.l.b16 %v616
    %v2139 = vunpack.c.h.b16 %v616
    %v2140 = vunpack.c.l.b16 %v617
    %v2141 = vunpack.c.h.b16 %v617
    %v2142 = vunpack.c.l.b16 %v618
    %v2143 = vunpack.c.h.b16 %v618
    %v2144 = vunpack.c.l.b16 %v619
    %v2145 = vunpack.c.h.b16 %v619
    %v2146 = vunpack.c.l.b16 %v620
    %v2147 = vunpack.c.h.b16 %v620
    %v2148 = vunpack.c.l.b16 %v621
    %v2149 = vunpack.c.h.b16 %v621
    %v2150 = vunpack.c.l.b16 %v622
    %v2151 = vunpack.c.h.b16 %v622
    %v2152 = vunpack.c.l.b16 %v623
    %v2153 = vunpack.c.h.b16 %v623
    %v2154 = vunpack.c.l.b16 %v624
    %v2155 = vunpack.c.h.b16 %v624
    %v2156 = vunpack.c.l.b16 %v625
    %v2157 = vunpack.c.h.b16 %v625
    %v2158 = vunpack.c.l.b16 %v626
    %v2159 = vunpack.c.h.b16 %v626
    %v2160 = vunpack.c.l.b16 %v627
    %v2161 = vunpack.c.h.b16 %v627
    %v2162 = vunpack.c.l.b16 %v628
    %v2163 = vunpack.c.h.b16 %v628
    %v2164 = vunpack.c.l.b16 %v629
    %v2165 = vunpack.c.h.b16 %v629
    %v2166 = vunpack.c.l.b16 %v630
    %v2167 = vunpack.c.h.b16 %v630
    %v2168 = vunpack.c.l.b16 %v631
    %v2169 = vunpack.c.h.b16 %v631
    %v2170 = vunpack.c.l.b16 %v632
    %v2171 = vunpack.c.h.b16 %v632
    %v2172 = vunpack.c.l.b16 %v633
    %v2173 = vunpack.c.h.b16 %v633
    %v2174 = vunpack.c.l.b16 %v634
    %v2175 = vunpack.c.h.b16 %v634
    %v2176 = vunpack.c.l.b16 %v635
    %v2177 = vunpack.c.h.b16 %v635
    %v2178 = vunpack.c.l.b16 %v636
    %v2179 = vunpack.c.h.b16 %v636
    %v2180 = vunpack.c.l.b16 %v637
    %v2181 = vunpack.c.h.b16 %v637
    %v2182 = vunpack.c.l.b16 %v638
    %v2183 = vunpack.c.h.b16 %v638
    %v2184 = vpack.c.b16 %v1164, %v1160
    %v2185 = vpack.c.b16 %v1165, %v1161
    %v2186 = vpack.c.b16 %v1166, %v1162
    %v2187 = vpack.c.b16 %v1167, %v1163
    %v2188 = vpack.c.b16 %v1172, %v1168
    %v2189 = vpack.c.b16 %v1173, %v1169
    %v2190 = vpack.c.b16 %v1174, %v1170
    %v2191 = vpack.c.b16 %v1175, %v1171
    %v2192 = vpack.c.b16 %v1180, %v1176
    %v2193 = vpack.c.b16 %v1181, %v1177
    %v2194 = vpack.c.b16 %v1182, %v1178
    %v2195 = vpack.c.b16 %v1183, %v1179
    %v2196 = vpack.c.b16 %v1188, %v1184
    %v2197 = vpack.c.b16 %v1189, %v1185
    %v2198 = vpack.c.b16 %v1190, %v1186
    %v2199 = vpack.c.b16 %v1191, %v1187
    %v2200 = vpack.c.b16 %v1196, %v1192
    %v2201 = vpack.c.b16 %v1197, %v1193
    %v2202 = vpack.c.b16 %v1198, %v1194
    %v2203 = vpack.c.b16 %v1199, %v1195
    %v2204 = vpack.c.b16 %v1204, %v1200
    %v2205 = vpack.c.b16 %v1205, %v1201
    %v2206 = vpack.c.b16 %v1206, %v1202
    %v2207 = vpack.c.b16 %v1207, %v1203
    %v2208 = vpack.c.b16 %v1212, %v1208
    %v2209 = vpack.c.b16 %v1213, %v1209
    %v2210 = vpack.c.b16 %v1214, %v1210
    %v2211 = vpack.c.b16 %v1215, %v1211
    %v2212 = vpack.c.b16 %v1220, %v1216
    %v2213 = vpack.c.b16 %v1221, %v1217
    %v2214 = vpack.c.b16 %v1222, %v1218
    %v2215 = vpack.c.b16 %v1223, %v1219
    %v2216 = vpack.c.b16 %v1228, %v1224
    %v2217 = vpack.c.b16 %v1229, %v1225
    %v2218 = vpack.c.b16 %v1230, %v1226
    %v2219 = vpack.c.b16 %v1231, %v1227
    %v2220 = vpack.c.b16 %v1236, %v1232
    %v2221 = vpack.c.b16 %v1237, %v1233
    %v2222 = vpack.c.b16 %v1238, %v1234
    %v2223 = vpack.c.b16 %v1239, %v1235
    %v2224 = vpack.c.b16 %v1244, %v1240
    %v2225 = vpack.c.b16 %v1245, %v1241
    %v2226 = vpack.c.b16 %v1246, %v1242
    %v2227 = vpack.c.b16 %v1247, %v1243
    %v2228 = vpack.c.b16 %v1252, %v1248
    %v2229 = vpack.c.b16 %v1253, %v1249
    %v2230 = vpack.c.b16 %v1254, %v1250
    %v2231 = vpack.c.b16 %v1255, %v1251
    %v2232 = vpack.c.b16 %v1260, %v1256
    %v2233 = vpack.c.b16 %v1261, %v1257
    %v2234 = vpack.c.b16 %v1262, %v1258
    %v2235 = vpack.c.b16 %v1263, %v1259
    %v2236 = vpack.c.b16 %v1268, %v1264
    %v2237 = vpack.c.b16 %v1269, %v1265
    %v2238 = vpack.c.b16 %v1270, %v1266
    %v2239 = vpack.c.b16 %v1271, %v1267
    %v2240 = vpack.c.b16 %v1276, %v1272
    %v2241 = vpack.c.b16 %v1277, %v1273
    %v2242 = vpack.c.b16 %v1278, %v1274
    %v2243 = vpack.c.b16 %v1279, %v1275
    %v2244 = vpack.c.b16 %v1284, %v1280
    %v2245 = vpack.c.b16 %v1285, %v1281
    %v2246 = vpack.c.b16 %v1286, %v1282
    %v2247 = vpack.c.b16 %v1287, %v1283
    %v2248 = vpack.c.b16 %v1292, %v1288
    %v2249 = vpack.c.b16 %v1293, %v1289
    %v2250 = vpack.c.b16 %v1294, %v1290
    %v2251 = vpack.c.b16 %v1295, %v1291
    %v2252 = vpack.c.b16 %v1300, %v1296
    %v2253 = vpack.c.b16 %v1301, %v1297
    %v2254 = vpack.c.b16 %v1302, %v1298
    %v2255 = vpack.c.b16 %v1303, %v1299
    %v2256 = vpack.c.b16 %v1308, %v1304
    %v2257 = vpack.c.b16 %v1309, %v1305
    %v2258 = vpack.c.b16 %v1310, %v1306
    %v2259 = vpack.c.b16 %v1311, %v1307
    %v2260 = vpack.c.b16 %v1316, %v1312
    %v2261 = vpack.c.b16 %v1317, %v1313
    %v2262 = vpack.c.b16 %v1318, %v1314
    %v2263 = vpack.c.b16 %v1319, %v1315
    %v2264 = vpack.c.b16 %v1324, %v1320
    %v2265 = vpack.c.b16 %v1325, %v1321
    %v2266 = vpack.c.b16 %v1326, %v1322
    %v2267 = vpack.c.b16 %v1327, %v1323
    %v2268 = vpack.c.b16 %v1332, %v1328
    %v2269 = vpack.c.b16 %v1333, %v1329
    %v2270 = vpack.c.b16 %v1334, %v1330
    %v2271 = vpack.c.b16 %v1335, %v1331
    %v2272 = vpack.c.b16 %v1340, %v1336
    %v2273 = vpack.c.b16 %v1341, %v1337
    %v2274 = vpack.c.b16 %v1342, %v1338
    %v2275 = vpack.c.b16 %v1343, %v1339
    %v2276 = vpack.c.b16 %v1348, %v1344
    %v2277 = vpack.c.b16 %v1349, %v1345
    %v2278 = vpack.c.b16 %v1350, %v1346
    %v2279 = vpack.c.b16 %v1351, %v1347
    %v2280 = vpack.c.b16 %v1356, %v1352
    %v2281 = vpack.c.b16 %v1357, %v1353
    %v2282 = vpack.c.b16 %v1358, %v1354
    %v2283 = vpack.c.b16 %v1359, %v1355
    %v2284 = vpack.c.b16 %v1364, %v1360
    %v2285 = vpack.c.b16 %v1365, %v1361
    %v2286 = vpack.c.b16 %v1366, %v1362
    %v2287 = vpack.c.b16 %v1367, %v1363
    %v2288 = vpack.c.b16 %v1372, %v1368
    %v2289 = vpack.c.b16 %v1373, %v1369
    %v2290 = vpack.c.b16 %v1374, %v1370
    %v2291 = vpack.c.b16 %v1375, %v1371
    %v2292 = vpack.c.b16 %v1380, %v1376
    %v2293 = vpack.c.b16 %v1381, %v1377
    %v2294 = vpack.c.b16 %v1382, %v1378
    %v2295 = vpack.c.b16 %v1383, %v1379
    %v2296 = vpack.c.b16 %v1388, %v1384
    %v2297 = vpack.c.b16 %v1389, %v1385
    %v2298 = vpack.c.b16 %v1390, %v1386
    %v2299 = vpack.c.b16 %v1391, %v1387
    %v2300 = vpack.c.b16 %v1396, %v1392
    %v2301 = vpack.c.b16 %v1397, %v1393
    %v2302 = vpack.c.b16 %v1398, %v1394
    %v2303 = vpack.c.b16 %v1399, %v1395
    %v2304 = vpack.c.b16 %v1404, %v1400
    %v2305 = vpack.c.b16 %v1405, %v1401
    %v2306 = vpack.c.b16 %v1406, %v1402
    %v2307 = vpack.c.b16 %v1407, %v1403
    %v2308 = vpack.c.b16 %v1412, %v1408
    %v2309 = vpack.c.b16 %v1413, %v1409
    %v2310 = vpack.c.b16 %v1414, %v1410
    %v2311 = vpack.c.b16 %v1415, %v1411
    %v2312 = vpack.c.b16 %v1420, %v1416
    %v2313 = vpack.c.b16 %v1421, %v1417
    %v2314 = vpack.c.b16 %v1422, %v1418
    %v2315 = vpack.c.b16 %v1423, %v1419
    %v2316 = vpack.c.b16 %v1428, %v1424
    %v2317 = vpack.c.b16 %v1429, %v1425
    %v2318 = vpack.c.b16 %v1430, %v1426
    %v2319 = vpack.c.b16 %v1431, %v1427
    %v2320 = vpack.c.b16 %v1436, %v1432
    %v2321 = vpack.c.b16 %v1437, %v1433
    %v2322 = vpack.c.b16 %v1438, %v1434
    %v2323 = vpack.c.b16 %v1439, %v1435
    %v2324 = vpack.c.b16 %v1444, %v1440
    %v2325 = vpack.c.b16 %v1445, %v1441
    %v2326 = vpack.c.b16 %v1446, %v1442
    %v2327 = vpack.c.b16 %v1447, %v1443
    %v2328 = vpack.c.b16 %v1452, %v1448
    %v2329 = vpack.c.b16 %v1453, %v1449
    %v2330 = vpack.c.b16 %v1454, %v1450
    %v2331 = vpack.c.b16 %v1455, %v1451
    %v2332 = vpack.c.b16 %v1460, %v1456
    %v2333 = vpack.c.b16 %v1461, %v1457
    %v2334 = vpack.c.b16 %v1462, %v1458
    %v2335 = vpack.c.b16 %v1463, %v1459
    %v2336 = vpack.c.b16 %v1468, %v1464
    %v2337 = vpack.c.b16 %v1469, %v1465
    %v2338 = vpack.c.b16 %v1470, %v1466
    %v2339 = vpack.c.b16 %v1471, %v1467
    %v2340 = vpack.c.b16 %v1476, %v1472
    %v2341 = vpack.c.b16 %v1477, %v1473
    %v2342 = vpack.c.b16 %v1478, %v1474
    %v2343 = vpack.c.b16 %v1479, %v1475
    %v2344 = vpack.c.b16 %v1484, %v1480
    %v2345 = vpack.c.b16 %v1485, %v1481
    %v2346 = vpack.c.b16 %v1486, %v1482
    %v2347 = vpack.c.b16 %v1487, %v1483
    %v2348 = vpack.c.b16 %v1492, %v1488
    %v2349 = vpack.c.b16 %v1493, %v1489
    %v2350 = vpack.c.b16 %v1494, %v1490
    %v2351 = vpack.c.b16 %v1495, %v1491
    %v2352 = vpack.c.b16 %v1500, %v1496
    %v2353 = vpack.c.b16 %v1501, %v1497
    %v2354 = vpack.c.b16 %v1502, %v1498
    %v2355 = vpack.c.b16 %v1503, %v1499
    %v2356 = vpack.c.b16 %v1508, %v1504
    %v2357 = vpack.c.b16 %v1509, %v1505
    %v2358 = vpack.c.b16 %v1510, %v1506
    %v2359 = vpack.c.b16 %v1511, %v1507
    %v2360 = vpack.c.b16 %v1516, %v1512
    %v2361 = vpack.c.b16 %v1517, %v1513
    %v2362 = vpack.c.b16 %v1518, %v1514
    %v2363 = vpack.c.b16 %v1519, %v1515
    %v2364 = vpack.c.b16 %v1524, %v1520
    %v2365 = vpack.c.b16 %v1525, %v1521
    %v2366 = vpack.c.b16 %v1526, %v1522
    %v2367 = vpack.c.b16 %v1527, %v1523
    %v2368 = vpack.c.b16 %v1532, %v1528
    %v2369 = vpack.c.b16 %v1533, %v1529
    %v2370 = vpack.c.b16 %v1534, %v1530
    %v2371 = vpack.c.b16 %v1535, %v1531
    %v2372 = vpack.c.b16 %v1540, %v1536
    %v2373 = vpack.c.b16 %v1541, %v1537
    %v2374 = vpack.c.b16 %v1542, %v1538
    %v2375 = vpack.c.b16 %v1543, %v1539
    %v2376 = vpack.c.b16 %v1548, %v1544
    %v2377 = vpack.c.b16 %v1549, %v1545
    %v2378 = vpack.c.b16 %v1550, %v1546
    %v2379 = vpack.c.b16 %v1551, %v1547
    %v2380 = vpack.c.b16 %v1556, %v1552
    %v2381 = vpack.c.b16 %v1557, %v1553
    %v2382 = vpack.c.b16 %v1558, %v1554
    %v2383 = vpack.c.b16 %v1559, %v1555
    %v2384 = vpack.c.b16 %v1564, %v1560
    %v2385 = vpack.c.b16 %v1565, %v1561
    %v2386 = vpack.c.b16 %v1566, %v1562
    %v2387 = vpack.c.b16 %v1567, %v1563
    %v2388 = vpack.c.b16 %v1572, %v1568
    %v2389 = vpack.c.b16 %v1573, %v1569
    %v2390 = vpack.c.b16 %v1574, %v1570
    %v2391 = vpack.c.b16 %v1575, %v1571
    %v2392 = vpack.c.b16 %v1580, %v1576
    %v2393 = vpack.c.b16 %v1581, %v1577
    %v2394 = vpack.c.b16 %v1582, %v1578
    %v2395 = vpack.c.b16 %v1583, %v1579
    %v2396 = vpack.c.b16 %v1588, %v1584
    %v2397 = vpack.c.b16 %v1589, %v1585
    %v2398 = vpack.c.b16 %v1590, %v1586
    %v2399 = vpack.c.b16 %v1591, %v1587
    %v2400 = vpack.c.b16 %v1596, %v1592
    %v2401 = vpack.c.b16 %v1597, %v1593
    %v2402 = vpack.c.b16 %v1598, %v1594
    %v2403 = vpack.c.b16 %v1599, %v1595
    %v2404 = vpack.c.b16 %v1604, %v1600
    %v2405 = vpack.c.b16 %v1605, %v1601
    %v2406 = vpack.c.b16 %v1606, %v1602
    %v2407 = vpack.c.b16 %v1607, %v1603
    %v2408 = vpack.c.b16 %v1612, %v1608
    %v2409 = vpack.c.b16 %v1613, %v1609
    %v2410 = vpack.c.b16 %v1614, %v1610
    %v2411 = vpack.c.b16 %v1615, %v1611
    %v2412 = vpack.c.b16 %v1620, %v1616
    %v2413 = vpack.c.b16 %v1621, %v1617
    %v2414 = vpack.c.b16 %v1622, %v1618
    %v2415 = vpack.c.b16 %v1623, %v1619
    %v2416 = vpack.c.b16 %v1628, %v1624
    %v2417 = vpack.c.b16 %v1629, %v1625
    %v2418 = vpack.c.b16 %v1630, %v1626
    %v2419 = vpack.c.b16 %v1631, %v1627
    %v2420 = vpack.c.b16 %v1636, %v1632
    %v2421 = vpack.c.b16 %v1637, %v1633
    %v2422 = vpack.c.b16 %v1638, %v1634
    %v2423 = vpack.c.b16 %v1639, %v1635
    %v2424 = vpack.c.b16 %v1644, %v1640
    %v2425 = vpack.c.b16 %v1645, %v1641
    %v2426 = vpack.c.b16 %v1646, %v1642
    %v2427 = vpack.c.b16 %v1647, %v1643
    %v2428 = vpack.c.b16 %v1652, %v1648
    %v2429 = vpack.c.b16 %v1653, %v1649
    %v2430 = vpack.c.b16 %v1654, %v1650
    %v2431 = vpack.c.b16 %v1655, %v1651
    %v2432 = vpack.c.b16 %v1660, %v1656
    %v2433 = vpack.c.b16 %v1661, %v1657
    %v2434 = vpack.c.b16 %v1662, %v1658
    %v2435 = vpack.c.b16 %v1663, %v1659
    %v2436 = vpack.c.b16 %v1668, %v1664
    %v2437 = vpack.c.b16 %v1669, %v1665
    %v2438 = vpack.c.b16 %v1670, %v1666
    %v2439 = vpack.c.b16 %v1671, %v1667
    %v2440 = vpack.c.b16 %v1676, %v1672
    %v2441 = vpack.c.b16 %v1677, %v1673
    %v2442 = vpack.c.b16 %v1678, %v1674
    %v2443 = vpack.c.b16 %v1679, %v1675
    %v2444 = vpack.c.b16 %v1684, %v1680
    %v2445 = vpack.c.b16 %v1685, %v1681
    %v2446 = vpack.c.b16 %v1686, %v1682
    %v2447 = vpack.c.b16 %v1687, %v1683
    %v2448 = vpack.c.b16 %v1692, %v1688
    %v2449 = vpack.c.b16 %v1693, %v1689
    %v2450 = vpack.c.b16 %v1694, %v1690
    %v2451 = vpack.c.b16 %v1695, %v1691
    %v2452 = vpack.c.b16 %v1700, %v1696
    %v2453 = vpack.c.b16 %v1701, %v1697
    %v2454 = vpack.c.b16 %v1702, %v1698
    %v2455 = vpack.c.b16 %v1703, %v1699
    %v2456 = vpack.c.b16 %v1708, %v1704
    %v2457 = vpack.c.b16 %v1709, %v1705
    %v2458 = vpack.c.b16 %v1710, %v1706
    %v2459 = vpack.c.b16 %v1711, %v1707
    %v2460 = vpack.c.b16 %v1716, %v1712
    %v2461 = vpack.c.b16 %v1717, %v1713
    %v2462 = vpack.c.b16 %v1718, %v1714
    %v2463 = vpack.c.b16 %v1719, %v1715
    %v2464 = vpack.c.b16 %v1724, %v1720
    %v2465 = vpack.c.b16 %v1725, %v1721
    %v2466 = vpack.c.b16 %v1726, %v1722
    %v2467 = vpack.c.b16 %v1727, %v1723
    %v2468 = vpack.c.b16 %v1732, %v1728
    %v2469 = vpack.c.b16 %v1733, %v1729
    %v2470 = vpack.c.b16 %v1734, %v1730
    %v2471 = vpack.c.b16 %v1735, %v1731
    %v2472 = vpack.c.b16 %v1740, %v1736
    %v2473 = vpack.c.b16 %v1741, %v1737
    %v2474 = vpack.c.b16 %v1742, %v1738
    %v2475 = vpack.c.b16 %v1743, %v1739
    %v2476 = vpack.c.b16 %v1748, %v1744
    %v2477 = vpack.c.b16 %v1749, %v1745
    %v2478 = vpack.c.b16 %v1750, %v1746
    %v2479 = vpack.c.b16 %v1751, %v1747
    %v2480 = vpack.c.b16 %v1756, %v1752
    %v2481 = vpack.c.b16 %v1757, %v1753
    %v2482 = vpack.c.b16 %v1758, %v1754
    %v2483 = vpack.c.b16 %v1759, %v1755
    %v2484 = vpack.c.b16 %v1764, %v1760
    %v2485 = vpack.c.b16 %v1765, %v1761
    %v2486 = vpack.c.b16 %v1766, %v1762
    %v2487 = vpack.c.b16 %v1767, %v1763
    %v2488 = vpack.c.b16 %v1772, %v1768
    %v2489 = vpack.c.b16 %v1773, %v1769
    %v2490 = vpack.c.b16 %v1774, %v1770
    %v2491 = vpack.c.b16 %v1775, %v1771
    %v2492 = vpack.c.b16 %v1780, %v1776
    %v2493 = vpack.c.b16 %v1781, %v1777
    %v2494 = vpack.c.b16 %v1782, %v1778
    %v2495 = vpack.c.b16 %v1783, %v1779
    %v2496 = vpack.c.b16 %v1788, %v1784
    %v2497 = vpack.c.b16 %v1789, %v1785
    %v2498 = vpack.c.b16 %v1790, %v1786
    %v2499 = vpack.c.b16 %v1791, %v1787
    %v2500 = vpack.c.b16 %v1796, %v1792
    %v2501 = vpack.c.b16 %v1797, %v1793
    %v2502 = vpack.c.b16 %v1798, %v1794
    %v2503 = vpack.c.b16 %v1799, %v1795
    %v2504 = vpack.c.b16 %v1804, %v1800
    %v2505 = vpack.c.b16 %v1805, %v1801
    %v2506 = vpack.c.b16 %v1806, %v1802
    %v2507 = vpack.c.b16 %v1807, %v1803
    %v2508 = vpack.c.b16 %v1812, %v1808
    %v2509 = vpack.c.b16 %v1813, %v1809
    %v2510 = vpack.c.b16 %v1814, %v1810
    %v2511 = vpack.c.b16 %v1815, %v1811
    %v2512 = vpack.c.b16 %v1820, %v1816
    %v2513 = vpack.c.b16 %v1821, %v1817
    %v2514 = vpack.c.b16 %v1822, %v1818
    %v2515 = vpack.c.b16 %v1823, %v1819
    %v2516 = vpack.c.b16 %v1828, %v1824
    %v2517 = vpack.c.b16 %v1829, %v1825
    %v2518 = vpack.c.b16 %v1830, %v1826
    %v2519 = vpack.c.b16 %v1831, %v1827
    %v2520 = vpack.c.b16 %v1836, %v1832
    %v2521 = vpack.c.b16 %v1837, %v1833
    %v2522 = vpack.c.b16 %v1838, %v1834
    %v2523 = vpack.c.b16 %v1839, %v1835
    %v2524 = vpack.c.b16 %v1844, %v1840
    %v2525 = vpack.c.b16 %v1845, %v1841
    %v2526 = vpack.c.b16 %v1846, %v1842
    %v2527 = vpack.c.b16 %v1847, %v1843
    %v2528 = vpack.c.b16 %v1852, %v1848
    %v2529 = vpack.c.b16 %v1853, %v1849
    %v2530 = vpack.c.b16 %v1854, %v1850
    %v2531 = vpack.c.b16 %v1855, %v1851
    %v2532 = vpack.c.b16 %v1860, %v1856
    %v2533 = vpack.c.b16 %v1861, %v1857
    %v2534 = vpack.c.b16 %v1862, %v1858
    %v2535 = vpack.c.b16 %v1863, %v1859
    %v2536 = vpack.c.b16 %v1868, %v1864
    %v2537 = vpack.c.b16 %v1869, %v1865
    %v2538 = vpack.c.b16 %v1870, %v1866
    %v2539 = vpack.c.b16 %v1871, %v1867
    %v2540 = vpack.c.b16 %v1876, %v1872
    %v2541 = vpack.c.b16 %v1877, %v1873
    %v2542 = vpack.c.b16 %v1878, %v1874
    %v2543 = vpack.c.b16 %v1879, %v1875
    %v2544 = vpack.c.b16 %v1884, %v1880
    %v2545 = vpack.c.b16 %v1885, %v1881
    %v2546 = vpack.c.b16 %v1886, %v1882
    %v2547 = vpack.c.b16 %v1887, %v1883
    %v2548 = vpack.c.b16 %v1892, %v1888
    %v2549 = vpack.c.b16 %v1893, %v1889
    %v2550 = vpack.c.b16 %v1894, %v1890
    %v2551 = vpack.c.b16 %v1895, %v1891
    %v2552 = vpack.c.b16 %v1900, %v1896
    %v2553 = vpack.c.b16 %v1901, %v1897
    %v2554 = vpack.c.b16 %v1902, %v1898
    %v2555 = vpack.c.b16 %v1903, %v1899
    %v2556 = vpack.c.b16 %v1908, %v1904
    %v2557 = vpack.c.b16 %v1909, %v1905
    %v2558 = vpack.c.b16 %v1910, %v1906
    %v2559 = vpack.c.b16 %v1911, %v1907
    %v2560 = vpack.c.b16 %v1916, %v1912
    %v2561 = vpack.c.b16 %v1917, %v1913
    %v2562 = vpack.c.b16 %v1918, %v1914
    %v2563 = vpack.c.b16 %v1919, %v1915
    %v2564 = vpack.c.b16 %v1924, %v1920
    %v2565 = vpack.c.b16 %v1925, %v1921
    %v2566 = vpack.c.b16 %v1926, %v1922
    %v2567 = vpack.c.b16 %v1927, %v1923
    %v2568 = vpack.c.b16 %v1932, %v1928
    %v2569 = vpack.c.b16 %v1933, %v1929
    %v2570 = vpack.c.b16 %v1934, %v1930
    %v2571 = vpack.c.b16 %v1935, %v1931
    %v2572 = vpack.c.b16 %v1940, %v1936
    %v2573 = vpack.c.b16 %v1941, %v1937
    %v2574 = vpack.c.b16 %v1942, %v1938
    %v2575 = vpack.c.b16 %v1943, %v1939
    %v2576 = vpack.c.b16 %v1948, %v1944
    %v2577 = vpack.c.b16 %v1949, %v1945
    %v2578 = vpack.c.b16 %v1950, %v1946
    %v2579 = vpack.c.b16 %v1951, %v1947
    %v2580 = vpack.c.b16 %v1956, %v1952
    %v2581 = vpack.c.b16 %v1957, %v1953
    %v2582 = vpack.c.b16 %v1958, %v1954
    %v2583 = vpack.c.b16 %v1959, %v1955
    %v2584 = vpack.c.b16 %v1964, %v1960
    %v2585 = vpack.c.b16 %v1965, %v1961
    %v2586 = vpack.c.b16 %v1966, %v1962
    %v2587 = vpack.c.b16 %v1967, %v1963
    %v2588 = vpack.c.b16 %v1972, %v1968
    %v2589 = vpack.c.b16 %v1973, %v1969
    %v2590 = vpack.c.b16 %v1974, %v1970
    %v2591 = vpack.c.b16 %v1975, %v1971
    %v2592 = vpack.c.b16 %v1980, %v1976
    %v2593 = vpack.c.b16 %v1981, %v1977
    %v2594 = vpack.c.b16 %v1982, %v1978
    %v2595 = vpack.c.b16 %v1983, %v1979
    %v2596 = vpack.c.b16 %v1988, %v1984
    %v2597 = vpack.c.b16 %v1989, %v1985
    %v2598 = vpack.c.b16 %v1990, %v1986
    %v2599 = vpack.c.b16 %v1991, %v1987
    %v2600 = vpack.c.b16 %v1996, %v1992
    %v2601 = vpack.c.b16 %v1997, %v1993
    %v2602 = vpack.c.b16 %v1998, %v1994
    %v2603 = vpack.c.b16 %v1999, %v1995
    %v2604 = vpack.c.b16 %v2004, %v2000
    %v2605 = vpack.c.b16 %v2005, %v2001
    %v2606 = vpack.c.b16 %v2006, %v2002
    %v2607 = vpack.c.b16 %v2007, %v2003
    %v2608 = vpack.c.b16 %v2012, %v2008
    %v2609 = vpack.c.b16 %v2013, %v2009
    %v2610 = vpack.c.b16 %v2014, %v2010
    %v2611 = vpack.c.b16 %v2015, %v2011
    %v2612 = vpack.c.b16 %v2020, %v2016
    %v2613 = vpack.c.b16 %v2021, %v2017
    %v2614 = vpack.c.b16 %v2022, %v2018
    %v2615 = vpack.c.b16 %v2023, %v2019
    %v2616 = vpack.c.b16 %v2028, %v2024
    %v2617 = vpack.c.b16 %v2029, %v2025
    %v2618 = vpack.c.b16 %v2030, %v2026
    %v2619 = vpack.c.b16 %v2031, %v2027
    %v2620 = vpack.c.b16 %v2036, %v2032
    %v2621 = vpack.c.b16 %v2037, %v2033
    %v2622 = vpack.c.b16 %v2038, %v2034
    %v2623 = vpack.c.b16 %v2039, %v2035
    %v2624 = vpack.c.b16 %v2044, %v2040
    %v2625 = vpack.c.b16 %v2045, %v2041
    %v2626 = vpack.c.b16 %v2046, %v2042
    %v2627 = vpack.c.b16 %v2047, %v2043
    %v2628 = vpack.c.b16 %v2052, %v2048
    %v2629 = vpack.c.b16 %v2053, %v2049
    %v2630 = vpack.c.b16 %v2054, %v2050
    %v2631 = vpack.c.b16 %v2055, %v2051
    %v2632 = vpack.c.b16 %v2060, %v2056
    %v2633 = vpack.c.b16 %v2061, %v2057
    %v2634 = vpack.c.b16 %v2062, %v2058
    %v2635 = vpack.c.b16 %v2063, %v2059
    %v2636 = vpack.c.b16 %v2068, %v2064
    %v2637 = vpack.c.b16 %v2069, %v2065
    %v2638 = vpack.c.b16 %v2070, %v2066
    %v2639 = vpack.c.b16 %v2071, %v2067
    %v2640 = vpack.c.b16 %v2076, %v2072
    %v2641 = vpack.c.b16 %v2077, %v2073
    %v2642 = vpack.c.b16 %v2078, %v2074
    %v2643 = vpack.c.b16 %v2079, %v2075
    %v2644 = vpack.c.b16 %v2084, %v2080
    %v2645 = vpack.c.b16 %v2085, %v2081
    %v2646 = vpack.c.b16 %v2086, %v2082
    %v2647 = vpack.c.b16 %v2087, %v2083
    %v2648 = vpack.c.b16 %v2092, %v2088
    %v2649 = vpack.c.b16 %v2093, %v2089
    %v2650 = vpack.c.b16 %v2094, %v2090
    %v2651 = vpack.c.b16 %v2095, %v2091
    %v2652 = vpack.c.b16 %v2100, %v2096
    %v2653 = vpack.c.b16 %v2101, %v2097
    %v2654 = vpack.c.b16 %v2102, %v2098
    %v2655 = vpack.c.b16 %v2103, %v2099
    %v2656 = vpack.c.b16 %v2108, %v2104
    %v2657 = vpack.c.b16 %v2109, %v2105
    %v2658 = vpack.c.b16 %v2110, %v2106
    %v2659 = vpack.c.b16 %v2111, %v2107
    %v2660 = vpack.c.b16 %v2116, %v2112
    %v2661 = vpack.c.b16 %v2117, %v2113
    %v2662 = vpack.c.b16 %v2118, %v2114
    %v2663 = vpack.c.b16 %v2119, %v2115
    %v2664 = vpack.c.b16 %v2124, %v2120
    %v2665 = vpack.c.b16 %v2125, %v2121
    %v2666 = vpack.c.b16 %v2126, %v2122
    %v2667 = vpack.c.b16 %v2127, %v2123
    %v2668 = vpack.c.b16 %v2132, %v2128
    %v2669 = vpack.c.b16 %v2133, %v2129
    %v2670 = vpack.c.b16 %v2134, %v2130
    %v2671 = vpack.c.b16 %v2135, %v2131
    %v2672 = vpack.c.b16 %v2140, %v2136
    %v2673 = vpack.c.b16 %v2141, %v2137
    %v2674 = vpack.c.b16 %v2142, %v2138
    %v2675 = vpack.c.b16 %v2143, %v2139
    %v2676 = vpack.c.b16 %v2148, %v2144
    %v2677 = vpack.c.b16 %v2149, %v2145
    %v2678 = vpack.c.b16 %v2150, %v2146
    %v2679 = vpack.c.b16 %v2151, %v2147
    %v2680 = vpack.c.b16 %v2156, %v2152
    %v2681 = vpack.c.b16 %v2157, %v2153
    %v2682 = vpack.c.b16 %v2158, %v2154
    %v2683 = vpack.c.b16 %v2159, %v2155
    %v2684 = vpack.c.b16 %v2164, %v2160
    %v2685 = vpack.c.b16 %v2165, %v2161
    %v2686 = vpack.c.b16 %v2166, %v2162
    %v2687 = vpack.c.b16 %v2167, %v2163
    %v2688 = vpack.c.b16 %v2172, %v2168
    %v2689 = vpack.c.b16 %v2173, %v2169
    %v2690 = vpack.c.b16 %v2174, %v2170
    %v2691 = vpack.c.b16 %v2175, %v2171
    %v2692 = vpack.c.b16 %v2180, %v2176
    %v2693 = vpack.c.b16 %v2181, %v2177
    %v2694 = vpack.c.b16 %v2182, %v2178
    %v2695 = vpack.c.b16 %v2183, %v2179
    %3208 = vmatpush.bf16.msra.mxu0 %v2212
    %3209 = vmatpush.bf16.msra.mxu0 %v2208
    %3210 = vmatpush.bf16.msra.mxu0 %v2204
    %3211 = vmatpush.bf16.msra.mxu0 %v2200
    %3212 = vmatpush.bf16.msra.mxu0 %v2196
    %3213 = vmatpush.bf16.msra.mxu0 %v2192
    %3214 = vmatpush.bf16.msra.mxu0 %v2188
    %3215 = vmatpush.bf16.msra.mxu0 %v2184
    %3216 = vmatmul.bf16.gmra.mxu0 %v109
    %v3217 = vpop.f32.mrf.mxu0
    %v3218 = vadd.f32 %v640, %v3217
    %v3219 = vpop.f32.mrf.mxu0
    %3220 = vdwg.mxu0
    %3221 = vmatpush.bf16.msra.mxu0 %v2244
    %3222 = vmatpush.bf16.msra.mxu0 %v2240
    %3223 = vmatpush.bf16.msra.mxu0 %v2236
    %3224 = vmatpush.bf16.msra.mxu0 %v2232
    %3225 = vmatpush.bf16.msra.mxu0 %v2228
    %3226 = vmatpush.bf16.msra.mxu0 %v2224
    %3227 = vmatpush.bf16.msra.mxu0 %v2220
    %3228 = vmatpush.bf16.msra.mxu0 %v2216
    %3229 = vmatmul.bf16.gmra.mxu0 %v110
    %v3230 = vpop.f32.mrf.mxu0
    %v3231 = vadd.f32 %v3218, %v3230
    %v3232 = vpop.f32.mrf.mxu0
    %3233 = vdwg.mxu0
    %3234 = vmatpush.bf16.msra.mxu0 %v2276
    %3235 = vmatpush.bf16.msra.mxu0 %v2272
    %3236 = vmatpush.bf16.msra.mxu0 %v2268
    %3237 = vmatpush.bf16.msra.mxu0 %v2264
    %3238 = vmatpush.bf16.msra.mxu0 %v2260
    %3239 = vmatpush.bf16.msra.mxu0 %v2256
    %3240 = vmatpush.bf16.msra.mxu0 %v2252
    %3241 = vmatpush.bf16.msra.mxu0 %v2248
    %3242 = vmatmul.bf16.gmra.mxu0 %v111
    %v3243 = vpop.f32.mrf.mxu0
    %v3244 = vadd.f32 %v3231, %v3243
    %v3245 = vpop.f32.mrf.mxu0
    %3246 = vdwg.mxu0
    %3247 = vmatpush.bf16.msra.mxu0 %v2308
    %3248 = vmatpush.bf16.msra.mxu0 %v2304
    %3249 = vmatpush.bf16.msra.mxu0 %v2300
    %3250 = vmatpush.bf16.msra.mxu0 %v2296
    %3251 = vmatpush.bf16.msra.mxu0 %v2292
    %3252 = vmatpush.bf16.msra.mxu0 %v2288
    %3253 = vmatpush.bf16.msra.mxu0 %v2284
    %3254 = vmatpush.bf16.msra.mxu0 %v2280
    %3255 = vmatmul.bf16.gmra.mxu0 %v112
    %v3256 = vpop.f32.mrf.mxu0
    %v3257 = vadd.f32 %v3244, %v3256
    %v3258 = vpop.f32.mrf.mxu0
    %3259 = vdwg.mxu0
    %3260 = vmatpush.bf16.msra.mxu0 %v2340
    %3261 = vmatpush.bf16.msra.mxu0 %v2336
    %3262 = vmatpush.bf16.msra.mxu0 %v2332
    %3263 = vmatpush.bf16.msra.mxu0 %v2328
    %3264 = vmatpush.bf16.msra.mxu0 %v2324
    %3265 = vmatpush.bf16.msra.mxu0 %v2320
    %3266 = vmatpush.bf16.msra.mxu0 %v2316
    %3267 = vmatpush.bf16.msra.mxu0 %v2312
    %3268 = vmatmul.bf16.gmra.mxu0 %v113
    %v3269 = vpop.f32.mrf.mxu0
    %v3270 = vadd.f32 %v3257, %v3269
    %v3271 = vpop.f32.mrf.mxu0
    %3272 = vdwg.mxu0
    %3273 = vmatpush.bf16.msra.mxu0 %v2372
    %3274 = vmatpush.bf16.msra.mxu0 %v2368
    %3275 = vmatpush.bf16.msra.mxu0 %v2364
    %3276 = vmatpush.bf16.msra.mxu0 %v2360
    %3277 = vmatpush.bf16.msra.mxu0 %v2356
    %3278 = vmatpush.bf16.msra.mxu0 %v2352
    %3279 = vmatpush.bf16.msra.mxu0 %v2348
    %3280 = vmatpush.bf16.msra.mxu0 %v2344
    %3281 = vmatmul.bf16.gmra.mxu0 %v114
    %v3282 = vpop.f32.mrf.mxu0
    %v3283 = vadd.f32 %v3270, %v3282
    %v3284 = vpop.f32.mrf.mxu0
    %3285 = vdwg.mxu0
    %3286 = vmatpush.bf16.msra.mxu0 %v2404
    %3287 = vmatpush.bf16.msra.mxu0 %v2400
    %3288 = vmatpush.bf16.msra.mxu0 %v2396
    %3289 = vmatpush.bf16.msra.mxu0 %v2392
    %3290 = vmatpush.bf16.msra.mxu0 %v2388
    %3291 = vmatpush.bf16.msra.mxu0 %v2384
    %3292 = vmatpush.bf16.msra.mxu0 %v2380
    %3293 = vmatpush.bf16.msra.mxu0 %v2376
    %3294 = vmatmul.bf16.gmra.mxu0 %v115
    %v3295 = vpop.f32.mrf.mxu0
    %v3296 = vadd.f32 %v3283, %v3295
    %v3297 = vpop.f32.mrf.mxu0
    %3298 = vdwg.mxu0
    %3299 = vmatpush.bf16.msra.mxu0 %v2436
    %3300 = vmatpush.bf16.msra.mxu0 %v2432
    %3301 = vmatpush.bf16.msra.mxu0 %v2428
    %3302 = vmatpush.bf16.msra.mxu0 %v2424
    %3303 = vmatpush.bf16.msra.mxu0 %v2420
    %3304 = vmatpush.bf16.msra.mxu0 %v2416
    %3305 = vmatpush.bf16.msra.mxu0 %v2412
    %3306 = vmatpush.bf16.msra.mxu0 %v2408
    %3307 = vmatmul.bf16.gmra.mxu0 %v116
    %v3308 = vpop.f32.mrf.mxu0
    %v3309 = vadd.f32 %v3296, %v3308
    %v3310 = vpop.f32.mrf.mxu0
    %3311 = vdwg.mxu0
    %3312 = vmatpush.bf16.msra.mxu0 %v2468
    %3313 = vmatpush.bf16.msra.mxu0 %v2464
    %3314 = vmatpush.bf16.msra.mxu0 %v2460
    %3315 = vmatpush.bf16.msra.mxu0 %v2456
    %3316 = vmatpush.bf16.msra.mxu0 %v2452
    %3317 = vmatpush.bf16.msra.mxu0 %v2448
    %3318 = vmatpush.bf16.msra.mxu0 %v2444
    %3319 = vmatpush.bf16.msra.mxu0 %v2440
    %3320 = vmatmul.bf16.gmra.mxu0 %v117
    %v3321 = vpop.f32.mrf.mxu0
    %v3322 = vadd.f32 %v3309, %v3321
    %v3323 = vpop.f32.mrf.mxu0
    %3324 = vdwg.mxu0
    %3325 = vmatpush.bf16.msra.mxu0 %v2500
    %3326 = vmatpush.bf16.msra.mxu0 %v2496
    %3327 = vmatpush.bf16.msra.mxu0 %v2492
    %3328 = vmatpush.bf16.msra.mxu0 %v2488
    %3329 = vmatpush.bf16.msra.mxu0 %v2484
    %3330 = vmatpush.bf16.msra.mxu0 %v2480
    %3331 = vmatpush.bf16.msra.mxu0 %v2476
    %3332 = vmatpush.bf16.msra.mxu0 %v2472
    %3333 = vmatmul.bf16.gmra.mxu0 %v118
    %v3334 = vpop.f32.mrf.mxu0
    %v3335 = vadd.f32 %v3322, %v3334
    %v3336 = vpop.f32.mrf.mxu0
    %3337 = vdwg.mxu0
    %3338 = vmatpush.bf16.msra.mxu0 %v2532
    %3339 = vmatpush.bf16.msra.mxu0 %v2528
    %3340 = vmatpush.bf16.msra.mxu0 %v2524
    %3341 = vmatpush.bf16.msra.mxu0 %v2520
    %3342 = vmatpush.bf16.msra.mxu0 %v2516
    %3343 = vmatpush.bf16.msra.mxu0 %v2512
    %3344 = vmatpush.bf16.msra.mxu0 %v2508
    %3345 = vmatpush.bf16.msra.mxu0 %v2504
    %3346 = vmatmul.bf16.gmra.mxu0 %v119
    %v3347 = vpop.f32.mrf.mxu0
    %v3348 = vadd.f32 %v3335, %v3347
    %v3349 = vpop.f32.mrf.mxu0
    %3350 = vdwg.mxu0
    %3351 = vmatpush.bf16.msra.mxu0 %v2564
    %3352 = vmatpush.bf16.msra.mxu0 %v2560
    %3353 = vmatpush.bf16.msra.mxu0 %v2556
    %3354 = vmatpush.bf16.msra.mxu0 %v2552
    %3355 = vmatpush.bf16.msra.mxu0 %v2548
    %3356 = vmatpush.bf16.msra.mxu0 %v2544
    %3357 = vmatpush.bf16.msra.mxu0 %v2540
    %3358 = vmatpush.bf16.msra.mxu0 %v2536
    %3359 = vmatmul.bf16.gmra.mxu0 %v120
    %v3360 = vpop.f32.mrf.mxu0
    %v3361 = vadd.f32 %v3348, %v3360
    %v3362 = vpop.f32.mrf.mxu0
    %3363 = vdwg.mxu0
    %3364 = vmatpush.bf16.msra.mxu0 %v2596
    %3365 = vmatpush.bf16.msra.mxu0 %v2592
    %3366 = vmatpush.bf16.msra.mxu0 %v2588
    %3367 = vmatpush.bf16.msra.mxu0 %v2584
    %3368 = vmatpush.bf16.msra.mxu0 %v2580
    %3369 = vmatpush.bf16.msra.mxu0 %v2576
    %3370 = vmatpush.bf16.msra.mxu0 %v2572
    %3371 = vmatpush.bf16.msra.mxu0 %v2568
    %3372 = vmatmul.bf16.gmra.mxu0 %v121
    %v3373 = vpop.f32.mrf.mxu0
    %v3374 = vadd.f32 %v3361, %v3373
    %v3375 = vpop.f32.mrf.mxu0
    %3376 = vdwg.mxu0
    %3377 = vmatpush.bf16.msra.mxu0 %v2628
    %3378 = vmatpush.bf16.msra.mxu0 %v2624
    %3379 = vmatpush.bf16.msra.mxu0 %v2620
    %3380 = vmatpush.bf16.msra.mxu0 %v2616
    %3381 = vmatpush.bf16.msra.mxu0 %v2612
    %3382 = vmatpush.bf16.msra.mxu0 %v2608
    %3383 = vmatpush.bf16.msra.mxu0 %v2604
    %3384 = vmatpush.bf16.msra.mxu0 %v2600
    %3385 = vmatmul.bf16.gmra.mxu0 %v122
    %v3386 = vpop.f32.mrf.mxu0
    %v3387 = vadd.f32 %v3374, %v3386
    %v3388 = vpop.f32.mrf.mxu0
    %3389 = vdwg.mxu0
    %3390 = vmatpush.bf16.msra.mxu0 %v2660
    %3391 = vmatpush.bf16.msra.mxu0 %v2656
    %3392 = vmatpush.bf16.msra.mxu0 %v2652
    %3393 = vmatpush.bf16.msra.mxu0 %v2648
    %3394 = vmatpush.bf16.msra.mxu0 %v2644
    %3395 = vmatpush.bf16.msra.mxu0 %v2640
    %3396 = vmatpush.bf16.msra.mxu0 %v2636
    %3397 = vmatpush.bf16.msra.mxu0 %v2632
    %3398 = vmatmul.bf16.gmra.mxu0 %v123
    %v3399 = vpop.f32.mrf.mxu0
    %v3400 = vadd.f32 %v3387, %v3399
    %v3401 = vpop.f32.mrf.mxu0
    %3402 = vdwg.mxu0
    %3403 = vmatpush.bf16.msra.mxu0 %v2692
    %3404 = vmatpush.bf16.msra.mxu0 %v2688
    %3405 = vmatpush.bf16.msra.mxu0 %v2684
    %3406 = vmatpush.bf16.msra.mxu0 %v2680
    %3407 = vmatpush.bf16.msra.mxu0 %v2676
    %3408 = vmatpush.bf16.msra.mxu0 %v2672
    %3409 = vmatpush.bf16.msra.mxu0 %v2668
    %3410 = vmatpush.bf16.msra.mxu0 %v2664
    %3411 = vmatmul.bf16.gmra.mxu0 %v124
    %v3412 = vpop.f32.mrf.mxu0
    %v3413 = vadd.f32 %v3400, %v3412
    %v3414 = vpop.f32.mrf.mxu0
    %3415 = vdwg.mxu0
    %3416 = vmatpush.bf16.msra.mxu0 %v2213
    %3417 = vmatpush.bf16.msra.mxu0 %v2209
    %3418 = vmatpush.bf16.msra.mxu0 %v2205
    %3419 = vmatpush.bf16.msra.mxu0 %v2201
    %3420 = vmatpush.bf16.msra.mxu0 %v2197
    %3421 = vmatpush.bf16.msra.mxu0 %v2193
    %3422 = vmatpush.bf16.msra.mxu0 %v2189
    %3423 = vmatpush.bf16.msra.mxu0 %v2185
    %3424 = vmatmul.bf16.gmra.mxu0 %v109
    %v3425 = vpop.f32.mrf.mxu0
    %v3426 = vadd.f32 %v641, %v3425
    %v3427 = vpop.f32.mrf.mxu0
    %3428 = vdwg.mxu0
    %3429 = vmatpush.bf16.msra.mxu0 %v2245
    %3430 = vmatpush.bf16.msra.mxu0 %v2241
    %3431 = vmatpush.bf16.msra.mxu0 %v2237
    %3432 = vmatpush.bf16.msra.mxu0 %v2233
    %3433 = vmatpush.bf16.msra.mxu0 %v2229
    %3434 = vmatpush.bf16.msra.mxu0 %v2225
    %3435 = vmatpush.bf16.msra.mxu0 %v2221
    %3436 = vmatpush.bf16.msra.mxu0 %v2217
    %3437 = vmatmul.bf16.gmra.mxu0 %v110
    %v3438 = vpop.f32.mrf.mxu0
    %v3439 = vadd.f32 %v3426, %v3438
    %v3440 = vpop.f32.mrf.mxu0
    %3441 = vdwg.mxu0
    %3442 = vmatpush.bf16.msra.mxu0 %v2277
    %3443 = vmatpush.bf16.msra.mxu0 %v2273
    %3444 = vmatpush.bf16.msra.mxu0 %v2269
    %3445 = vmatpush.bf16.msra.mxu0 %v2265
    %3446 = vmatpush.bf16.msra.mxu0 %v2261
    %3447 = vmatpush.bf16.msra.mxu0 %v2257
    %3448 = vmatpush.bf16.msra.mxu0 %v2253
    %3449 = vmatpush.bf16.msra.mxu0 %v2249
    %3450 = vmatmul.bf16.gmra.mxu0 %v111
    %v3451 = vpop.f32.mrf.mxu0
    %v3452 = vadd.f32 %v3439, %v3451
    %v3453 = vpop.f32.mrf.mxu0
    %3454 = vdwg.mxu0
    %3455 = vmatpush.bf16.msra.mxu0 %v2309
    %3456 = vmatpush.bf16.msra.mxu0 %v2305
    %3457 = vmatpush.bf16.msra.mxu0 %v2301
    %3458 = vmatpush.bf16.msra.mxu0 %v2297
    %3459 = vmatpush.bf16.msra.mxu0 %v2293
    %3460 = vmatpush.bf16.msra.mxu0 %v2289
    %3461 = vmatpush.bf16.msra.mxu0 %v2285
    %3462 = vmatpush.bf16.msra.mxu0 %v2281
    %3463 = vmatmul.bf16.gmra.mxu0 %v112
    %v3464 = vpop.f32.mrf.mxu0
    %v3465 = vadd.f32 %v3452, %v3464
    %v3466 = vpop.f32.mrf.mxu0
    %3467 = vdwg.mxu0
    %3468 = vmatpush.bf16.msra.mxu0 %v2341
    %3469 = vmatpush.bf16.msra.mxu0 %v2337
    %3470 = vmatpush.bf16.msra.mxu0 %v2333
    %3471 = vmatpush.bf16.msra.mxu0 %v2329
    %3472 = vmatpush.bf16.msra.mxu0 %v2325
    %3473 = vmatpush.bf16.msra.mxu0 %v2321
    %3474 = vmatpush.bf16.msra.mxu0 %v2317
    %3475 = vmatpush.bf16.msra.mxu0 %v2313
    %3476 = vmatmul.bf16.gmra.mxu0 %v113
    %v3477 = vpop.f32.mrf.mxu0
    %v3478 = vadd.f32 %v3465, %v3477
    %v3479 = vpop.f32.mrf.mxu0
    %3480 = vdwg.mxu0
    %3481 = vmatpush.bf16.msra.mxu0 %v2373
    %3482 = vmatpush.bf16.msra.mxu0 %v2369
    %3483 = vmatpush.bf16.msra.mxu0 %v2365
    %3484 = vmatpush.bf16.msra.mxu0 %v2361
    %3485 = vmatpush.bf16.msra.mxu0 %v2357
    %3486 = vmatpush.bf16.msra.mxu0 %v2353
    %3487 = vmatpush.bf16.msra.mxu0 %v2349
    %3488 = vmatpush.bf16.msra.mxu0 %v2345
    %3489 = vmatmul.bf16.gmra.mxu0 %v114
    %v3490 = vpop.f32.mrf.mxu0
    %v3491 = vadd.f32 %v3478, %v3490
    %v3492 = vpop.f32.mrf.mxu0
    %3493 = vdwg.mxu0
    %3494 = vmatpush.bf16.msra.mxu0 %v2405
    %3495 = vmatpush.bf16.msra.mxu0 %v2401
    %3496 = vmatpush.bf16.msra.mxu0 %v2397
    %3497 = vmatpush.bf16.msra.mxu0 %v2393
    %3498 = vmatpush.bf16.msra.mxu0 %v2389
    %3499 = vmatpush.bf16.msra.mxu0 %v2385
    %3500 = vmatpush.bf16.msra.mxu0 %v2381
    %3501 = vmatpush.bf16.msra.mxu0 %v2377
    %3502 = vmatmul.bf16.gmra.mxu0 %v115
    %v3503 = vpop.f32.mrf.mxu0
    %v3504 = vadd.f32 %v3491, %v3503
    %v3505 = vpop.f32.mrf.mxu0
    %3506 = vdwg.mxu0
    %3507 = vmatpush.bf16.msra.mxu0 %v2437
    %3508 = vmatpush.bf16.msra.mxu0 %v2433
    %3509 = vmatpush.bf16.msra.mxu0 %v2429
    %3510 = vmatpush.bf16.msra.mxu0 %v2425
    %3511 = vmatpush.bf16.msra.mxu0 %v2421
    %3512 = vmatpush.bf16.msra.mxu0 %v2417
    %3513 = vmatpush.bf16.msra.mxu0 %v2413
    %3514 = vmatpush.bf16.msra.mxu0 %v2409
    %3515 = vmatmul.bf16.gmra.mxu0 %v116
    %v3516 = vpop.f32.mrf.mxu0
    %v3517 = vadd.f32 %v3504, %v3516
    %v3518 = vpop.f32.mrf.mxu0
    %3519 = vdwg.mxu0
    %3520 = vmatpush.bf16.msra.mxu0 %v2469
    %3521 = vmatpush.bf16.msra.mxu0 %v2465
    %3522 = vmatpush.bf16.msra.mxu0 %v2461
    %3523 = vmatpush.bf16.msra.mxu0 %v2457
    %3524 = vmatpush.bf16.msra.mxu0 %v2453
    %3525 = vmatpush.bf16.msra.mxu0 %v2449
    %3526 = vmatpush.bf16.msra.mxu0 %v2445
    %3527 = vmatpush.bf16.msra.mxu0 %v2441
    %3528 = vmatmul.bf16.gmra.mxu0 %v117
    %v3529 = vpop.f32.mrf.mxu0
    %v3530 = vadd.f32 %v3517, %v3529
    %v3531 = vpop.f32.mrf.mxu0
    %3532 = vdwg.mxu0
    %3533 = vmatpush.bf16.msra.mxu0 %v2501
    %3534 = vmatpush.bf16.msra.mxu0 %v2497
    %3535 = vmatpush.bf16.msra.mxu0 %v2493
    %3536 = vmatpush.bf16.msra.mxu0 %v2489
    %3537 = vmatpush.bf16.msra.mxu0 %v2485
    %3538 = vmatpush.bf16.msra.mxu0 %v2481
    %3539 = vmatpush.bf16.msra.mxu0 %v2477
    %3540 = vmatpush.bf16.msra.mxu0 %v2473
    %3541 = vmatmul.bf16.gmra.mxu0 %v118
    %v3542 = vpop.f32.mrf.mxu0
    %v3543 = vadd.f32 %v3530, %v3542
    %v3544 = vpop.f32.mrf.mxu0
    %3545 = vdwg.mxu0
    %3546 = vmatpush.bf16.msra.mxu0 %v2533
    %3547 = vmatpush.bf16.msra.mxu0 %v2529
    %3548 = vmatpush.bf16.msra.mxu0 %v2525
    %3549 = vmatpush.bf16.msra.mxu0 %v2521
    %3550 = vmatpush.bf16.msra.mxu0 %v2517
    %3551 = vmatpush.bf16.msra.mxu0 %v2513
    %3552 = vmatpush.bf16.msra.mxu0 %v2509
    %3553 = vmatpush.bf16.msra.mxu0 %v2505
    %3554 = vmatmul.bf16.gmra.mxu0 %v119
    %v3555 = vpop.f32.mrf.mxu0
    %v3556 = vadd.f32 %v3543, %v3555
    %v3557 = vpop.f32.mrf.mxu0
    %3558 = vdwg.mxu0
    %3559 = vmatpush.bf16.msra.mxu0 %v2565
    %3560 = vmatpush.bf16.msra.mxu0 %v2561
    %3561 = vmatpush.bf16.msra.mxu0 %v2557
    %3562 = vmatpush.bf16.msra.mxu0 %v2553
    %3563 = vmatpush.bf16.msra.mxu0 %v2549
    %3564 = vmatpush.bf16.msra.mxu0 %v2545
    %3565 = vmatpush.bf16.msra.mxu0 %v2541
    %3566 = vmatpush.bf16.msra.mxu0 %v2537
    %3567 = vmatmul.bf16.gmra.mxu0 %v120
    %v3568 = vpop.f32.mrf.mxu0
    %v3569 = vadd.f32 %v3556, %v3568
    %v3570 = vpop.f32.mrf.mxu0
    %3571 = vdwg.mxu0
    %3572 = vmatpush.bf16.msra.mxu0 %v2597
    %3573 = vmatpush.bf16.msra.mxu0 %v2593
    %3574 = vmatpush.bf16.msra.mxu0 %v2589
    %3575 = vmatpush.bf16.msra.mxu0 %v2585
    %3576 = vmatpush.bf16.msra.mxu0 %v2581
    %3577 = vmatpush.bf16.msra.mxu0 %v2577
    %3578 = vmatpush.bf16.msra.mxu0 %v2573
    %3579 = vmatpush.bf16.msra.mxu0 %v2569
    %3580 = vmatmul.bf16.gmra.mxu0 %v121
    %v3581 = vpop.f32.mrf.mxu0
    %v3582 = vadd.f32 %v3569, %v3581
    %v3583 = vpop.f32.mrf.mxu0
    %3584 = vdwg.mxu0
    %3585 = vmatpush.bf16.msra.mxu0 %v2629
    %3586 = vmatpush.bf16.msra.mxu0 %v2625
    %3587 = vmatpush.bf16.msra.mxu0 %v2621
    %3588 = vmatpush.bf16.msra.mxu0 %v2617
    %3589 = vmatpush.bf16.msra.mxu0 %v2613
    %3590 = vmatpush.bf16.msra.mxu0 %v2609
    %3591 = vmatpush.bf16.msra.mxu0 %v2605
    %3592 = vmatpush.bf16.msra.mxu0 %v2601
    %3593 = vmatmul.bf16.gmra.mxu0 %v122
    %v3594 = vpop.f32.mrf.mxu0
    %v3595 = vadd.f32 %v3582, %v3594
    %v3596 = vpop.f32.mrf.mxu0
    %3597 = vdwg.mxu0
    %3598 = vmatpush.bf16.msra.mxu0 %v2661
    %3599 = vmatpush.bf16.msra.mxu0 %v2657
    %3600 = vmatpush.bf16.msra.mxu0 %v2653
    %3601 = vmatpush.bf16.msra.mxu0 %v2649
    %3602 = vmatpush.bf16.msra.mxu0 %v2645
    %3603 = vmatpush.bf16.msra.mxu0 %v2641
    %3604 = vmatpush.bf16.msra.mxu0 %v2637
    %3605 = vmatpush.bf16.msra.mxu0 %v2633
    %3606 = vmatmul.bf16.gmra.mxu0 %v123
    %v3607 = vpop.f32.mrf.mxu0
    %v3608 = vadd.f32 %v3595, %v3607
    %v3609 = vpop.f32.mrf.mxu0
    %3610 = vdwg.mxu0
    %3611 = vmatpush.bf16.msra.mxu0 %v2693
    %3612 = vmatpush.bf16.msra.mxu0 %v2689
    %3613 = vmatpush.bf16.msra.mxu0 %v2685
    %3614 = vmatpush.bf16.msra.mxu0 %v2681
    %3615 = vmatpush.bf16.msra.mxu0 %v2677
    %3616 = vmatpush.bf16.msra.mxu0 %v2673
    %3617 = vmatpush.bf16.msra.mxu0 %v2669
    %3618 = vmatpush.bf16.msra.mxu0 %v2665
    %3619 = vmatmul.bf16.gmra.mxu0 %v124
    %v3620 = vpop.f32.mrf.mxu0
    %v3621 = vadd.f32 %v3608, %v3620
    %v3622 = vpop.f32.mrf.mxu0
    %3623 = vdwg.mxu0
    %3624 = vmatpush.bf16.msra.mxu0 %v2214
    %3625 = vmatpush.bf16.msra.mxu0 %v2210
    %3626 = vmatpush.bf16.msra.mxu0 %v2206
    %3627 = vmatpush.bf16.msra.mxu0 %v2202
    %3628 = vmatpush.bf16.msra.mxu0 %v2198
    %3629 = vmatpush.bf16.msra.mxu0 %v2194
    %3630 = vmatpush.bf16.msra.mxu0 %v2190
    %3631 = vmatpush.bf16.msra.mxu0 %v2186
    %3632 = vmatmul.bf16.gmra.mxu0 %v109
    %v3633 = vpop.f32.mrf.mxu0
    %v3634 = vadd.f32 %v642, %v3633
    %v3635 = vpop.f32.mrf.mxu0
    %3636 = vdwg.mxu0
    %3637 = vmatpush.bf16.msra.mxu0 %v2246
    %3638 = vmatpush.bf16.msra.mxu0 %v2242
    %3639 = vmatpush.bf16.msra.mxu0 %v2238
    %3640 = vmatpush.bf16.msra.mxu0 %v2234
    %3641 = vmatpush.bf16.msra.mxu0 %v2230
    %3642 = vmatpush.bf16.msra.mxu0 %v2226
    %3643 = vmatpush.bf16.msra.mxu0 %v2222
    %3644 = vmatpush.bf16.msra.mxu0 %v2218
    %3645 = vmatmul.bf16.gmra.mxu0 %v110
    %v3646 = vpop.f32.mrf.mxu0
    %v3647 = vadd.f32 %v3634, %v3646
    %v3648 = vpop.f32.mrf.mxu0
    %3649 = vdwg.mxu0
    %3650 = vmatpush.bf16.msra.mxu0 %v2278
    %3651 = vmatpush.bf16.msra.mxu0 %v2274
    %3652 = vmatpush.bf16.msra.mxu0 %v2270
    %3653 = vmatpush.bf16.msra.mxu0 %v2266
    %3654 = vmatpush.bf16.msra.mxu0 %v2262
    %3655 = vmatpush.bf16.msra.mxu0 %v2258
    %3656 = vmatpush.bf16.msra.mxu0 %v2254
    %3657 = vmatpush.bf16.msra.mxu0 %v2250
    %3658 = vmatmul.bf16.gmra.mxu0 %v111
    %v3659 = vpop.f32.mrf.mxu0
    %v3660 = vadd.f32 %v3647, %v3659
    %v3661 = vpop.f32.mrf.mxu0
    %3662 = vdwg.mxu0
    %3663 = vmatpush.bf16.msra.mxu0 %v2310
    %3664 = vmatpush.bf16.msra.mxu0 %v2306
    %3665 = vmatpush.bf16.msra.mxu0 %v2302
    %3666 = vmatpush.bf16.msra.mxu0 %v2298
    %3667 = vmatpush.bf16.msra.mxu0 %v2294
    %3668 = vmatpush.bf16.msra.mxu0 %v2290
    %3669 = vmatpush.bf16.msra.mxu0 %v2286
    %3670 = vmatpush.bf16.msra.mxu0 %v2282
    %3671 = vmatmul.bf16.gmra.mxu0 %v112
    %v3672 = vpop.f32.mrf.mxu0
    %v3673 = vadd.f32 %v3660, %v3672
    %v3674 = vpop.f32.mrf.mxu0
    %3675 = vdwg.mxu0
    %3676 = vmatpush.bf16.msra.mxu0 %v2342
    %3677 = vmatpush.bf16.msra.mxu0 %v2338
    %3678 = vmatpush.bf16.msra.mxu0 %v2334
    %3679 = vmatpush.bf16.msra.mxu0 %v2330
    %3680 = vmatpush.bf16.msra.mxu0 %v2326
    %3681 = vmatpush.bf16.msra.mxu0 %v2322
    %3682 = vmatpush.bf16.msra.mxu0 %v2318
    %3683 = vmatpush.bf16.msra.mxu0 %v2314
    %3684 = vmatmul.bf16.gmra.mxu0 %v113
    %v3685 = vpop.f32.mrf.mxu0
    %v3686 = vadd.f32 %v3673, %v3685
    %v3687 = vpop.f32.mrf.mxu0
    %3688 = vdwg.mxu0
    %3689 = vmatpush.bf16.msra.mxu0 %v2374
    %3690 = vmatpush.bf16.msra.mxu0 %v2370
    %3691 = vmatpush.bf16.msra.mxu0 %v2366
    %3692 = vmatpush.bf16.msra.mxu0 %v2362
    %3693 = vmatpush.bf16.msra.mxu0 %v2358
    %3694 = vmatpush.bf16.msra.mxu0 %v2354
    %3695 = vmatpush.bf16.msra.mxu0 %v2350
    %3696 = vmatpush.bf16.msra.mxu0 %v2346
    %3697 = vmatmul.bf16.gmra.mxu0 %v114
    %v3698 = vpop.f32.mrf.mxu0
    %v3699 = vadd.f32 %v3686, %v3698
    %v3700 = vpop.f32.mrf.mxu0
    %3701 = vdwg.mxu0
    %3702 = vmatpush.bf16.msra.mxu0 %v2406
    %3703 = vmatpush.bf16.msra.mxu0 %v2402
    %3704 = vmatpush.bf16.msra.mxu0 %v2398
    %3705 = vmatpush.bf16.msra.mxu0 %v2394
    %3706 = vmatpush.bf16.msra.mxu0 %v2390
    %3707 = vmatpush.bf16.msra.mxu0 %v2386
    %3708 = vmatpush.bf16.msra.mxu0 %v2382
    %3709 = vmatpush.bf16.msra.mxu0 %v2378
    %3710 = vmatmul.bf16.gmra.mxu0 %v115
    %v3711 = vpop.f32.mrf.mxu0
    %v3712 = vadd.f32 %v3699, %v3711
    %v3713 = vpop.f32.mrf.mxu0
    %3714 = vdwg.mxu0
    %3715 = vmatpush.bf16.msra.mxu0 %v2438
    %3716 = vmatpush.bf16.msra.mxu0 %v2434
    %3717 = vmatpush.bf16.msra.mxu0 %v2430
    %3718 = vmatpush.bf16.msra.mxu0 %v2426
    %3719 = vmatpush.bf16.msra.mxu0 %v2422
    %3720 = vmatpush.bf16.msra.mxu0 %v2418
    %3721 = vmatpush.bf16.msra.mxu0 %v2414
    %3722 = vmatpush.bf16.msra.mxu0 %v2410
    %3723 = vmatmul.bf16.gmra.mxu0 %v116
    %v3724 = vpop.f32.mrf.mxu0
    %v3725 = vadd.f32 %v3712, %v3724
    %v3726 = vpop.f32.mrf.mxu0
    %3727 = vdwg.mxu0
    %3728 = vmatpush.bf16.msra.mxu0 %v2470
    %3729 = vmatpush.bf16.msra.mxu0 %v2466
    %3730 = vmatpush.bf16.msra.mxu0 %v2462
    %3731 = vmatpush.bf16.msra.mxu0 %v2458
    %3732 = vmatpush.bf16.msra.mxu0 %v2454
    %3733 = vmatpush.bf16.msra.mxu0 %v2450
    %3734 = vmatpush.bf16.msra.mxu0 %v2446
    %3735 = vmatpush.bf16.msra.mxu0 %v2442
    %3736 = vmatmul.bf16.gmra.mxu0 %v117
    %v3737 = vpop.f32.mrf.mxu0
    %v3738 = vadd.f32 %v3725, %v3737
    %v3739 = vpop.f32.mrf.mxu0
    %3740 = vdwg.mxu0
    %3741 = vmatpush.bf16.msra.mxu0 %v2502
    %3742 = vmatpush.bf16.msra.mxu0 %v2498
    %3743 = vmatpush.bf16.msra.mxu0 %v2494
    %3744 = vmatpush.bf16.msra.mxu0 %v2490
    %3745 = vmatpush.bf16.msra.mxu0 %v2486
    %3746 = vmatpush.bf16.msra.mxu0 %v2482
    %3747 = vmatpush.bf16.msra.mxu0 %v2478
    %3748 = vmatpush.bf16.msra.mxu0 %v2474
    %3749 = vmatmul.bf16.gmra.mxu0 %v118
    %v3750 = vpop.f32.mrf.mxu0
    %v3751 = vadd.f32 %v3738, %v3750
    %v3752 = vpop.f32.mrf.mxu0
    %3753 = vdwg.mxu0
    %3754 = vmatpush.bf16.msra.mxu0 %v2534
    %3755 = vmatpush.bf16.msra.mxu0 %v2530
    %3756 = vmatpush.bf16.msra.mxu0 %v2526
    %3757 = vmatpush.bf16.msra.mxu0 %v2522
    %3758 = vmatpush.bf16.msra.mxu0 %v2518
    %3759 = vmatpush.bf16.msra.mxu0 %v2514
    %3760 = vmatpush.bf16.msra.mxu0 %v2510
    %3761 = vmatpush.bf16.msra.mxu0 %v2506
    %3762 = vmatmul.bf16.gmra.mxu0 %v119
    %v3763 = vpop.f32.mrf.mxu0
    %v3764 = vadd.f32 %v3751, %v3763
    %v3765 = vpop.f32.mrf.mxu0
    %3766 = vdwg.mxu0
    %3767 = vmatpush.bf16.msra.mxu0 %v2566
    %3768 = vmatpush.bf16.msra.mxu0 %v2562
    %3769 = vmatpush.bf16.msra.mxu0 %v2558
    %3770 = vmatpush.bf16.msra.mxu0 %v2554
    %3771 = vmatpush.bf16.msra.mxu0 %v2550
    %3772 = vmatpush.bf16.msra.mxu0 %v2546
    %3773 = vmatpush.bf16.msra.mxu0 %v2542
    %3774 = vmatpush.bf16.msra.mxu0 %v2538
    %3775 = vmatmul.bf16.gmra.mxu0 %v120
    %v3776 = vpop.f32.mrf.mxu0
    %v3777 = vadd.f32 %v3764, %v3776
    %v3778 = vpop.f32.mrf.mxu0
    %3779 = vdwg.mxu0
    %3780 = vmatpush.bf16.msra.mxu0 %v2598
    %3781 = vmatpush.bf16.msra.mxu0 %v2594
    %3782 = vmatpush.bf16.msra.mxu0 %v2590
    %3783 = vmatpush.bf16.msra.mxu0 %v2586
    %3784 = vmatpush.bf16.msra.mxu0 %v2582
    %3785 = vmatpush.bf16.msra.mxu0 %v2578
    %3786 = vmatpush.bf16.msra.mxu0 %v2574
    %3787 = vmatpush.bf16.msra.mxu0 %v2570
    %3788 = vmatmul.bf16.gmra.mxu0 %v121
    %v3789 = vpop.f32.mrf.mxu0
    %v3790 = vadd.f32 %v3777, %v3789
    %v3791 = vpop.f32.mrf.mxu0
    %3792 = vdwg.mxu0
    %3793 = vmatpush.bf16.msra.mxu0 %v2630
    %3794 = vmatpush.bf16.msra.mxu0 %v2626
    %3795 = vmatpush.bf16.msra.mxu0 %v2622
    %3796 = vmatpush.bf16.msra.mxu0 %v2618
    %3797 = vmatpush.bf16.msra.mxu0 %v2614
    %3798 = vmatpush.bf16.msra.mxu0 %v2610
    %3799 = vmatpush.bf16.msra.mxu0 %v2606
    %3800 = vmatpush.bf16.msra.mxu0 %v2602
    %3801 = vmatmul.bf16.gmra.mxu0 %v122
    %v3802 = vpop.f32.mrf.mxu0
    %v3803 = vadd.f32 %v3790, %v3802
    %v3804 = vpop.f32.mrf.mxu0
    %3805 = vdwg.mxu0
    %3806 = vmatpush.bf16.msra.mxu0 %v2662
    %3807 = vmatpush.bf16.msra.mxu0 %v2658
    %3808 = vmatpush.bf16.msra.mxu0 %v2654
    %3809 = vmatpush.bf16.msra.mxu0 %v2650
    %3810 = vmatpush.bf16.msra.mxu0 %v2646
    %3811 = vmatpush.bf16.msra.mxu0 %v2642
    %3812 = vmatpush.bf16.msra.mxu0 %v2638
    %3813 = vmatpush.bf16.msra.mxu0 %v2634
    %3814 = vmatmul.bf16.gmra.mxu0 %v123
    %v3815 = vpop.f32.mrf.mxu0
    %v3816 = vadd.f32 %v3803, %v3815
    %v3817 = vpop.f32.mrf.mxu0
    %3818 = vdwg.mxu0
    %3819 = vmatpush.bf16.msra.mxu0 %v2694
    %3820 = vmatpush.bf16.msra.mxu0 %v2690
    %3821 = vmatpush.bf16.msra.mxu0 %v2686
    %3822 = vmatpush.bf16.msra.mxu0 %v2682
    %3823 = vmatpush.bf16.msra.mxu0 %v2678
    %3824 = vmatpush.bf16.msra.mxu0 %v2674
    %3825 = vmatpush.bf16.msra.mxu0 %v2670
    %3826 = vmatpush.bf16.msra.mxu0 %v2666
    %3827 = vmatmul.bf16.gmra.mxu0 %v124
    %v3828 = vpop.f32.mrf.mxu0
    %v3829 = vadd.f32 %v3816, %v3828
    %v3830 = vpop.f32.mrf.mxu0
    %3831 = vdwg.mxu0
    %3832 = vmatpush.bf16.msra.mxu0 %v2215
    %3833 = vmatpush.bf16.msra.mxu0 %v2211
    %3834 = vmatpush.bf16.msra.mxu0 %v2207
    %3835 = vmatpush.bf16.msra.mxu0 %v2203
    %3836 = vmatpush.bf16.msra.mxu0 %v2199
    %3837 = vmatpush.bf16.msra.mxu0 %v2195
    %3838 = vmatpush.bf16.msra.mxu0 %v2191
    %3839 = vmatpush.bf16.msra.mxu0 %v2187
    %3840 = vmatmul.bf16.gmra.mxu0 %v109
    %v3841 = vpop.f32.mrf.mxu0
    %v3842 = vadd.f32 %v643, %v3841
    %v3843 = vpop.f32.mrf.mxu0
    %3844 = vdwg.mxu0
    %3845 = vmatpush.bf16.msra.mxu0 %v2247
    %3846 = vmatpush.bf16.msra.mxu0 %v2243
    %3847 = vmatpush.bf16.msra.mxu0 %v2239
    %3848 = vmatpush.bf16.msra.mxu0 %v2235
    %3849 = vmatpush.bf16.msra.mxu0 %v2231
    %3850 = vmatpush.bf16.msra.mxu0 %v2227
    %3851 = vmatpush.bf16.msra.mxu0 %v2223
    %3852 = vmatpush.bf16.msra.mxu0 %v2219
    %3853 = vmatmul.bf16.gmra.mxu0 %v110
    %v3854 = vpop.f32.mrf.mxu0
    %v3855 = vadd.f32 %v3842, %v3854
    %v3856 = vpop.f32.mrf.mxu0
    %3857 = vdwg.mxu0
    %3858 = vmatpush.bf16.msra.mxu0 %v2279
    %3859 = vmatpush.bf16.msra.mxu0 %v2275
    %3860 = vmatpush.bf16.msra.mxu0 %v2271
    %3861 = vmatpush.bf16.msra.mxu0 %v2267
    %3862 = vmatpush.bf16.msra.mxu0 %v2263
    %3863 = vmatpush.bf16.msra.mxu0 %v2259
    %3864 = vmatpush.bf16.msra.mxu0 %v2255
    %3865 = vmatpush.bf16.msra.mxu0 %v2251
    %3866 = vmatmul.bf16.gmra.mxu0 %v111
    %v3867 = vpop.f32.mrf.mxu0
    %v3868 = vadd.f32 %v3855, %v3867
    %v3869 = vpop.f32.mrf.mxu0
    %3870 = vdwg.mxu0
    %3871 = vmatpush.bf16.msra.mxu0 %v2311
    %3872 = vmatpush.bf16.msra.mxu0 %v2307
    %3873 = vmatpush.bf16.msra.mxu0 %v2303
    %3874 = vmatpush.bf16.msra.mxu0 %v2299
    %3875 = vmatpush.bf16.msra.mxu0 %v2295
    %3876 = vmatpush.bf16.msra.mxu0 %v2291
    %3877 = vmatpush.bf16.msra.mxu0 %v2287
    %3878 = vmatpush.bf16.msra.mxu0 %v2283
    %3879 = vmatmul.bf16.gmra.mxu0 %v112
    %v3880 = vpop.f32.mrf.mxu0
    %v3881 = vadd.f32 %v3868, %v3880
    %v3882 = vpop.f32.mrf.mxu0
    %3883 = vdwg.mxu0
    %3884 = vmatpush.bf16.msra.mxu0 %v2343
    %3885 = vmatpush.bf16.msra.mxu0 %v2339
    %3886 = vmatpush.bf16.msra.mxu0 %v2335
    %3887 = vmatpush.bf16.msra.mxu0 %v2331
    %3888 = vmatpush.bf16.msra.mxu0 %v2327
    %3889 = vmatpush.bf16.msra.mxu0 %v2323
    %3890 = vmatpush.bf16.msra.mxu0 %v2319
    %3891 = vmatpush.bf16.msra.mxu0 %v2315
    %3892 = vmatmul.bf16.gmra.mxu0 %v113
    %v3893 = vpop.f32.mrf.mxu0
    %v3894 = vadd.f32 %v3881, %v3893
    %v3895 = vpop.f32.mrf.mxu0
    %3896 = vdwg.mxu0
    %3897 = vmatpush.bf16.msra.mxu0 %v2375
    %3898 = vmatpush.bf16.msra.mxu0 %v2371
    %3899 = vmatpush.bf16.msra.mxu0 %v2367
    %3900 = vmatpush.bf16.msra.mxu0 %v2363
    %3901 = vmatpush.bf16.msra.mxu0 %v2359
    %3902 = vmatpush.bf16.msra.mxu0 %v2355
    %3903 = vmatpush.bf16.msra.mxu0 %v2351
    %3904 = vmatpush.bf16.msra.mxu0 %v2347
    %3905 = vmatmul.bf16.gmra.mxu0 %v114
    %v3906 = vpop.f32.mrf.mxu0
    %v3907 = vadd.f32 %v3894, %v3906
    %v3908 = vpop.f32.mrf.mxu0
    %3909 = vdwg.mxu0
    %3910 = vmatpush.bf16.msra.mxu0 %v2407
    %3911 = vmatpush.bf16.msra.mxu0 %v2403
    %3912 = vmatpush.bf16.msra.mxu0 %v2399
    %3913 = vmatpush.bf16.msra.mxu0 %v2395
    %3914 = vmatpush.bf16.msra.mxu0 %v2391
    %3915 = vmatpush.bf16.msra.mxu0 %v2387
    %3916 = vmatpush.bf16.msra.mxu0 %v2383
    %3917 = vmatpush.bf16.msra.mxu0 %v2379
    %3918 = vmatmul.bf16.gmra.mxu0 %v115
    %v3919 = vpop.f32.mrf.mxu0
    %v3920 = vadd.f32 %v3907, %v3919
    %v3921 = vpop.f32.mrf.mxu0
    %3922 = vdwg.mxu0
    %3923 = vmatpush.bf16.msra.mxu0 %v2439
    %3924 = vmatpush.bf16.msra.mxu0 %v2435
    %3925 = vmatpush.bf16.msra.mxu0 %v2431
    %3926 = vmatpush.bf16.msra.mxu0 %v2427
    %3927 = vmatpush.bf16.msra.mxu0 %v2423
    %3928 = vmatpush.bf16.msra.mxu0 %v2419
    %3929 = vmatpush.bf16.msra.mxu0 %v2415
    %3930 = vmatpush.bf16.msra.mxu0 %v2411
    %3931 = vmatmul.bf16.gmra.mxu0 %v116
    %v3932 = vpop.f32.mrf.mxu0
    %v3933 = vadd.f32 %v3920, %v3932
    %v3934 = vpop.f32.mrf.mxu0
    %3935 = vdwg.mxu0
    %3936 = vmatpush.bf16.msra.mxu0 %v2471
    %3937 = vmatpush.bf16.msra.mxu0 %v2467
    %3938 = vmatpush.bf16.msra.mxu0 %v2463
    %3939 = vmatpush.bf16.msra.mxu0 %v2459
    %3940 = vmatpush.bf16.msra.mxu0 %v2455
    %3941 = vmatpush.bf16.msra.mxu0 %v2451
    %3942 = vmatpush.bf16.msra.mxu0 %v2447
    %3943 = vmatpush.bf16.msra.mxu0 %v2443
    %3944 = vmatmul.bf16.gmra.mxu0 %v117
    %v3945 = vpop.f32.mrf.mxu0
    %v3946 = vadd.f32 %v3933, %v3945
    %v3947 = vpop.f32.mrf.mxu0
    %3948 = vdwg.mxu0
    %3949 = vmatpush.bf16.msra.mxu0 %v2503
    %3950 = vmatpush.bf16.msra.mxu0 %v2499
    %3951 = vmatpush.bf16.msra.mxu0 %v2495
    %3952 = vmatpush.bf16.msra.mxu0 %v2491
    %3953 = vmatpush.bf16.msra.mxu0 %v2487
    %3954 = vmatpush.bf16.msra.mxu0 %v2483
    %3955 = vmatpush.bf16.msra.mxu0 %v2479
    %3956 = vmatpush.bf16.msra.mxu0 %v2475
    %3957 = vmatmul.bf16.gmra.mxu0 %v118
    %v3958 = vpop.f32.mrf.mxu0
    %v3959 = vadd.f32 %v3946, %v3958
    %v3960 = vpop.f32.mrf.mxu0
    %3961 = vdwg.mxu0
    %3962 = vmatpush.bf16.msra.mxu0 %v2535
    %3963 = vmatpush.bf16.msra.mxu0 %v2531
    %3964 = vmatpush.bf16.msra.mxu0 %v2527
    %3965 = vmatpush.bf16.msra.mxu0 %v2523
    %3966 = vmatpush.bf16.msra.mxu0 %v2519
    %3967 = vmatpush.bf16.msra.mxu0 %v2515
    %3968 = vmatpush.bf16.msra.mxu0 %v2511
    %3969 = vmatpush.bf16.msra.mxu0 %v2507
    %3970 = vmatmul.bf16.gmra.mxu0 %v119
    %v3971 = vpop.f32.mrf.mxu0
    %v3972 = vadd.f32 %v3959, %v3971
    %v3973 = vpop.f32.mrf.mxu0
    %3974 = vdwg.mxu0
    %3975 = vmatpush.bf16.msra.mxu0 %v2567
    %3976 = vmatpush.bf16.msra.mxu0 %v2563
    %3977 = vmatpush.bf16.msra.mxu0 %v2559
    %3978 = vmatpush.bf16.msra.mxu0 %v2555
    %3979 = vmatpush.bf16.msra.mxu0 %v2551
    %3980 = vmatpush.bf16.msra.mxu0 %v2547
    %3981 = vmatpush.bf16.msra.mxu0 %v2543
    %3982 = vmatpush.bf16.msra.mxu0 %v2539
    %3983 = vmatmul.bf16.gmra.mxu0 %v120
    %v3984 = vpop.f32.mrf.mxu0
    %v3985 = vadd.f32 %v3972, %v3984
    %v3986 = vpop.f32.mrf.mxu0
    %3987 = vdwg.mxu0
    %3988 = vmatpush.bf16.msra.mxu0 %v2599
    %3989 = vmatpush.bf16.msra.mxu0 %v2595
    %3990 = vmatpush.bf16.msra.mxu0 %v2591
    %3991 = vmatpush.bf16.msra.mxu0 %v2587
    %3992 = vmatpush.bf16.msra.mxu0 %v2583
    %3993 = vmatpush.bf16.msra.mxu0 %v2579
    %3994 = vmatpush.bf16.msra.mxu0 %v2575
    %3995 = vmatpush.bf16.msra.mxu0 %v2571
    %3996 = vmatmul.bf16.gmra.mxu0 %v121
    %v3997 = vpop.f32.mrf.mxu0
    %v3998 = vadd.f32 %v3985, %v3997
    %v3999 = vpop.f32.mrf.mxu0
    %4000 = vdwg.mxu0
    %4001 = vmatpush.bf16.msra.mxu0 %v2631
    %4002 = vmatpush.bf16.msra.mxu0 %v2627
    %4003 = vmatpush.bf16.msra.mxu0 %v2623
    %4004 = vmatpush.bf16.msra.mxu0 %v2619
    %4005 = vmatpush.bf16.msra.mxu0 %v2615
    %4006 = vmatpush.bf16.msra.mxu0 %v2611
    %4007 = vmatpush.bf16.msra.mxu0 %v2607
    %4008 = vmatpush.bf16.msra.mxu0 %v2603
    %4009 = vmatmul.bf16.gmra.mxu0 %v122
    %v4010 = vpop.f32.mrf.mxu0
    %v4011 = vadd.f32 %v3998, %v4010
    %v4012 = vpop.f32.mrf.mxu0
    %4013 = vdwg.mxu0
    %4014 = vmatpush.bf16.msra.mxu0 %v2663
    %4015 = vmatpush.bf16.msra.mxu0 %v2659
    %4016 = vmatpush.bf16.msra.mxu0 %v2655
    %4017 = vmatpush.bf16.msra.mxu0 %v2651
    %4018 = vmatpush.bf16.msra.mxu0 %v2647
    %4019 = vmatpush.bf16.msra.mxu0 %v2643
    %4020 = vmatpush.bf16.msra.mxu0 %v2639
    %4021 = vmatpush.bf16.msra.mxu0 %v2635
    %4022 = vmatmul.bf16.gmra.mxu0 %v123
    %v4023 = vpop.f32.mrf.mxu0
    %v4024 = vadd.f32 %v4011, %v4023
    %v4025 = vpop.f32.mrf.mxu0
    %4026 = vdwg.mxu0
    %4027 = vmatpush.bf16.msra.mxu0 %v2695
    %4028 = vmatpush.bf16.msra.mxu0 %v2691
    %4029 = vmatpush.bf16.msra.mxu0 %v2687
    %4030 = vmatpush.bf16.msra.mxu0 %v2683
    %4031 = vmatpush.bf16.msra.mxu0 %v2679
    %4032 = vmatpush.bf16.msra.mxu0 %v2675
    %4033 = vmatpush.bf16.msra.mxu0 %v2671
    %4034 = vmatpush.bf16.msra.mxu0 %v2667
    %4035 = vmatmul.bf16.gmra.mxu0 %v124
    %v4036 = vpop.f32.mrf.mxu0
    %v4037 = vadd.f32 %v4024, %v4036
    %v4038 = vpop.f32.mrf.mxu0
    %4039 = vdwg.mxu0
    %v4040 = vmax.f32 %v3413, 0.0
    %v4041 = vmax.f32 %v3621, 0.0
    %v4042 = vmax.f32 %v3829, 0.0
    %v4043 = vmax.f32 %v4037, 0.0
    %v4044 = vpack.c.bf16 %v4040, %v4040
    %v4045 = vpack.c.bf16 %v4041, %v4041
    %v4046 = vpack.c.bf16 %v4042, %v4042
    %v4047 = vpack.c.bf16 %v4043, %v4043
    %v4048 = vld [vmem:[#allocation8] sm:$0xff]
    %v4049 = vld [vmem:[#allocation8 + $0x8] sm:$0xff]
    %v4050 = vld [vmem:[#allocation8 + $0x10] sm:$0xff]
    %v4051 = vld [vmem:[#allocation8 + $0x18] sm:$0xff]
    %v4052 = vld [vmem:[#allocation8 + $0x20] sm:$0xff]
    %v4053 = vld [vmem:[#allocation8 + $0x28] sm:$0xff]
    %v4054 = vld [vmem:[#allocation8 + $0x30] sm:$0xff]
    %v4055 = vld [vmem:[#allocation8 + $0x38] sm:$0xff]
    %v4056 = vld [vmem:[#allocation8 + $0x40] sm:$0xff]
    %v4057 = vld [vmem:[#allocation8 + $0x48] sm:$0xff]
    %v4058 = vld [vmem:[#allocation8 + $0x50] sm:$0xff]
    %v4059 = vld [vmem:[#allocation8 + $0x58] sm:$0xff]
    %v4060 = vld [vmem:[#allocation8 + $0x60] sm:$0xff]
    %v4061 = vld [vmem:[#allocation8 + $0x68] sm:$0xff]
    %v4062 = vld [vmem:[#allocation8 + $0x70] sm:$0xff]
    %v4063 = vld [vmem:[#allocation8 + $0x78] sm:$0xff]
    %v4064 = vld [vmem:[#allocation8 + $0x80] sm:$0xff]
    %v4065 = vld [vmem:[#allocation8 + $0x88] sm:$0xff]
    %v4066 = vld [vmem:[#allocation8 + $0x90] sm:$0xff]
    %v4067 = vld [vmem:[#allocation8 + $0x98] sm:$0xff]
    %v4068 = vld [vmem:[#allocation8 + $0xa0] sm:$0xff]
    %v4069 = vld [vmem:[#allocation8 + $0xa8] sm:$0xff]
    %v4070 = vld [vmem:[#allocation8 + $0xb0] sm:$0xff]
    %v4071 = vld [vmem:[#allocation8 + $0xb8] sm:$0xff]
    %v4072 = vld [vmem:[#allocation8 + $0xc0] sm:$0xff]
    %v4073 = vld [vmem:[#allocation8 + $0xc8] sm:$0xff]
    %v4074 = vld [vmem:[#allocation8 + $0xd0] sm:$0xff]
    %v4075 = vld [vmem:[#allocation8 + $0xd8] sm:$0xff]
    %v4076 = vld [vmem:[#allocation8 + $0xe0] sm:$0xff]
    %v4077 = vld [vmem:[#allocation8 + $0xe8] sm:$0xff]
    %v4078 = vld [vmem:[#allocation8 + $0xf0] sm:$0xff]
    %v4079 = vld [vmem:[#allocation8 + $0xf8] sm:$0xff]
    %v4080 = vld [vmem:[#allocation8 + $0x100] sm:$0xff]
    %v4081 = vld [vmem:[#allocation8 + $0x108] sm:$0xff]
    %v4082 = vld [vmem:[#allocation8 + $0x110] sm:$0xff]
    %v4083 = vld [vmem:[#allocation8 + $0x118] sm:$0xff]
    %v4084 = vld [vmem:[#allocation8 + $0x120] sm:$0xff]
    %v4085 = vld [vmem:[#allocation8 + $0x128] sm:$0xff]
    %v4086 = vld [vmem:[#allocation8 + $0x130] sm:$0xff]
    %v4087 = vld [vmem:[#allocation8 + $0x138] sm:$0xff]
    %v4088 = vld [vmem:[#allocation8 + $0x140] sm:$0xff]
    %v4089 = vld [vmem:[#allocation8 + $0x148] sm:$0xff]
    %v4090 = vld [vmem:[#allocation8 + $0x150] sm:$0xff]
    %v4091 = vld [vmem:[#allocation8 + $0x158] sm:$0xff]
    %v4092 = vld [vmem:[#allocation8 + $0x160] sm:$0xff]
    %v4093 = vld [vmem:[#allocation8 + $0x168] sm:$0xff]
    %v4094 = vld [vmem:[#allocation8 + $0x170] sm:$0xff]
    %v4095 = vld [vmem:[#allocation8 + $0x178] sm:$0xff]
    %v4096 = vld [vmem:[#allocation8 + $0x180] sm:$0xff]
    %v4097 = vld [vmem:[#allocation8 + $0x188] sm:$0xff]
    %v4098 = vld [vmem:[#allocation8 + $0x190] sm:$0xff]
    %v4099 = vld [vmem:[#allocation8 + $0x198] sm:$0xff]
    %v4100 = vld [vmem:[#allocation8 + $0x1a0] sm:$0xff]
    %v4101 = vld [vmem:[#allocation8 + $0x1a8] sm:$0xff]
    %v4102 = vld [vmem:[#allocation8 + $0x1b0] sm:$0xff]
    %v4103 = vld [vmem:[#allocation8 + $0x1b8] sm:$0xff]
    %v4104 = vld [vmem:[#allocation8 + $0x1c0] sm:$0xff]
    %v4105 = vld [vmem:[#allocation8 + $0x1c8] sm:$0xff]
    %v4106 = vld [vmem:[#allocation8 + $0x1d0] sm:$0xff]
    %v4107 = vld [vmem:[#allocation8 + $0x1d8] sm:$0xff]
    %v4108 = vld [vmem:[#allocation8 + $0x1e0] sm:$0xff]
    %v4109 = vld [vmem:[#allocation8 + $0x1e8] sm:$0xff]
    %v4110 = vld [vmem:[#allocation8 + $0x1f0] sm:$0xff]
    %v4111 = vld [vmem:[#allocation8 + $0x1f8] sm:$0xff]
    %v4113 = vperm.slane %v126, 0
    %v4114 = vperm.slane %v126, 1
    %v4181 = vunpack.c.l.b16 %v4048
    %v4182 = vunpack.c.h.b16 %v4048
    %v4183 = vunpack.c.l.b16 %v4049
    %v4184 = vunpack.c.h.b16 %v4049
    %v4185 = vunpack.c.l.b16 %v4050
    %v4186 = vunpack.c.h.b16 %v4050
    %v4187 = vunpack.c.l.b16 %v4051
    %v4188 = vunpack.c.h.b16 %v4051
    %v4189 = vunpack.c.l.b16 %v4052
    %v4190 = vunpack.c.h.b16 %v4052
    %v4191 = vunpack.c.l.b16 %v4053
    %v4192 = vunpack.c.h.b16 %v4053
    %v4193 = vunpack.c.l.b16 %v4054
    %v4194 = vunpack.c.h.b16 %v4054
    %v4195 = vunpack.c.l.b16 %v4055
    %v4196 = vunpack.c.h.b16 %v4055
    %v4197 = vunpack.c.l.b16 %v4056
    %v4198 = vunpack.c.h.b16 %v4056
    %v4199 = vunpack.c.l.b16 %v4057
    %v4200 = vunpack.c.h.b16 %v4057
    %v4201 = vunpack.c.l.b16 %v4058
    %v4202 = vunpack.c.h.b16 %v4058
    %v4203 = vunpack.c.l.b16 %v4059
    %v4204 = vunpack.c.h.b16 %v4059
    %v4205 = vunpack.c.l.b16 %v4060
    %v4206 = vunpack.c.h.b16 %v4060
    %v4207 = vunpack.c.l.b16 %v4061
    %v4208 = vunpack.c.h.b16 %v4061
    %v4209 = vunpack.c.l.b16 %v4062
    %v4210 = vunpack.c.h.b16 %v4062
    %v4211 = vunpack.c.l.b16 %v4063
    %v4212 = vunpack.c.h.b16 %v4063
    %v4213 = vunpack.c.l.b16 %v4064
    %v4214 = vunpack.c.h.b16 %v4064
    %v4215 = vunpack.c.l.b16 %v4065
    %v4216 = vunpack.c.h.b16 %v4065
    %v4217 = vunpack.c.l.b16 %v4066
    %v4218 = vunpack.c.h.b16 %v4066
    %v4219 = vunpack.c.l.b16 %v4067
    %v4220 = vunpack.c.h.b16 %v4067
    %v4221 = vunpack.c.l.b16 %v4068
    %v4222 = vunpack.c.h.b16 %v4068
    %v4223 = vunpack.c.l.b16 %v4069
    %v4224 = vunpack.c.h.b16 %v4069
    %v4225 = vunpack.c.l.b16 %v4070
    %v4226 = vunpack.c.h.b16 %v4070
    %v4227 = vunpack.c.l.b16 %v4071
    %v4228 = vunpack.c.h.b16 %v4071
    %v4229 = vunpack.c.l.b16 %v4072
    %v4230 = vunpack.c.h.b16 %v4072
    %v4231 = vunpack.c.l.b16 %v4073
    %v4232 = vunpack.c.h.b16 %v4073
    %v4233 = vunpack.c.l.b16 %v4074
    %v4234 = vunpack.c.h.b16 %v4074
    %v4235 = vunpack.c.l.b16 %v4075
    %v4236 = vunpack.c.h.b16 %v4075
    %v4237 = vunpack.c.l.b16 %v4076
    %v4238 = vunpack.c.h.b16 %v4076
    %v4239 = vunpack.c.l.b16 %v4077
    %v4240 = vunpack.c.h.b16 %v4077
    %v4241 = vunpack.c.l.b16 %v4078
    %v4242 = vunpack.c.h.b16 %v4078
    %v4243 = vunpack.c.l.b16 %v4079
    %v4244 = vunpack.c.h.b16 %v4079
    %v4245 = vunpack.c.l.b16 %v4080
    %v4246 = vunpack.c.h.b16 %v4080
    %v4247 = vunpack.c.l.b16 %v4081
    %v4248 = vunpack.c.h.b16 %v4081
    %v4249 = vunpack.c.l.b16 %v4082
    %v4250 = vunpack.c.h.b16 %v4082
    %v4251 = vunpack.c.l.b16 %v4083
    %v4252 = vunpack.c.h.b16 %v4083
    %v4253 = vunpack.c.l.b16 %v4084
    %v4254 = vunpack.c.h.b16 %v4084
    %v4255 = vunpack.c.l.b16 %v4085
    %v4256 = vunpack.c.h.b16 %v4085
    %v4257 = vunpack.c.l.b16 %v4086
    %v4258 = vunpack.c.h.b16 %v4086
    %v4259 = vunpack.c.l.b16 %v4087
    %v4260 = vunpack.c.h.b16 %v4087
    %v4261 = vunpack.c.l.b16 %v4088
    %v4262 = vunpack.c.h.b16 %v4088
    %v4263 = vunpack.c.l.b16 %v4089
    %v4264 = vunpack.c.h.b16 %v4089
    %v4265 = vunpack.c.l.b16 %v4090
    %v4266 = vunpack.c.h.b16 %v4090
    %v4267 = vunpack.c.l.b16 %v4091
    %v4268 = vunpack.c.h.b16 %v4091
    %v4269 = vunpack.c.l.b16 %v4092
    %v4270 = vunpack.c.h.b16 %v4092
    %v4271 = vunpack.c.l.b16 %v4093
    %v4272 = vunpack.c.h.b16 %v4093
    %v4273 = vunpack.c.l.b16 %v4094
    %v4274 = vunpack.c.h.b16 %v4094
    %v4275 = vunpack.c.l.b16 %v4095
    %v4276 = vunpack.c.h.b16 %v4095
    %v4277 = vunpack.c.l.b16 %v4096
    %v4278 = vunpack.c.h.b16 %v4096
    %v4279 = vunpack.c.l.b16 %v4097
    %v4280 = vunpack.c.h.b16 %v4097
    %v4281 = vunpack.c.l.b16 %v4098
    %v4282 = vunpack.c.h.b16 %v4098
    %v4283 = vunpack.c.l.b16 %v4099
    %v4284 = vunpack.c.h.b16 %v4099
    %v4285 = vunpack.c.l.b16 %v4100
    %v4286 = vunpack.c.h.b16 %v4100
    %v4287 = vunpack.c.l.b16 %v4101
    %v4288 = vunpack.c.h.b16 %v4101
    %v4289 = vunpack.c.l.b16 %v4102
    %v4290 = vunpack.c.h.b16 %v4102
    %v4291 = vunpack.c.l.b16 %v4103
    %v4292 = vunpack.c.h.b16 %v4103
    %v4293 = vunpack.c.l.b16 %v4104
    %v4294 = vunpack.c.h.b16 %v4104
    %v4295 = vunpack.c.l.b16 %v4105
    %v4296 = vunpack.c.h.b16 %v4105
    %v4297 = vunpack.c.l.b16 %v4106
    %v4298 = vunpack.c.h.b16 %v4106
    %v4299 = vunpack.c.l.b16 %v4107
    %v4300 = vunpack.c.h.b16 %v4107
    %v4301 = vunpack.c.l.b16 %v4108
    %v4302 = vunpack.c.h.b16 %v4108
    %v4303 = vunpack.c.l.b16 %v4109
    %v4304 = vunpack.c.h.b16 %v4109
    %v4305 = vunpack.c.l.b16 %v4110
    %v4306 = vunpack.c.h.b16 %v4110
    %v4307 = vunpack.c.l.b16 %v4111
    %v4308 = vunpack.c.h.b16 %v4111
    %v4309 = vpack.c.b16 %v4183, %v4181
    %v4310 = vpack.c.b16 %v4184, %v4182
    %v4311 = vpack.c.b16 %v4187, %v4185
    %v4312 = vpack.c.b16 %v4188, %v4186
    %v4313 = vpack.c.b16 %v4191, %v4189
    %v4314 = vpack.c.b16 %v4192, %v4190
    %v4315 = vpack.c.b16 %v4195, %v4193
    %v4316 = vpack.c.b16 %v4196, %v4194
    %v4317 = vpack.c.b16 %v4199, %v4197
    %v4318 = vpack.c.b16 %v4200, %v4198
    %v4319 = vpack.c.b16 %v4203, %v4201
    %v4320 = vpack.c.b16 %v4204, %v4202
    %v4321 = vpack.c.b16 %v4207, %v4205
    %v4322 = vpack.c.b16 %v4208, %v4206
    %v4323 = vpack.c.b16 %v4211, %v4209
    %v4324 = vpack.c.b16 %v4212, %v4210
    %v4325 = vpack.c.b16 %v4215, %v4213
    %v4326 = vpack.c.b16 %v4216, %v4214
    %v4327 = vpack.c.b16 %v4219, %v4217
    %v4328 = vpack.c.b16 %v4220, %v4218
    %v4329 = vpack.c.b16 %v4223, %v4221
    %v4330 = vpack.c.b16 %v4224, %v4222
    %v4331 = vpack.c.b16 %v4227, %v4225
    %v4332 = vpack.c.b16 %v4228, %v4226
    %v4333 = vpack.c.b16 %v4231, %v4229
    %v4334 = vpack.c.b16 %v4232, %v4230
    %v4335 = vpack.c.b16 %v4235, %v4233
    %v4336 = vpack.c.b16 %v4236, %v4234
    %v4337 = vpack.c.b16 %v4239, %v4237
    %v4338 = vpack.c.b16 %v4240, %v4238
    %v4339 = vpack.c.b16 %v4243, %v4241
    %v4340 = vpack.c.b16 %v4244, %v4242
    %v4341 = vpack.c.b16 %v4247, %v4245
    %v4342 = vpack.c.b16 %v4248, %v4246
    %v4343 = vpack.c.b16 %v4251, %v4249
    %v4344 = vpack.c.b16 %v4252, %v4250
    %v4345 = vpack.c.b16 %v4255, %v4253
    %v4346 = vpack.c.b16 %v4256, %v4254
    %v4347 = vpack.c.b16 %v4259, %v4257
    %v4348 = vpack.c.b16 %v4260, %v4258
    %v4349 = vpack.c.b16 %v4263, %v4261
    %v4350 = vpack.c.b16 %v4264, %v4262
    %v4351 = vpack.c.b16 %v4267, %v4265
    %v4352 = vpack.c.b16 %v4268, %v4266
    %v4353 = vpack.c.b16 %v4271, %v4269
    %v4354 = vpack.c.b16 %v4272, %v4270
    %v4355 = vpack.c.b16 %v4275, %v4273
    %v4356 = vpack.c.b16 %v4276, %v4274
    %v4357 = vpack.c.b16 %v4279, %v4277
    %v4358 = vpack.c.b16 %v4280, %v4278
    %v4359 = vpack.c.b16 %v4283, %v4281
    %v4360 = vpack.c.b16 %v4284, %v4282
    %v4361 = vpack.c.b16 %v4287, %v4285
    %v4362 = vpack.c.b16 %v4288, %v4286
    %v4363 = vpack.c.b16 %v4291, %v4289
    %v4364 = vpack.c.b16 %v4292, %v4290
    %v4365 = vpack.c.b16 %v4295, %v4293
    %v4366 = vpack.c.b16 %v4296, %v4294
    %v4367 = vpack.c.b16 %v4299, %v4297
    %v4368 = vpack.c.b16 %v4300, %v4298
    %v4369 = vpack.c.b16 %v4303, %v4301
    %v4370 = vpack.c.b16 %v4304, %v4302
    %v4371 = vpack.c.b16 %v4307, %v4305
    %v4372 = vpack.c.b16 %v4308, %v4306
    %4437 = vmatpush.bf16.msra.mxu0 %v4323
    %4438 = vmatpush.bf16.msra.mxu0 %v4321
    %4439 = vmatpush.bf16.msra.mxu0 %v4319
    %4440 = vmatpush.bf16.msra.mxu0 %v4317
    %4441 = vmatpush.bf16.msra.mxu0 %v4315
    %4442 = vmatpush.bf16.msra.mxu0 %v4313
    %4443 = vmatpush.bf16.msra.mxu0 %v4311
    %4444 = vmatpush.bf16.msra.mxu0 %v4309
    %4445 = vmatmul.bf16.gmra.mxu0 %v4044
    %v4446 = vpop.f32.mrf.mxu0
    %v4447 = vadd.f32 %v4113, %v4446
    %v4448 = vpop.f32.mrf.mxu0
    %4449 = vdwg.mxu0
    %4450 = vmatpush.bf16.msra.mxu0 %v4339
    %4451 = vmatpush.bf16.msra.mxu0 %v4337
    %4452 = vmatpush.bf16.msra.mxu0 %v4335
    %4453 = vmatpush.bf16.msra.mxu0 %v4333
    %4454 = vmatpush.bf16.msra.mxu0 %v4331
    %4455 = vmatpush.bf16.msra.mxu0 %v4329
    %4456 = vmatpush.bf16.msra.mxu0 %v4327
    %4457 = vmatpush.bf16.msra.mxu0 %v4325
    %4458 = vmatmul.bf16.gmra.mxu0 %v4045
    %v4459 = vpop.f32.mrf.mxu0
    %v4460 = vadd.f32 %v4447, %v4459
    %v4461 = vpop.f32.mrf.mxu0
    %4462 = vdwg.mxu0
    %4463 = vmatpush.bf16.msra.mxu0 %v4355
    %4464 = vmatpush.bf16.msra.mxu0 %v4353
    %4465 = vmatpush.bf16.msra.mxu0 %v4351
    %4466 = vmatpush.bf16.msra.mxu0 %v4349
    %4467 = vmatpush.bf16.msra.mxu0 %v4347
    %4468 = vmatpush.bf16.msra.mxu0 %v4345
    %4469 = vmatpush.bf16.msra.mxu0 %v4343
    %4470 = vmatpush.bf16.msra.mxu0 %v4341
    %4471 = vmatmul.bf16.gmra.mxu0 %v4046
    %v4472 = vpop.f32.mrf.mxu0
    %v4473 = vadd.f32 %v4460, %v4472
    %v4474 = vpop.f32.mrf.mxu0
    %4475 = vdwg.mxu0
    %4476 = vmatpush.bf16.msra.mxu0 %v4371
    %4477 = vmatpush.bf16.msra.mxu0 %v4369
    %4478 = vmatpush.bf16.msra.mxu0 %v4367
    %4479 = vmatpush.bf16.msra.mxu0 %v4365
    %4480 = vmatpush.bf16.msra.mxu0 %v4363
    %4481 = vmatpush.bf16.msra.mxu0 %v4361
    %4482 = vmatpush.bf16.msra.mxu0 %v4359
    %4483 = vmatpush.bf16.msra.mxu0 %v4357
    %4484 = vmatmul.bf16.gmra.mxu0 %v4047
    %v4485 = vpop.f32.mrf.mxu0
    %v4486 = vadd.f32 %v4473, %v4485
    %v4487 = vpop.f32.mrf.mxu0
    %4488 = vdwg.mxu0
    %4489 = vmatpush.bf16.msra.mxu0 %v4324
    %4490 = vmatpush.bf16.msra.mxu0 %v4322
    %4491 = vmatpush.bf16.msra.mxu0 %v4320
    %4492 = vmatpush.bf16.msra.mxu0 %v4318
    %4493 = vmatpush.bf16.msra.mxu0 %v4316
    %4494 = vmatpush.bf16.msra.mxu0 %v4314
    %4495 = vmatpush.bf16.msra.mxu0 %v4312
    %4496 = vmatpush.bf16.msra.mxu0 %v4310
    %4497 = vmatmul.bf16.gmra.mxu0 %v4044
    %v4498 = vpop.f32.mrf.mxu0
    %v4499 = vadd.f32 %v4114, %v4498
    %v4500 = vpop.f32.mrf.mxu0
    %4501 = vdwg.mxu0
    %4502 = vmatpush.bf16.msra.mxu0 %v4340
    %4503 = vmatpush.bf16.msra.mxu0 %v4338
    %4504 = vmatpush.bf16.msra.mxu0 %v4336
    %4505 = vmatpush.bf16.msra.mxu0 %v4334
    %4506 = vmatpush.bf16.msra.mxu0 %v4332
    %4507 = vmatpush.bf16.msra.mxu0 %v4330
    %4508 = vmatpush.bf16.msra.mxu0 %v4328
    %4509 = vmatpush.bf16.msra.mxu0 %v4326
    %4510 = vmatmul.bf16.gmra.mxu0 %v4045
    %v4511 = vpop.f32.mrf.mxu0
    %v4512 = vadd.f32 %v4499, %v4511
    %v4513 = vpop.f32.mrf.mxu0
    %4514 = vdwg.mxu0
    %4515 = vmatpush.bf16.msra.mxu0 %v4356
    %4516 = vmatpush.bf16.msra.mxu0 %v4354
    %4517 = vmatpush.bf16.msra.mxu0 %v4352
    %4518 = vmatpush.bf16.msra.mxu0 %v4350
    %4519 = vmatpush.bf16.msra.mxu0 %v4348
    %4520 = vmatpush.bf16.msra.mxu0 %v4346
    %4521 = vmatpush.bf16.msra.mxu0 %v4344
    %4522 = vmatpush.bf16.msra.mxu0 %v4342
    %4523 = vmatmul.bf16.gmra.mxu0 %v4046
    %v4524 = vpop.f32.mrf.mxu0
    %v4525 = vadd.f32 %v4512, %v4524
    %v4526 = vpop.f32.mrf.mxu0
    %4527 = vdwg.mxu0
    %4528 = vmatpush.bf16.msra.mxu0 %v4372
    %4529 = vmatpush.bf16.msra.mxu0 %v4370
    %4530 = vmatpush.bf16.msra.mxu0 %v4368
    %4531 = vmatpush.bf16.msra.mxu0 %v4366
    %4532 = vmatpush.bf16.msra.mxu0 %v4364
    %4533 = vmatpush.bf16.msra.mxu0 %v4362
    %4534 = vmatpush.bf16.msra.mxu0 %v4360
    %4535 = vmatpush.bf16.msra.mxu0 %v4358
    %4536 = vmatmul.bf16.gmra.mxu0 %v4047
    %v4537 = vpop.f32.mrf.mxu0
    %v4538 = vadd.f32 %v4525, %v4537
    %v4539 = vpop.f32.mrf.mxu0
    %4540 = vdwg.mxu0
    %v4541 = vmul.f32 %v4486, %v4486
    %v4542 = vmul.f32 %v4538, %v4538
    %v4543 = vadd.f32 %v4541, %v4542
    %4544 = vadd.xlane.f32.xlu0 %v4543
    %v4545 = vpop.xlane.xlu0 %4544
    %v4546 = vmax.f32 %v4545, 1e-24
    %v4547 = vrsqrt.pop %v4546
    %v4548 = vmul.f32 %v4547, %v4546
    %v4549 = vmul.f32 %v4548, %v4547
    %v4550 = vmul.f32 0.5, %v4549
    %v4551 = vsub.f32 1.5, %v4550
    %v4552 = vmul.f32 %v4547, %v4551
    %vm4553 = vweird.f32 %v4546
    %vm4554 = vweird.f32 %v4547
    %vm4555 = vmor %vm4553, %vm4554
    %v4556 = vsel %vm4555, %v4547, %v4552
    %v4557 = vmul.f32 %v4486, %v4556
    %v4558 = vmul.f32 %v4538, %v4556
    %4559 = vst [vmem:[#allocation11] sm:$0xff] %v4557
    %4560 = vst [vmem:[#allocation11 + $0x8] sm:$0xff] %v4558
    // Predicated region
    $region42: #{simclr_forward.1} parent=1 // pred_check
      _
    $region43: #{simclr_forward.1} parent=1 // pred_check_branch
      %4562 = sbr.rel (0) target = $region45
    $region44: #{simclr_forward.1} parent=1 // pred_region
      %4564 = vsyncadd [#allocation4], 0
      %s4566 = sshll.u32 [#allocation11], 4
      %s4567 = int_to_ptr.vmem [resolvable:$true] %s4566
      %s4568 = sshll.u32 %s5, 4
      %s4569 = int_to_ptr.hbm [resolvable:$true] %s4568
      %4571 = dma.vmem_to_hbm [thread:$0]  %s4567, 256, %s4569, [#allocation4]
    $region45: #{simclr_forward.1} parent=1 // pred_fallthru
      _
    // Predicated region
    $region46: #{simclr_forward.1} parent=1 // pred_check
      _
    $region47: #{simclr_forward.1} parent=1 // pred_check_branch
      %4573 = sbr.rel (0) target = $region49
    $region48: #{simclr_forward.1} parent=1 // pred_region
      %4575 = dma.done [#allocation4], 256
    $region49: #{simclr_forward.1} parent=1 // pred_fallthru
      _
    %4576 = vsyncpa [#allocation3], 1
    %4577 = vsyncpa [#allocation6], 1
    %4578 = vsyncpa [#allocation9], 1
    %4579 = vsyncpa [#allocation4], 1

</llo_original>
